<compile_context>
chip_gen: v7x
topology: tpu7x:2x2x1
jax: 0.10.0
libtpu: 0.0.40
codegen_flags: <defaults>
</compile_context>

<pallas_src>
import functools

import jax
import jax.numpy as jnp
from jax.experimental import pallas as pl
from jax.experimental.pallas import tpu as pltpu


# --------------------------------------------------------------------------
# Fused Pallas kernel: conv1+bn1+relu -> conv2+bn2+residual+relu
# --------------------------------------------------------------------------
def basic_block_kernel(x_ref, w1_ref, b1_ref, w2_ref, b2_ref, mask_ref, o_ref,
                       xpad_ref, col_ref, *, D, H, W, pad):
    """One batch sample per grid step.

    x_ref   : (1, C, S)        activations, S = D*H*W flattened into lanes
    w1_ref  : (C, 27*C)        conv1 weight (BN1 scale folded in), im2col layout
    b1_ref  : (C, 1)           BN1 bias
    w2_ref  : (C, 27*C)        conv2 weight (BN2 scale folded in)
    b2_ref  : (C, 1)           BN2 bias
    mask_ref: (27, 1, S)       per-tap spatial validity masks (conv zero padding)
    o_ref   : (1, C, S)        output
    xpad_ref: (C, S + 2*pad)   VMEM scratch: flat activation buffer w/ zero halo
    col_ref : (27*C, S)        VMEM scratch: im2col matrix
    """
    S = D * H * W
    C = x_ref.shape[1]

    # Zero the halo once; the interior [pad:pad+S] is fully overwritten before
    # every use, and the halo stays zero for both convs.
    xpad_ref[...] = jnp.zeros_like(xpad_ref)

    def conv_bn(v, w_ref_, b_ref_):
        # v: (C, S) f32  ->  (C, S) f32 = folded_BN(conv3x3x3(v))  (bias incl.)
        xpad_ref[:, pad:pad + S] = v.astype(xpad_ref.dtype)
        # Build the im2col matrix once: each tap is a lane-dense shifted window
        # of the flat buffer, with boundary contributions masked to zero.
        for kd in range(3):
            for kh in range(3):
                for kw in range(3):
                    k = (kd * 3 + kh) * 3 + kw
                    delta = (kd - 1) * (H * W) + (kh - 1) * W + (kw - 1)
                    tap = xpad_ref[:, pad + delta:pad + delta + S]
                    col_ref[k * C:(k + 1) * C, :] = (
                        tap * mask_ref[k]).astype(col_ref.dtype)
        # Single MXU matmul: (C, 27*C) x (27*C, S) -> (C, S), f32 accumulation.
        acc = jnp.dot(w_ref_[...], col_ref[...],
                      preferred_element_type=jnp.float32)
        return acc + b_ref_[...]

    x = x_ref[0].astype(jnp.float32)                        # also the residual
    y1 = jnp.maximum(conv_bn(x, w1_ref, b1_ref), 0.0)       # conv1 -> bn1 -> relu
    y2 = jnp.maximum(conv_bn(y1, w2_ref, b2_ref) + x, 0.0)  # conv2 -> bn2 -> +x -> relu
    o_ref[0] = y2.astype(o_ref.dtype)


# --------------------------------------------------------------------------
# Host-side prep (tiny, one-time): BN folding, weight layout, tap masks
# --------------------------------------------------------------------------
def _fold_bn(gamma, beta, mean, var, eps=1e-5):
    scale = gamma / jnp.sqrt(var + eps)
    bias = beta - mean * scale
    return scale, bias


def _prep_weight(w_oidhw, scale, dtype):
    # PyTorch (Cout, Cin, 3, 3, 3) -> im2col layout (Cout, 27*Cin); BN scale
    # folded into each output channel's row.
    cout, cin = w_oidhw.shape[0], w_oidhw.shape[1]
    w = jnp.transpose(w_oidhw, (0, 2, 3, 4, 1)).reshape(cout, 27 * cin)
    return (w * scale[:, None]).astype(dtype)


def _make_tap_masks(D, H, W):
    # mask[k, 0, s] == 1 iff the k-th 3x3x3 tap of output voxel s stays inside
    # the volume (k = (kd*3 + kh)*3 + kw); zeros implement the conv padding.
    d = jnp.arange(D)[:, None, None]
    h = jnp.arange(H)[None, :, None]
    w = jnp.arange(W)[None, None, :]
    masks = []
    for kd in range(3):
        for kh in range(3):
            for kw in range(3):
                m = ((d + kd - 1 >= 0) & (d + kd - 1 < D) &
                     (h + kh - 1 >= 0) & (h + kh - 1 < H) &
                     (w + kw - 1 >= 0) & (w + kw - 1 < W))
                masks.append(m.reshape(1, D * H * W).astype(jnp.float32))
    return jnp.stack(masks, axis=0)                          # (27, 1, S)


def basic_block_forward(x_ncdhw, params, *, eps=1e-5, use_bf16_matmul=False):
    """BasicBlock forward. x: (N, C, D, H, W) float32 (PyTorch NCDHW layout).

    use_bf16_matmul=True (recommended on v6e/v7x) runs the im2col matmuls with
    bf16 inputs and f32 accumulation: ~2x MXU throughput, half the weight and
    im2col VMEM footprint.
    """
    N, C, D, H, W = x_ncdhw.shape
    S = D * H * W
    compute_dtype = jnp.bfloat16 if use_bf16_matmul else jnp.float32

    s1, b1 = _fold_bn(params["bn1_gamma"], params["bn1_beta"],
                      params["bn1_mean"], params["bn1_var"], eps)
    s2, b2 = _fold_bn(params["bn2_gamma"], params["bn2_beta"],
                      params["bn2_mean"], params["bn2_var"], eps)
    w1 = _prep_weight(params["conv1_w"], s1, compute_dtype)
    w2 = _prep_weight(params["conv2_w"], s2, compute_dtype)
    cout = w2.shape[0]
    assert cout == C, "BasicBlock with downsample=None requires in_planes == planes"

    masks = _make_tap_masks(D, H, W)
    # Halo width for the flattened-spatial shift windows (>= H*W + W + 1),
    # rounded up to a lane multiple so the interior store stays aligned.
    pad = ((H * W + W + 1 + 127) // 128) * 128

    # Free reshape: NCDHW with the spatial volume flattened into the lane dim.
    x = x_ncdhw.reshape(N, C, S)

    kernel = functools.partial(basic_block_kernel, D=D, H=H, W=W, pad=pad)

    # NOTE: at production ResNet sizes (e.g. 56^3 x 64+ channels) the grid
    # should additionally tile D (with a 1-voxel halo) and Cout so per-step
    # blocks + the im2col scratch fit v7x's 64 MiB VMEM; whole-sample blocks
    # are used here because the test volume is tiny.
    out = pl.pallas_call(
        kernel,
        out_shape=jax.ShapeDtypeStruct((N, cout, S), jnp.float32),
        grid_spec=pltpu.PrefetchScalarGridSpec(
            num_scalar_prefetch=0,
            grid=(N,),
            in_specs=[
                pl.BlockSpec((1, C, S), lambda n: (n, 0, 0)),          # x
                pl.BlockSpec((cout, 27 * C), lambda n: (0, 0)),        # w1
                pl.BlockSpec((cout, 1), lambda n: (0, 0)),             # b1
                pl.BlockSpec((cout, 27 * cout), lambda n: (0, 0)),     # w2
                pl.BlockSpec((cout, 1), lambda n: (0, 0)),             # b2
                pl.BlockSpec((27, 1, S), lambda n: (0, 0, 0)),         # masks
            ],
            out_specs=pl.BlockSpec((1, cout, S), lambda n: (n, 0, 0)),
            scratch_shapes=[
                pltpu.VMEM((C, S + 2 * pad), jnp.float32),   # zero-haloed flat buffer
                pltpu.VMEM((27 * C, S), compute_dtype),      # im2col matrix
            ],
        ),
        compiler_params=pltpu.CompilerParams(
            # Batch samples are independent -> shard grid steps across v7x's
            # two TensorCores (harmless no-op on single-TC v5e/v6e).
            dimension_semantics=("parallel",),
            # Above v5e's 16 MiB scoped default, under v7x's 64 MiB physical.
            vmem_limit_bytes=48 * 1024 * 1024,
        ),
    )(x, w1, b1.reshape(-1, 1), w2, b2.reshape(-1, 1), masks)

    return out.reshape(N, cout, D, H, W)


# --------------------------------------------------------------------------
# Pure-JAX reference (for correctness check)
# --------------------------------------------------------------------------
def reference_forward(x, params, eps=1e-5):
    def conv(v, w):
        return jax.lax.conv_general_dilated(
            v, w, window_strides=(1, 1, 1), padding=[(1, 1)] * 3,
            dimension_numbers=("NCDHW", "OIDHW", "NCDHW"),
            precision=jax.lax.Precision.HIGHEST)

    def bn(v, g, b, m, var):
        shp = (1, -1, 1, 1, 1)
        return (v - m.reshape(shp)) / jnp.sqrt(var.reshape(shp) + eps) \
            * g.reshape(shp) + b.reshape(shp)

    out = jax.nn.relu(bn(conv(x, params["conv1_w"]), params["bn1_gamma"],
                         params["bn1_beta"], params["bn1_mean"],
                         params["bn1_var"]))
    out = bn(conv(out, params["conv2_w"]), params["bn2_gamma"],
             params["bn2_beta"], params["bn2_mean"], params["bn2_var"])
    return jax.nn.relu(out + x)


# --------------------------------------------------------------------------
if __name__ == "__main__":
    key = jax.random.PRNGKey(0)
    N, C, D, H, W = 2, 8, 8, 8, 8          # in_planes == planes == 8, stride 1
    planes = C

    ks = jax.random.split(key, 11)
    x = jax.random.normal(ks[0], (N, C, D, H, W), jnp.float32)

    params = {
        "conv1_w": 0.1 * jax.random.normal(ks[1], (planes, C, 3, 3, 3), jnp.float32),
        "conv2_w": 0.1 * jax.random.normal(ks[2], (planes, planes, 3, 3, 3), jnp.float32),
        "bn1_gamma": jax.random.uniform(ks[3], (planes,), jnp.float32, 0.8, 1.2),
        "bn1_beta": 0.1 * jax.random.normal(ks[4], (planes,), jnp.float32),
        "bn1_mean": 0.1 * jax.random.normal(ks[5], (planes,), jnp.float32),
        "bn1_var": jax.random.uniform(ks[6], (planes,), jnp.float32, 0.5, 1.5),
        "bn2_gamma": jax.random.uniform(ks[7], (planes,), jnp.float32, 0.8, 1.2),
        "bn2_beta": 0.1 * jax.random.normal(ks[8], (planes,), jnp.float32),
        "bn2_mean": 0.1 * jax.random.normal(ks[9], (planes,), jnp.float32),
        "bn2_var": jax.random.uniform(ks[10], (planes,), jnp.float32, 0.5, 1.5),
    }

    out = basic_block_forward(x, params)
    out = jax.block_until_ready(out)

    ref = jax.block_until_ready(reference_forward(x, params))
    assert out.shape == ref.shape == (N, C, D, H, W)
    max_err = float(jnp.max(jnp.abs(out - ref)))
    assert max_err < 2e-3, f"mismatch vs reference: max_err={max_err}"

    print("KERNEL_OK")
</pallas_src>

<mosaic_0001>
module attributes {stable_mosaic.version = 11 : i64} {
  func.func @basic_block_kernel(%arg0: i32, %arg1: memref<1x8x512xf32, #tpu.memory_space<vmem>>, %arg2: memref<8x216xf32, #tpu.memory_space<vmem>>, %arg3: memref<8x1xf32, #tpu.memory_space<vmem>>, %arg4: memref<8x216xf32, #tpu.memory_space<vmem>>, %arg5: memref<8x1xf32, #tpu.memory_space<vmem>>, %arg6: memref<27x1x512xf32, #tpu.memory_space<vmem>>, %arg7: memref<1x8x512xf32, #tpu.memory_space<vmem>>, %arg8: memref<8x768xf32, #tpu.memory_space<vmem>>, %arg9: memref<216x512xf32, #tpu.memory_space<vmem>>) attributes {dimension_semantics = [#tpu.dimension_semantics<parallel>], iteration_bounds = array<i64: 2>, scalar_prefetch = 0 : i64, scratch_operands = 2 : i64, tpu.core_type = #tpu.core_type<tc>, window_params = [{transform_indices = @transform_0, window_bounds = array<i64: 1, 8, 512>}, {pipeline_mode = #tpu.pipeline_mode<synchronous>, transform_indices = @transform_1, window_bounds = array<i64: 8, 216>}, {pipeline_mode = #tpu.pipeline_mode<synchronous>, transform_indices = @transform_2, window_bounds = array<i64: 8, 1>}, {pipeline_mode = #tpu.pipeline_mode<synchronous>, transform_indices = @transform_3, window_bounds = array<i64: 8, 216>}, {pipeline_mode = #tpu.pipeline_mode<synchronous>, transform_indices = @transform_4, window_bounds = array<i64: 8, 1>}, {pipeline_mode = #tpu.pipeline_mode<synchronous>, transform_indices = @transform_5, window_bounds = array<i64: 27, 1, 512>}, {transform_indices = @transform_6, window_bounds = array<i64: 1, 8, 512>}]} {
    %cst = arith.constant 0.000000e+00 : f32
    %0 = vector.broadcast %cst : f32 to vector<8x768xf32>
    %c0 = arith.constant 0 : index
    %c0_0 = arith.constant 0 : index
    %1 = vector.load %arg8[%c0, %c0_0] : memref<8x768xf32, #tpu.memory_space<vmem>>, vector<8x768xf32>
    tpu.vector_store %arg8[%c0, %c0_0], %0 {strides = array<i32>} : memref<8x768xf32, #tpu.memory_space<vmem>>, vector<8x768xf32>,
    %c0_1 = arith.constant 0 : index
    %c0_2 = arith.constant 0 : index
    %c0_3 = arith.constant 0 : index
    %2 = vector.load %arg1[%c0_1, %c0_2, %c0_3] : memref<1x8x512xf32, #tpu.memory_space<vmem>>, vector<1x8x512xf32>
    %3 = vector.shape_cast %2 : vector<1x8x512xf32> to vector<8x512xf32>
    %c0_4 = arith.constant 0 : index
    %c128 = arith.constant 128 : index
    %4 = vector.load %arg8[%c0_4, %c128] : memref<8x768xf32, #tpu.memory_space<vmem>>, vector<8x512xf32>
    tpu.vector_store %arg8[%c0_4, %c128], %3 {strides = array<i32>} : memref<8x768xf32, #tpu.memory_space<vmem>>, vector<8x512xf32>,
    %c0_5 = arith.constant 0 : index
    %c55 = arith.constant 55 : index
    %5 = vector.load %arg8[%c0_5, %c55] : memref<8x768xf32, #tpu.memory_space<vmem>>, vector<8x512xf32>
    %c0_6 = arith.constant 0 : index
    %c0_7 = arith.constant 0 : index
    %c0_8 = arith.constant 0 : index
    %6 = vector.load %arg6[%c0_6, %c0_7, %c0_8] : memref<27x1x512xf32, #tpu.memory_space<vmem>>, vector<1x1x512xf32>
    %7 = vector.shape_cast %6 : vector<1x1x512xf32> to vector<1x512xf32>
    %8 = vector.broadcast %7 : vector<1x512xf32> to vector<8x512xf32>
    %9 = arith.mulf %5, %8 : vector<8x512xf32>
    %c0_9 = arith.constant 0 : index
    %c0_10 = arith.constant 0 : index
    %10 = vector.load %arg9[%c0_9, %c0_10] : memref<216x512xf32, #tpu.memory_space<vmem>>, vector<8x512xf32>
    tpu.vector_store %arg9[%c0_9, %c0_10], %9 {strides = array<i32>} : memref<216x512xf32, #tpu.memory_space<vmem>>, vector<8x512xf32>,
    %c0_11 = arith.constant 0 : index
    %c56 = arith.constant 56 : index
    %11 = vector.load %arg8[%c0_11, %c56] : memref<8x768xf32, #tpu.memory_space<vmem>>, vector<8x512xf32>
    %c1 = arith.constant 1 : index
    %c0_12 = arith.constant 0 : index
    %c0_13 = arith.constant 0 : index
    %12 = vector.load %arg6[%c1, %c0_12, %c0_13] : memref<27x1x512xf32, #tpu.memory_space<vmem>>, vector<1x1x512xf32>
    %13 = vector.shape_cast %12 : vector<1x1x512xf32> to vector<1x512xf32>
    %14 = vector.broadcast %13 : vector<1x512xf32> to vector<8x512xf32>
    %15 = arith.mulf %11, %14 : vector<8x512xf32>
    %c8 = arith.constant 8 : index
    %c0_14 = arith.constant 0 : index
    %16 = vector.load %arg9[%c8, %c0_14] : memref<216x512xf32, #tpu.memory_space<vmem>>, vector<8x512xf32>
    tpu.vector_store %arg9[%c8, %c0_14], %15 {strides = array<i32>} : memref<216x512xf32, #tpu.memory_space<vmem>>, vector<8x512xf32>,
    %c0_15 = arith.constant 0 : index
    %c57 = arith.constant 57 : index
    %17 = vector.load %arg8[%c0_15, %c57] : memref<8x768xf32, #tpu.memory_space<vmem>>, vector<8x512xf32>
    %c2 = arith.constant 2 : index
    %c0_16 = arith.constant 0 : index
    %c0_17 = arith.constant 0 : index
    %18 = vector.load %arg6[%c2, %c0_16, %c0_17] : memref<27x1x512xf32, #tpu.memory_space<vmem>>, vector<1x1x512xf32>
    %19 = vector.shape_cast %18 : vector<1x1x512xf32> to vector<1x512xf32>
    %20 = vector.broadcast %19 : vector<1x512xf32> to vector<8x512xf32>
    %21 = arith.mulf %17, %20 : vector<8x512xf32>
    %c16 = arith.constant 16 : index
    %c0_18 = arith.constant 0 : index
    %22 = vector.load %arg9[%c16, %c0_18] : memref<216x512xf32, #tpu.memory_space<vmem>>, vector<8x512xf32>
    tpu.vector_store %arg9[%c16, %c0_18], %21 {strides = array<i32>} : memref<216x512xf32, #tpu.memory_space<vmem>>, vector<8x512xf32>,
    %c0_19 = arith.constant 0 : index
    %c63 = arith.constant 63 : index
    %23 = vector.load %arg8[%c0_19, %c63] : memref<8x768xf32, #tpu.memory_space<vmem>>, vector<8x512xf32>
    %c3 = arith.constant 3 : index
    %c0_20 = arith.constant 0 : index
    %c0_21 = arith.constant 0 : index
    %24 = vector.load %arg6[%c3, %c0_20, %c0_21] : memref<27x1x512xf32, #tpu.memory_space<vmem>>, vector<1x1x512xf32>
    %25 = vector.shape_cast %24 : vector<1x1x512xf32> to vector<1x512xf32>
    %26 = vector.broadcast %25 : vector<1x512xf32> to vector<8x512xf32>
    %27 = arith.mulf %23, %26 : vector<8x512xf32>
    %c24 = arith.constant 24 : index
    %c0_22 = arith.constant 0 : index
    %28 = vector.load %arg9[%c24, %c0_22] : memref<216x512xf32, #tpu.memory_space<vmem>>, vector<8x512xf32>
    tpu.vector_store %arg9[%c24, %c0_22], %27 {strides = array<i32>} : memref<216x512xf32, #tpu.memory_space<vmem>>, vector<8x512xf32>,
    %c0_23 = arith.constant 0 : index
    %c64 = arith.constant 64 : index
    %29 = vector.load %arg8[%c0_23, %c64] : memref<8x768xf32, #tpu.memory_space<vmem>>, vector<8x512xf32>
    %c4 = arith.constant 4 : index
    %c0_24 = arith.constant 0 : index
    %c0_25 = arith.constant 0 : index
    %30 = vector.load %arg6[%c4, %c0_24, %c0_25] : memref<27x1x512xf32, #tpu.memory_space<vmem>>, vector<1x1x512xf32>
    %31 = vector.shape_cast %30 : vector<1x1x512xf32> to vector<1x512xf32>
    %32 = vector.broadcast %31 : vector<1x512xf32> to vector<8x512xf32>
    %33 = arith.mulf %29, %32 : vector<8x512xf32>
    %c32 = arith.constant 32 : index
    %c0_26 = arith.constant 0 : index
    %34 = vector.load %arg9[%c32, %c0_26] : memref<216x512xf32, #tpu.memory_space<vmem>>, vector<8x512xf32>
    tpu.vector_store %arg9[%c32, %c0_26], %33 {strides = array<i32>} : memref<216x512xf32, #tpu.memory_space<vmem>>, vector<8x512xf32>,
    %c0_27 = arith.constant 0 : index
    %c65 = arith.constant 65 : index
    %35 = vector.load %arg8[%c0_27, %c65] : memref<8x768xf32, #tpu.memory_space<vmem>>, vector<8x512xf32>
    %c5 = arith.constant 5 : index
    %c0_28 = arith.constant 0 : index
    %c0_29 = arith.constant 0 : index
    %36 = vector.load %arg6[%c5, %c0_28, %c0_29] : memref<27x1x512xf32, #tpu.memory_space<vmem>>, vector<1x1x512xf32>
    %37 = vector.shape_cast %36 : vector<1x1x512xf32> to vector<1x512xf32>
    %38 = vector.broadcast %37 : vector<1x512xf32> to vector<8x512xf32>
    %39 = arith.mulf %35, %38 : vector<8x512xf32>
    %c40 = arith.constant 40 : index
    %c0_30 = arith.constant 0 : index
    %40 = vector.load %arg9[%c40, %c0_30] : memref<216x512xf32, #tpu.memory_space<vmem>>, vector<8x512xf32>
    tpu.vector_store %arg9[%c40, %c0_30], %39 {strides = array<i32>} : memref<216x512xf32, #tpu.memory_space<vmem>>, vector<8x512xf32>,
    %c0_31 = arith.constant 0 : index
    %c71 = arith.constant 71 : index
    %41 = vector.load %arg8[%c0_31, %c71] : memref<8x768xf32, #tpu.memory_space<vmem>>, vector<8x512xf32>
    %c6 = arith.constant 6 : index
    %c0_32 = arith.constant 0 : index
    %c0_33 = arith.constant 0 : index
    %42 = vector.load %arg6[%c6, %c0_32, %c0_33] : memref<27x1x512xf32, #tpu.memory_space<vmem>>, vector<1x1x512xf32>
    %43 = vector.shape_cast %42 : vector<1x1x512xf32> to vector<1x512xf32>
    %44 = vector.broadcast %43 : vector<1x512xf32> to vector<8x512xf32>
    %45 = arith.mulf %41, %44 : vector<8x512xf32>
    %c48 = arith.constant 48 : index
    %c0_34 = arith.constant 0 : index
    %46 = vector.load %arg9[%c48, %c0_34] : memref<216x512xf32, #tpu.memory_space<vmem>>, vector<8x512xf32>
    tpu.vector_store %arg9[%c48, %c0_34], %45 {strides = array<i32>} : memref<216x512xf32, #tpu.memory_space<vmem>>, vector<8x512xf32>,
    %c0_35 = arith.constant 0 : index
    %c72 = arith.constant 72 : index
    %47 = vector.load %arg8[%c0_35, %c72] : memref<8x768xf32, #tpu.memory_space<vmem>>, vector<8x512xf32>
    %c7 = arith.constant 7 : index
    %c0_36 = arith.constant 0 : index
    %c0_37 = arith.constant 0 : index
    %48 = vector.load %arg6[%c7, %c0_36, %c0_37] : memref<27x1x512xf32, #tpu.memory_space<vmem>>, vector<1x1x512xf32>
    %49 = vector.shape_cast %48 : vector<1x1x512xf32> to vector<1x512xf32>
    %50 = vector.broadcast %49 : vector<1x512xf32> to vector<8x512xf32>
    %51 = arith.mulf %47, %50 : vector<8x512xf32>
    %c56_38 = arith.constant 56 : index
    %c0_39 = arith.constant 0 : index
    %52 = vector.load %arg9[%c56_38, %c0_39] : memref<216x512xf32, #tpu.memory_space<vmem>>, vector<8x512xf32>
    tpu.vector_store %arg9[%c56_38, %c0_39], %51 {strides = array<i32>} : memref<216x512xf32, #tpu.memory_space<vmem>>, vector<8x512xf32>,
    %c0_40 = arith.constant 0 : index
    %c73 = arith.constant 73 : index
    %53 = vector.load %arg8[%c0_40, %c73] : memref<8x768xf32, #tpu.memory_space<vmem>>, vector<8x512xf32>
    %c8_41 = arith.constant 8 : index
    %c0_42 = arith.constant 0 : index
    %c0_43 = arith.constant 0 : index
    %54 = vector.load %arg6[%c8_41, %c0_42, %c0_43] : memref<27x1x512xf32, #tpu.memory_space<vmem>>, vector<1x1x512xf32>
    %55 = vector.shape_cast %54 : vector<1x1x512xf32> to vector<1x512xf32>
    %56 = vector.broadcast %55 : vector<1x512xf32> to vector<8x512xf32>
    %57 = arith.mulf %53, %56 : vector<8x512xf32>
    %c64_44 = arith.constant 64 : index
    %c0_45 = arith.constant 0 : index
    %58 = vector.load %arg9[%c64_44, %c0_45] : memref<216x512xf32, #tpu.memory_space<vmem>>, vector<8x512xf32>
    tpu.vector_store %arg9[%c64_44, %c0_45], %57 {strides = array<i32>} : memref<216x512xf32, #tpu.memory_space<vmem>>, vector<8x512xf32>,
    %c0_46 = arith.constant 0 : index
    %c119 = arith.constant 119 : index
    %59 = vector.load %arg8[%c0_46, %c119] : memref<8x768xf32, #tpu.memory_space<vmem>>, vector<8x512xf32>
    %c9 = arith.constant 9 : index
    %c0_47 = arith.constant 0 : index
    %c0_48 = arith.constant 0 : index
    %60 = vector.load %arg6[%c9, %c0_47, %c0_48] : memref<27x1x512xf32, #tpu.memory_space<vmem>>, vector<1x1x512xf32>
    %61 = vector.shape_cast %60 : vector<1x1x512xf32> to vector<1x512xf32>
    %62 = vector.broadcast %61 : vector<1x512xf32> to vector<8x512xf32>
    %63 = arith.mulf %59, %62 : vector<8x512xf32>
    %c72_49 = arith.constant 72 : index
    %c0_50 = arith.constant 0 : index
    %64 = vector.load %arg9[%c72_49, %c0_50] : memref<216x512xf32, #tpu.memory_space<vmem>>, vector<8x512xf32>
    tpu.vector_store %arg9[%c72_49, %c0_50], %63 {strides = array<i32>} : memref<216x512xf32, #tpu.memory_space<vmem>>, vector<8x512xf32>,
    %c0_51 = arith.constant 0 : index
    %c120 = arith.constant 120 : index
    %65 = vector.load %arg8[%c0_51, %c120] : memref<8x768xf32, #tpu.memory_space<vmem>>, vector<8x512xf32>
    %c10 = arith.constant 10 : index
    %c0_52 = arith.constant 0 : index
    %c0_53 = arith.constant 0 : index
    %66 = vector.load %arg6[%c10, %c0_52, %c0_53] : memref<27x1x512xf32, #tpu.memory_space<vmem>>, vector<1x1x512xf32>
    %67 = vector.shape_cast %66 : vector<1x1x512xf32> to vector<1x512xf32>
    %68 = vector.broadcast %67 : vector<1x512xf32> to vector<8x512xf32>
    %69 = arith.mulf %65, %68 : vector<8x512xf32>
    %c80 = arith.constant 80 : index
    %c0_54 = arith.constant 0 : index
    %70 = vector.load %arg9[%c80, %c0_54] : memref<216x512xf32, #tpu.memory_space<vmem>>, vector<8x512xf32>
    tpu.vector_store %arg9[%c80, %c0_54], %69 {strides = array<i32>} : memref<216x512xf32, #tpu.memory_space<vmem>>, vector<8x512xf32>,
    %c0_55 = arith.constant 0 : index
    %c121 = arith.constant 121 : index
    %71 = vector.load %arg8[%c0_55, %c121] : memref<8x768xf32, #tpu.memory_space<vmem>>, vector<8x512xf32>
    %c11 = arith.constant 11 : index
    %c0_56 = arith.constant 0 : index
    %c0_57 = arith.constant 0 : index
    %72 = vector.load %arg6[%c11, %c0_56, %c0_57] : memref<27x1x512xf32, #tpu.memory_space<vmem>>, vector<1x1x512xf32>
    %73 = vector.shape_cast %72 : vector<1x1x512xf32> to vector<1x512xf32>
    %74 = vector.broadcast %73 : vector<1x512xf32> to vector<8x512xf32>
    %75 = arith.mulf %71, %74 : vector<8x512xf32>
    %c88 = arith.constant 88 : index
    %c0_58 = arith.constant 0 : index
    %76 = vector.load %arg9[%c88, %c0_58] : memref<216x512xf32, #tpu.memory_space<vmem>>, vector<8x512xf32>
    tpu.vector_store %arg9[%c88, %c0_58], %75 {strides = array<i32>} : memref<216x512xf32, #tpu.memory_space<vmem>>, vector<8x512xf32>,
    %c0_59 = arith.constant 0 : index
    %c127 = arith.constant 127 : index
    %77 = vector.load %arg8[%c0_59, %c127] : memref<8x768xf32, #tpu.memory_space<vmem>>, vector<8x512xf32>
    %c12 = arith.constant 12 : index
    %c0_60 = arith.constant 0 : index
    %c0_61 = arith.constant 0 : index
    %78 = vector.load %arg6[%c12, %c0_60, %c0_61] : memref<27x1x512xf32, #tpu.memory_space<vmem>>, vector<1x1x512xf32>
    %79 = vector.shape_cast %78 : vector<1x1x512xf32> to vector<1x512xf32>
    %80 = vector.broadcast %79 : vector<1x512xf32> to vector<8x512xf32>
    %81 = arith.mulf %77, %80 : vector<8x512xf32>
    %c96 = arith.constant 96 : index
    %c0_62 = arith.constant 0 : index
    %82 = vector.load %arg9[%c96, %c0_62] : memref<216x512xf32, #tpu.memory_space<vmem>>, vector<8x512xf32>
    tpu.vector_store %arg9[%c96, %c0_62], %81 {strides = array<i32>} : memref<216x512xf32, #tpu.memory_space<vmem>>, vector<8x512xf32>,
    %c0_63 = arith.constant 0 : index
    %c128_64 = arith.constant 128 : index
    %83 = vector.load %arg8[%c0_63, %c128_64] : memref<8x768xf32, #tpu.memory_space<vmem>>, vector<8x512xf32>
    %c13 = arith.constant 13 : index
    %c0_65 = arith.constant 0 : index
    %c0_66 = arith.constant 0 : index
    %84 = vector.load %arg6[%c13, %c0_65, %c0_66] : memref<27x1x512xf32, #tpu.memory_space<vmem>>, vector<1x1x512xf32>
    %85 = vector.shape_cast %84 : vector<1x1x512xf32> to vector<1x512xf32>
    %86 = vector.broadcast %85 : vector<1x512xf32> to vector<8x512xf32>
    %87 = arith.mulf %83, %86 : vector<8x512xf32>
    %c104 = arith.constant 104 : index
    %c0_67 = arith.constant 0 : index
    %88 = vector.load %arg9[%c104, %c0_67] : memref<216x512xf32, #tpu.memory_space<vmem>>, vector<8x512xf32>
    tpu.vector_store %arg9[%c104, %c0_67], %87 {strides = array<i32>} : memref<216x512xf32, #tpu.memory_space<vmem>>, vector<8x512xf32>,
    %c0_68 = arith.constant 0 : index
    %c129 = arith.constant 129 : index
    %89 = vector.load %arg8[%c0_68, %c129] : memref<8x768xf32, #tpu.memory_space<vmem>>, vector<8x512xf32>
    %c14 = arith.constant 14 : index
    %c0_69 = arith.constant 0 : index
    %c0_70 = arith.constant 0 : index
    %90 = vector.load %arg6[%c14, %c0_69, %c0_70] : memref<27x1x512xf32, #tpu.memory_space<vmem>>, vector<1x1x512xf32>
    %91 = vector.shape_cast %90 : vector<1x1x512xf32> to vector<1x512xf32>
    %92 = vector.broadcast %91 : vector<1x512xf32> to vector<8x512xf32>
    %93 = arith.mulf %89, %92 : vector<8x512xf32>
    %c112 = arith.constant 112 : index
    %c0_71 = arith.constant 0 : index
    %94 = vector.load %arg9[%c112, %c0_71] : memref<216x512xf32, #tpu.memory_space<vmem>>, vector<8x512xf32>
    tpu.vector_store %arg9[%c112, %c0_71], %93 {strides = array<i32>} : memref<216x512xf32, #tpu.memory_space<vmem>>, vector<8x512xf32>,
    %c0_72 = arith.constant 0 : index
    %c135 = arith.constant 135 : index
    %95 = vector.load %arg8[%c0_72, %c135] : memref<8x768xf32, #tpu.memory_space<vmem>>, vector<8x512xf32>
    %c15 = arith.constant 15 : index
    %c0_73 = arith.constant 0 : index
    %c0_74 = arith.constant 0 : index
    %96 = vector.load %arg6[%c15, %c0_73, %c0_74] : memref<27x1x512xf32, #tpu.memory_space<vmem>>, vector<1x1x512xf32>
    %97 = vector.shape_cast %96 : vector<1x1x512xf32> to vector<1x512xf32>
    %98 = vector.broadcast %97 : vector<1x512xf32> to vector<8x512xf32>
    %99 = arith.mulf %95, %98 : vector<8x512xf32>
    %c120_75 = arith.constant 120 : index
    %c0_76 = arith.constant 0 : index
    %100 = vector.load %arg9[%c120_75, %c0_76] : memref<216x512xf32, #tpu.memory_space<vmem>>, vector<8x512xf32>
    tpu.vector_store %arg9[%c120_75, %c0_76], %99 {strides = array<i32>} : memref<216x512xf32, #tpu.memory_space<vmem>>, vector<8x512xf32>,
    %c0_77 = arith.constant 0 : index
    %c136 = arith.constant 136 : index
    %101 = vector.load %arg8[%c0_77, %c136] : memref<8x768xf32, #tpu.memory_space<vmem>>, vector<8x512xf32>
    %c16_78 = arith.constant 16 : index
    %c0_79 = arith.constant 0 : index
    %c0_80 = arith.constant 0 : index
    %102 = vector.load %arg6[%c16_78, %c0_79, %c0_80] : memref<27x1x512xf32, #tpu.memory_space<vmem>>, vector<1x1x512xf32>
    %103 = vector.shape_cast %102 : vector<1x1x512xf32> to vector<1x512xf32>
    %104 = vector.broadcast %103 : vector<1x512xf32> to vector<8x512xf32>
    %105 = arith.mulf %101, %104 : vector<8x512xf32>
    %c128_81 = arith.constant 128 : index
    %c0_82 = arith.constant 0 : index
    %106 = vector.load %arg9[%c128_81, %c0_82] : memref<216x512xf32, #tpu.memory_space<vmem>>, vector<8x512xf32>
    tpu.vector_store %arg9[%c128_81, %c0_82], %105 {strides = array<i32>} : memref<216x512xf32, #tpu.memory_space<vmem>>, vector<8x512xf32>,
    %c0_83 = arith.constant 0 : index
    %c137 = arith.constant 137 : index
    %107 = vector.load %arg8[%c0_83, %c137] : memref<8x768xf32, #tpu.memory_space<vmem>>, vector<8x512xf32>
    %c17 = arith.constant 17 : index
    %c0_84 = arith.constant 0 : index
    %c0_85 = arith.constant 0 : index
    %108 = vector.load %arg6[%c17, %c0_84, %c0_85] : memref<27x1x512xf32, #tpu.memory_space<vmem>>, vector<1x1x512xf32>
    %109 = vector.shape_cast %108 : vector<1x1x512xf32> to vector<1x512xf32>
    %110 = vector.broadcast %109 : vector<1x512xf32> to vector<8x512xf32>
    %111 = arith.mulf %107, %110 : vector<8x512xf32>
    %c136_86 = arith.constant 136 : index
    %c0_87 = arith.constant 0 : index
    %112 = vector.load %arg9[%c136_86, %c0_87] : memref<216x512xf32, #tpu.memory_space<vmem>>, vector<8x512xf32>
    tpu.vector_store %arg9[%c136_86, %c0_87], %111 {strides = array<i32>} : memref<216x512xf32, #tpu.memory_space<vmem>>, vector<8x512xf32>,
    %c0_88 = arith.constant 0 : index
    %c183 = arith.constant 183 : index
    %113 = vector.load %arg8[%c0_88, %c183] : memref<8x768xf32, #tpu.memory_space<vmem>>, vector<8x512xf32>
    %c18 = arith.constant 18 : index
    %c0_89 = arith.constant 0 : index
    %c0_90 = arith.constant 0 : index
    %114 = vector.load %arg6[%c18, %c0_89, %c0_90] : memref<27x1x512xf32, #tpu.memory_space<vmem>>, vector<1x1x512xf32>
    %115 = vector.shape_cast %114 : vector<1x1x512xf32> to vector<1x512xf32>
    %116 = vector.broadcast %115 : vector<1x512xf32> to vector<8x512xf32>
    %117 = arith.mulf %113, %116 : vector<8x512xf32>
    %c144 = arith.constant 144 : index
    %c0_91 = arith.constant 0 : index
    %118 = vector.load %arg9[%c144, %c0_91] : memref<216x512xf32, #tpu.memory_space<vmem>>, vector<8x512xf32>
    tpu.vector_store %arg9[%c144, %c0_91], %117 {strides = array<i32>} : memref<216x512xf32, #tpu.memory_space<vmem>>, vector<8x512xf32>,
    %c0_92 = arith.constant 0 : index
    %c184 = arith.constant 184 : index
    %119 = vector.load %arg8[%c0_92, %c184] : memref<8x768xf32, #tpu.memory_space<vmem>>, vector<8x512xf32>
    %c19 = arith.constant 19 : index
    %c0_93 = arith.constant 0 : index
    %c0_94 = arith.constant 0 : index
    %120 = vector.load %arg6[%c19, %c0_93, %c0_94] : memref<27x1x512xf32, #tpu.memory_space<vmem>>, vector<1x1x512xf32>
    %121 = vector.shape_cast %120 : vector<1x1x512xf32> to vector<1x512xf32>
    %122 = vector.broadcast %121 : vector<1x512xf32> to vector<8x512xf32>
    %123 = arith.mulf %119, %122 : vector<8x512xf32>
    %c152 = arith.constant 152 : index
    %c0_95 = arith.constant 0 : index
    %124 = vector.load %arg9[%c152, %c0_95] : memref<216x512xf32, #tpu.memory_space<vmem>>, vector<8x512xf32>
    tpu.vector_store %arg9[%c152, %c0_95], %123 {strides = array<i32>} : memref<216x512xf32, #tpu.memory_space<vmem>>, vector<8x512xf32>,
    %c0_96 = arith.constant 0 : index
    %c185 = arith.constant 185 : index
    %125 = vector.load %arg8[%c0_96, %c185] : memref<8x768xf32, #tpu.memory_space<vmem>>, vector<8x512xf32>
    %c20 = arith.constant 20 : index
    %c0_97 = arith.constant 0 : index
    %c0_98 = arith.constant 0 : index
    %126 = vector.load %arg6[%c20, %c0_97, %c0_98] : memref<27x1x512xf32, #tpu.memory_space<vmem>>, vector<1x1x512xf32>
    %127 = vector.shape_cast %126 : vector<1x1x512xf32> to vector<1x512xf32>
    %128 = vector.broadcast %127 : vector<1x512xf32> to vector<8x512xf32>
    %129 = arith.mulf %125, %128 : vector<8x512xf32>
    %c160 = arith.constant 160 : index
    %c0_99 = arith.constant 0 : index
    %130 = vector.load %arg9[%c160, %c0_99] : memref<216x512xf32, #tpu.memory_space<vmem>>, vector<8x512xf32>
    tpu.vector_store %arg9[%c160, %c0_99], %129 {strides = array<i32>} : memref<216x512xf32, #tpu.memory_space<vmem>>, vector<8x512xf32>,
    %c0_100 = arith.constant 0 : index
    %c191 = arith.constant 191 : index
    %131 = vector.load %arg8[%c0_100, %c191] : memref<8x768xf32, #tpu.memory_space<vmem>>, vector<8x512xf32>
    %c21 = arith.constant 21 : index
    %c0_101 = arith.constant 0 : index
    %c0_102 = arith.constant 0 : index
    %132 = vector.load %arg6[%c21, %c0_101, %c0_102] : memref<27x1x512xf32, #tpu.memory_space<vmem>>, vector<1x1x512xf32>
    %133 = vector.shape_cast %132 : vector<1x1x512xf32> to vector<1x512xf32>
    %134 = vector.broadcast %133 : vector<1x512xf32> to vector<8x512xf32>
    %135 = arith.mulf %131, %134 : vector<8x512xf32>
    %c168 = arith.constant 168 : index
    %c0_103 = arith.constant 0 : index
    %136 = vector.load %arg9[%c168, %c0_103] : memref<216x512xf32, #tpu.memory_space<vmem>>, vector<8x512xf32>
    tpu.vector_store %arg9[%c168, %c0_103], %135 {strides = array<i32>} : memref<216x512xf32, #tpu.memory_space<vmem>>, vector<8x512xf32>,
    %c0_104 = arith.constant 0 : index
    %c192 = arith.constant 192 : index
    %137 = vector.load %arg8[%c0_104, %c192] : memref<8x768xf32, #tpu.memory_space<vmem>>, vector<8x512xf32>
    %c22 = arith.constant 22 : index
    %c0_105 = arith.constant 0 : index
    %c0_106 = arith.constant 0 : index
    %138 = vector.load %arg6[%c22, %c0_105, %c0_106] : memref<27x1x512xf32, #tpu.memory_space<vmem>>, vector<1x1x512xf32>
    %139 = vector.shape_cast %138 : vector<1x1x512xf32> to vector<1x512xf32>
    %140 = vector.broadcast %139 : vector<1x512xf32> to vector<8x512xf32>
    %141 = arith.mulf %137, %140 : vector<8x512xf32>
    %c176 = arith.constant 176 : index
    %c0_107 = arith.constant 0 : index
    %142 = vector.load %arg9[%c176, %c0_107] : memref<216x512xf32, #tpu.memory_space<vmem>>, vector<8x512xf32>
    tpu.vector_store %arg9[%c176, %c0_107], %141 {strides = array<i32>} : memref<216x512xf32, #tpu.memory_space<vmem>>, vector<8x512xf32>,
    %c0_108 = arith.constant 0 : index
    %c193 = arith.constant 193 : index
    %143 = vector.load %arg8[%c0_108, %c193] : memref<8x768xf32, #tpu.memory_space<vmem>>, vector<8x512xf32>
    %c23 = arith.constant 23 : index
    %c0_109 = arith.constant 0 : index
    %c0_110 = arith.constant 0 : index
    %144 = vector.load %arg6[%c23, %c0_109, %c0_110] : memref<27x1x512xf32, #tpu.memory_space<vmem>>, vector<1x1x512xf32>
    %145 = vector.shape_cast %144 : vector<1x1x512xf32> to vector<1x512xf32>
    %146 = vector.broadcast %145 : vector<1x512xf32> to vector<8x512xf32>
    %147 = arith.mulf %143, %146 : vector<8x512xf32>
    %c184_111 = arith.constant 184 : index
    %c0_112 = arith.constant 0 : index
    %148 = vector.load %arg9[%c184_111, %c0_112] : memref<216x512xf32, #tpu.memory_space<vmem>>, vector<8x512xf32>
    tpu.vector_store %arg9[%c184_111, %c0_112], %147 {strides = array<i32>} : memref<216x512xf32, #tpu.memory_space<vmem>>, vector<8x512xf32>,
    %c0_113 = arith.constant 0 : index
    %c199 = arith.constant 199 : index
    %149 = vector.load %arg8[%c0_113, %c199] : memref<8x768xf32, #tpu.memory_space<vmem>>, vector<8x512xf32>
    %c24_114 = arith.constant 24 : index
    %c0_115 = arith.constant 0 : index
    %c0_116 = arith.constant 0 : index
    %150 = vector.load %arg6[%c24_114, %c0_115, %c0_116] : memref<27x1x512xf32, #tpu.memory_space<vmem>>, vector<1x1x512xf32>
    %151 = vector.shape_cast %150 : vector<1x1x512xf32> to vector<1x512xf32>
    %152 = vector.broadcast %151 : vector<1x512xf32> to vector<8x512xf32>
    %153 = arith.mulf %149, %152 : vector<8x512xf32>
    %c192_117 = arith.constant 192 : index
    %c0_118 = arith.constant 0 : index
    %154 = vector.load %arg9[%c192_117, %c0_118] : memref<216x512xf32, #tpu.memory_space<vmem>>, vector<8x512xf32>
    tpu.vector_store %arg9[%c192_117, %c0_118], %153 {strides = array<i32>} : memref<216x512xf32, #tpu.memory_space<vmem>>, vector<8x512xf32>,
    %c0_119 = arith.constant 0 : index
    %c200 = arith.constant 200 : index
    %155 = vector.load %arg8[%c0_119, %c200] : memref<8x768xf32, #tpu.memory_space<vmem>>, vector<8x512xf32>
    %c25 = arith.constant 25 : index
    %c0_120 = arith.constant 0 : index
    %c0_121 = arith.constant 0 : index
    %156 = vector.load %arg6[%c25, %c0_120, %c0_121] : memref<27x1x512xf32, #tpu.memory_space<vmem>>, vector<1x1x512xf32>
    %157 = vector.shape_cast %156 : vector<1x1x512xf32> to vector<1x512xf32>
    %158 = vector.broadcast %157 : vector<1x512xf32> to vector<8x512xf32>
    %159 = arith.mulf %155, %158 : vector<8x512xf32>
    %c200_122 = arith.constant 200 : index
    %c0_123 = arith.constant 0 : index
    %160 = vector.load %arg9[%c200_122, %c0_123] : memref<216x512xf32, #tpu.memory_space<vmem>>, vector<8x512xf32>
    tpu.vector_store %arg9[%c200_122, %c0_123], %159 {strides = array<i32>} : memref<216x512xf32, #tpu.memory_space<vmem>>, vector<8x512xf32>,
    %c0_124 = arith.constant 0 : index
    %c201 = arith.constant 201 : index
    %161 = vector.load %arg8[%c0_124, %c201] : memref<8x768xf32, #tpu.memory_space<vmem>>, vector<8x512xf32>
    %c26 = arith.constant 26 : index
    %c0_125 = arith.constant 0 : index
    %c0_126 = arith.constant 0 : index
    %162 = vector.load %arg6[%c26, %c0_125, %c0_126] : memref<27x1x512xf32, #tpu.memory_space<vmem>>, vector<1x1x512xf32>
    %163 = vector.shape_cast %162 : vector<1x1x512xf32> to vector<1x512xf32>
    %164 = vector.broadcast %163 : vector<1x512xf32> to vector<8x512xf32>
    %165 = arith.mulf %161, %164 : vector<8x512xf32>
    %c208 = arith.constant 208 : index
    %c0_127 = arith.constant 0 : index
    %166 = vector.load %arg9[%c208, %c0_127] : memref<216x512xf32, #tpu.memory_space<vmem>>, vector<8x512xf32>
    tpu.vector_store %arg9[%c208, %c0_127], %165 {strides = array<i32>} : memref<216x512xf32, #tpu.memory_space<vmem>>, vector<8x512xf32>,
    %c0_128 = arith.constant 0 : index
    %c0_129 = arith.constant 0 : index
    %167 = vector.load %arg2[%c0_128, %c0_129] : memref<8x216xf32, #tpu.memory_space<vmem>>, vector<8x216xf32>
    %c0_130 = arith.constant 0 : index
    %c0_131 = arith.constant 0 : index
    %168 = vector.load %arg9[%c0_130, %c0_131] : memref<216x512xf32, #tpu.memory_space<vmem>>, vector<216x512xf32>
    %cst_132 = arith.constant dense<0.000000e+00> : vector<8x512xf32>
    %169 = tpu.matmul %167, %168, %cst_132 {dimension_numbers = #tpu.dot_dimension_numbers<[1], [0], [0], [1], [0, 0, 1, 1], [], []>} : vector<8x216xf32>, vector<216x512xf32>, vector<8x512xf32> -> vector<8x512xf32>
    %c0_133 = arith.constant 0 : index
    %c0_134 = arith.constant 0 : index
    %170 = vector.load %arg3[%c0_133, %c0_134] : memref<8x1xf32, #tpu.memory_space<vmem>>, vector<8x1xf32>
    %171 = vector.broadcast %170 : vector<8x1xf32> to vector<8x512xf32>
    %172 = arith.addf %169, %171 : vector<8x512xf32>
    %cst_135 = arith.constant 0.000000e+00 : f32
    %173 = vector.broadcast %cst_135 : f32 to vector<8x512xf32>
    %174 = arith.maximumf %172, %173 : vector<8x512xf32>
    %c0_136 = arith.constant 0 : index
    %c128_137 = arith.constant 128 : index
    %175 = vector.load %arg8[%c0_136, %c128_137] : memref<8x768xf32, #tpu.memory_space<vmem>>, vector<8x512xf32>
    tpu.vector_store %arg8[%c0_136, %c128_137], %174 {strides = array<i32>} : memref<8x768xf32, #tpu.memory_space<vmem>>, vector<8x512xf32>,
    %c0_138 = arith.constant 0 : index
    %c55_139 = arith.constant 55 : index
    %176 = vector.load %arg8[%c0_138, %c55_139] : memref<8x768xf32, #tpu.memory_space<vmem>>, vector<8x512xf32>
    %c0_140 = arith.constant 0 : index
    %c0_141 = arith.constant 0 : index
    %c0_142 = arith.constant 0 : index
    %177 = vector.load %arg6[%c0_140, %c0_141, %c0_142] : memref<27x1x512xf32, #tpu.memory_space<vmem>>, vector<1x1x512xf32>
    %178 = vector.shape_cast %177 : vector<1x1x512xf32> to vector<1x512xf32>
    %179 = vector.broadcast %178 : vector<1x512xf32> to vector<8x512xf32>
    %180 = arith.mulf %176, %179 : vector<8x512xf32>
    %c0_143 = arith.constant 0 : index
    %c0_144 = arith.constant 0 : index
    %181 = vector.load %arg9[%c0_143, %c0_144] : memref<216x512xf32, #tpu.memory_space<vmem>>, vector<8x512xf32>
    tpu.vector_store %arg9[%c0_143, %c0_144], %180 {strides = array<i32>} : memref<216x512xf32, #tpu.memory_space<vmem>>, vector<8x512xf32>,
    %c0_145 = arith.constant 0 : index
    %c56_146 = arith.constant 56 : index
    %182 = vector.load %arg8[%c0_145, %c56_146] : memref<8x768xf32, #tpu.memory_space<vmem>>, vector<8x512xf32>
    %c1_147 = arith.constant 1 : index
    %c0_148 = arith.constant 0 : index
    %c0_149 = arith.constant 0 : index
    %183 = vector.load %arg6[%c1_147, %c0_148, %c0_149] : memref<27x1x512xf32, #tpu.memory_space<vmem>>, vector<1x1x512xf32>
    %184 = vector.shape_cast %183 : vector<1x1x512xf32> to vector<1x512xf32>
    %185 = vector.broadcast %184 : vector<1x512xf32> to vector<8x512xf32>
    %186 = arith.mulf %182, %185 : vector<8x512xf32>
    %c8_150 = arith.constant 8 : index
    %c0_151 = arith.constant 0 : index
    %187 = vector.load %arg9[%c8_150, %c0_151] : memref<216x512xf32, #tpu.memory_space<vmem>>, vector<8x512xf32>
    tpu.vector_store %arg9[%c8_150, %c0_151], %186 {strides = array<i32>} : memref<216x512xf32, #tpu.memory_space<vmem>>, vector<8x512xf32>,
    %c0_152 = arith.constant 0 : index
    %c57_153 = arith.constant 57 : index
    %188 = vector.load %arg8[%c0_152, %c57_153] : memref<8x768xf32, #tpu.memory_space<vmem>>, vector<8x512xf32>
    %c2_154 = arith.constant 2 : index
    %c0_155 = arith.constant 0 : index
    %c0_156 = arith.constant 0 : index
    %189 = vector.load %arg6[%c2_154, %c0_155, %c0_156] : memref<27x1x512xf32, #tpu.memory_space<vmem>>, vector<1x1x512xf32>
    %190 = vector.shape_cast %189 : vector<1x1x512xf32> to vector<1x512xf32>
    %191 = vector.broadcast %190 : vector<1x512xf32> to vector<8x512xf32>
    %192 = arith.mulf %188, %191 : vector<8x512xf32>
    %c16_157 = arith.constant 16 : index
    %c0_158 = arith.constant 0 : index
    %193 = vector.load %arg9[%c16_157, %c0_158] : memref<216x512xf32, #tpu.memory_space<vmem>>, vector<8x512xf32>
    tpu.vector_store %arg9[%c16_157, %c0_158], %192 {strides = array<i32>} : memref<216x512xf32, #tpu.memory_space<vmem>>, vector<8x512xf32>,
    %c0_159 = arith.constant 0 : index
    %c63_160 = arith.constant 63 : index
    %194 = vector.load %arg8[%c0_159, %c63_160] : memref<8x768xf32, #tpu.memory_space<vmem>>, vector<8x512xf32>
    %c3_161 = arith.constant 3 : index
    %c0_162 = arith.constant 0 : index
    %c0_163 = arith.constant 0 : index
    %195 = vector.load %arg6[%c3_161, %c0_162, %c0_163] : memref<27x1x512xf32, #tpu.memory_space<vmem>>, vector<1x1x512xf32>
    %196 = vector.shape_cast %195 : vector<1x1x512xf32> to vector<1x512xf32>
    %197 = vector.broadcast %196 : vector<1x512xf32> to vector<8x512xf32>
    %198 = arith.mulf %194, %197 : vector<8x512xf32>
    %c24_164 = arith.constant 24 : index
    %c0_165 = arith.constant 0 : index
    %199 = vector.load %arg9[%c24_164, %c0_165] : memref<216x512xf32, #tpu.memory_space<vmem>>, vector<8x512xf32>
    tpu.vector_store %arg9[%c24_164, %c0_165], %198 {strides = array<i32>} : memref<216x512xf32, #tpu.memory_space<vmem>>, vector<8x512xf32>,
    %c0_166 = arith.constant 0 : index
    %c64_167 = arith.constant 64 : index
    %200 = vector.load %arg8[%c0_166, %c64_167] : memref<8x768xf32, #tpu.memory_space<vmem>>, vector<8x512xf32>
    %c4_168 = arith.constant 4 : index
    %c0_169 = arith.constant 0 : index
    %c0_170 = arith.constant 0 : index
    %201 = vector.load %arg6[%c4_168, %c0_169, %c0_170] : memref<27x1x512xf32, #tpu.memory_space<vmem>>, vector<1x1x512xf32>
    %202 = vector.shape_cast %201 : vector<1x1x512xf32> to vector<1x512xf32>
    %203 = vector.broadcast %202 : vector<1x512xf32> to vector<8x512xf32>
    %204 = arith.mulf %200, %203 : vector<8x512xf32>
    %c32_171 = arith.constant 32 : index
    %c0_172 = arith.constant 0 : index
    %205 = vector.load %arg9[%c32_171, %c0_172] : memref<216x512xf32, #tpu.memory_space<vmem>>, vector<8x512xf32>
    tpu.vector_store %arg9[%c32_171, %c0_172], %204 {strides = array<i32>} : memref<216x512xf32, #tpu.memory_space<vmem>>, vector<8x512xf32>,
    %c0_173 = arith.constant 0 : index
    %c65_174 = arith.constant 65 : index
    %206 = vector.load %arg8[%c0_173, %c65_174] : memref<8x768xf32, #tpu.memory_space<vmem>>, vector<8x512xf32>
    %c5_175 = arith.constant 5 : index
    %c0_176 = arith.constant 0 : index
    %c0_177 = arith.constant 0 : index
    %207 = vector.load %arg6[%c5_175, %c0_176, %c0_177] : memref<27x1x512xf32, #tpu.memory_space<vmem>>, vector<1x1x512xf32>
    %208 = vector.shape_cast %207 : vector<1x1x512xf32> to vector<1x512xf32>
    %209 = vector.broadcast %208 : vector<1x512xf32> to vector<8x512xf32>
    %210 = arith.mulf %206, %209 : vector<8x512xf32>
    %c40_178 = arith.constant 40 : index
    %c0_179 = arith.constant 0 : index
    %211 = vector.load %arg9[%c40_178, %c0_179] : memref<216x512xf32, #tpu.memory_space<vmem>>, vector<8x512xf32>
    tpu.vector_store %arg9[%c40_178, %c0_179], %210 {strides = array<i32>} : memref<216x512xf32, #tpu.memory_space<vmem>>, vector<8x512xf32>,
    %c0_180 = arith.constant 0 : index
    %c71_181 = arith.constant 71 : index
    %212 = vector.load %arg8[%c0_180, %c71_181] : memref<8x768xf32, #tpu.memory_space<vmem>>, vector<8x512xf32>
    %c6_182 = arith.constant 6 : index
    %c0_183 = arith.constant 0 : index
    %c0_184 = arith.constant 0 : index
    %213 = vector.load %arg6[%c6_182, %c0_183, %c0_184] : memref<27x1x512xf32, #tpu.memory_space<vmem>>, vector<1x1x512xf32>
    %214 = vector.shape_cast %213 : vector<1x1x512xf32> to vector<1x512xf32>
    %215 = vector.broadcast %214 : vector<1x512xf32> to vector<8x512xf32>
    %216 = arith.mulf %212, %215 : vector<8x512xf32>
    %c48_185 = arith.constant 48 : index
    %c0_186 = arith.constant 0 : index
    %217 = vector.load %arg9[%c48_185, %c0_186] : memref<216x512xf32, #tpu.memory_space<vmem>>, vector<8x512xf32>
    tpu.vector_store %arg9[%c48_185, %c0_186], %216 {strides = array<i32>} : memref<216x512xf32, #tpu.memory_space<vmem>>, vector<8x512xf32>,
    %c0_187 = arith.constant 0 : index
    %c72_188 = arith.constant 72 : index
    %218 = vector.load %arg8[%c0_187, %c72_188] : memref<8x768xf32, #tpu.memory_space<vmem>>, vector<8x512xf32>
    %c7_189 = arith.constant 7 : index
    %c0_190 = arith.constant 0 : index
    %c0_191 = arith.constant 0 : index
    %219 = vector.load %arg6[%c7_189, %c0_190, %c0_191] : memref<27x1x512xf32, #tpu.memory_space<vmem>>, vector<1x1x512xf32>
    %220 = vector.shape_cast %219 : vector<1x1x512xf32> to vector<1x512xf32>
    %221 = vector.broadcast %220 : vector<1x512xf32> to vector<8x512xf32>
    %222 = arith.mulf %218, %221 : vector<8x512xf32>
    %c56_192 = arith.constant 56 : index
    %c0_193 = arith.constant 0 : index
    %223 = vector.load %arg9[%c56_192, %c0_193] : memref<216x512xf32, #tpu.memory_space<vmem>>, vector<8x512xf32>
    tpu.vector_store %arg9[%c56_192, %c0_193], %222 {strides = array<i32>} : memref<216x512xf32, #tpu.memory_space<vmem>>, vector<8x512xf32>,
    %c0_194 = arith.constant 0 : index
    %c73_195 = arith.constant 73 : index
    %224 = vector.load %arg8[%c0_194, %c73_195] : memref<8x768xf32, #tpu.memory_space<vmem>>, vector<8x512xf32>
    %c8_196 = arith.constant 8 : index
    %c0_197 = arith.constant 0 : index
    %c0_198 = arith.constant 0 : index
    %225 = vector.load %arg6[%c8_196, %c0_197, %c0_198] : memref<27x1x512xf32, #tpu.memory_space<vmem>>, vector<1x1x512xf32>
    %226 = vector.shape_cast %225 : vector<1x1x512xf32> to vector<1x512xf32>
    %227 = vector.broadcast %226 : vector<1x512xf32> to vector<8x512xf32>
    %228 = arith.mulf %224, %227 : vector<8x512xf32>
    %c64_199 = arith.constant 64 : index
    %c0_200 = arith.constant 0 : index
    %229 = vector.load %arg9[%c64_199, %c0_200] : memref<216x512xf32, #tpu.memory_space<vmem>>, vector<8x512xf32>
    tpu.vector_store %arg9[%c64_199, %c0_200], %228 {strides = array<i32>} : memref<216x512xf32, #tpu.memory_space<vmem>>, vector<8x512xf32>,
    %c0_201 = arith.constant 0 : index
    %c119_202 = arith.constant 119 : index
    %230 = vector.load %arg8[%c0_201, %c119_202] : memref<8x768xf32, #tpu.memory_space<vmem>>, vector<8x512xf32>
    %c9_203 = arith.constant 9 : index
    %c0_204 = arith.constant 0 : index
    %c0_205 = arith.constant 0 : index
    %231 = vector.load %arg6[%c9_203, %c0_204, %c0_205] : memref<27x1x512xf32, #tpu.memory_space<vmem>>, vector<1x1x512xf32>
    %232 = vector.shape_cast %231 : vector<1x1x512xf32> to vector<1x512xf32>
    %233 = vector.broadcast %232 : vector<1x512xf32> to vector<8x512xf32>
    %234 = arith.mulf %230, %233 : vector<8x512xf32>
    %c72_206 = arith.constant 72 : index
    %c0_207 = arith.constant 0 : index
    %235 = vector.load %arg9[%c72_206, %c0_207] : memref<216x512xf32, #tpu.memory_space<vmem>>, vector<8x512xf32>
    tpu.vector_store %arg9[%c72_206, %c0_207], %234 {strides = array<i32>} : memref<216x512xf32, #tpu.memory_space<vmem>>, vector<8x512xf32>,
    %c0_208 = arith.constant 0 : index
    %c120_209 = arith.constant 120 : index
    %236 = vector.load %arg8[%c0_208, %c120_209] : memref<8x768xf32, #tpu.memory_space<vmem>>, vector<8x512xf32>
    %c10_210 = arith.constant 10 : index
    %c0_211 = arith.constant 0 : index
    %c0_212 = arith.constant 0 : index
    %237 = vector.load %arg6[%c10_210, %c0_211, %c0_212] : memref<27x1x512xf32, #tpu.memory_space<vmem>>, vector<1x1x512xf32>
    %238 = vector.shape_cast %237 : vector<1x1x512xf32> to vector<1x512xf32>
    %239 = vector.broadcast %238 : vector<1x512xf32> to vector<8x512xf32>
    %240 = arith.mulf %236, %239 : vector<8x512xf32>
    %c80_213 = arith.constant 80 : index
    %c0_214 = arith.constant 0 : index
    %241 = vector.load %arg9[%c80_213, %c0_214] : memref<216x512xf32, #tpu.memory_space<vmem>>, vector<8x512xf32>
    tpu.vector_store %arg9[%c80_213, %c0_214], %240 {strides = array<i32>} : memref<216x512xf32, #tpu.memory_space<vmem>>, vector<8x512xf32>,
    %c0_215 = arith.constant 0 : index
    %c121_216 = arith.constant 121 : index
    %242 = vector.load %arg8[%c0_215, %c121_216] : memref<8x768xf32, #tpu.memory_space<vmem>>, vector<8x512xf32>
    %c11_217 = arith.constant 11 : index
    %c0_218 = arith.constant 0 : index
    %c0_219 = arith.constant 0 : index
    %243 = vector.load %arg6[%c11_217, %c0_218, %c0_219] : memref<27x1x512xf32, #tpu.memory_space<vmem>>, vector<1x1x512xf32>
    %244 = vector.shape_cast %243 : vector<1x1x512xf32> to vector<1x512xf32>
    %245 = vector.broadcast %244 : vector<1x512xf32> to vector<8x512xf32>
    %246 = arith.mulf %242, %245 : vector<8x512xf32>
    %c88_220 = arith.constant 88 : index
    %c0_221 = arith.constant 0 : index
    %247 = vector.load %arg9[%c88_220, %c0_221] : memref<216x512xf32, #tpu.memory_space<vmem>>, vector<8x512xf32>
    tpu.vector_store %arg9[%c88_220, %c0_221], %246 {strides = array<i32>} : memref<216x512xf32, #tpu.memory_space<vmem>>, vector<8x512xf32>,
    %c0_222 = arith.constant 0 : index
    %c127_223 = arith.constant 127 : index
    %248 = vector.load %arg8[%c0_222, %c127_223] : memref<8x768xf32, #tpu.memory_space<vmem>>, vector<8x512xf32>
    %c12_224 = arith.constant 12 : index
    %c0_225 = arith.constant 0 : index
    %c0_226 = arith.constant 0 : index
    %249 = vector.load %arg6[%c12_224, %c0_225, %c0_226] : memref<27x1x512xf32, #tpu.memory_space<vmem>>, vector<1x1x512xf32>
    %250 = vector.shape_cast %249 : vector<1x1x512xf32> to vector<1x512xf32>
    %251 = vector.broadcast %250 : vector<1x512xf32> to vector<8x512xf32>
    %252 = arith.mulf %248, %251 : vector<8x512xf32>
    %c96_227 = arith.constant 96 : index
    %c0_228 = arith.constant 0 : index
    %253 = vector.load %arg9[%c96_227, %c0_228] : memref<216x512xf32, #tpu.memory_space<vmem>>, vector<8x512xf32>
    tpu.vector_store %arg9[%c96_227, %c0_228], %252 {strides = array<i32>} : memref<216x512xf32, #tpu.memory_space<vmem>>, vector<8x512xf32>,
    %c0_229 = arith.constant 0 : index
    %c128_230 = arith.constant 128 : index
    %254 = vector.load %arg8[%c0_229, %c128_230] : memref<8x768xf32, #tpu.memory_space<vmem>>, vector<8x512xf32>
    %c13_231 = arith.constant 13 : index
    %c0_232 = arith.constant 0 : index
    %c0_233 = arith.constant 0 : index
    %255 = vector.load %arg6[%c13_231, %c0_232, %c0_233] : memref<27x1x512xf32, #tpu.memory_space<vmem>>, vector<1x1x512xf32>
    %256 = vector.shape_cast %255 : vector<1x1x512xf32> to vector<1x512xf32>
    %257 = vector.broadcast %256 : vector<1x512xf32> to vector<8x512xf32>
    %258 = arith.mulf %254, %257 : vector<8x512xf32>
    %c104_234 = arith.constant 104 : index
    %c0_235 = arith.constant 0 : index
    %259 = vector.load %arg9[%c104_234, %c0_235] : memref<216x512xf32, #tpu.memory_space<vmem>>, vector<8x512xf32>
    tpu.vector_store %arg9[%c104_234, %c0_235], %258 {strides = array<i32>} : memref<216x512xf32, #tpu.memory_space<vmem>>, vector<8x512xf32>,
    %c0_236 = arith.constant 0 : index
    %c129_237 = arith.constant 129 : index
    %260 = vector.load %arg8[%c0_236, %c129_237] : memref<8x768xf32, #tpu.memory_space<vmem>>, vector<8x512xf32>
    %c14_238 = arith.constant 14 : index
    %c0_239 = arith.constant 0 : index
    %c0_240 = arith.constant 0 : index
    %261 = vector.load %arg6[%c14_238, %c0_239, %c0_240] : memref<27x1x512xf32, #tpu.memory_space<vmem>>, vector<1x1x512xf32>
    %262 = vector.shape_cast %261 : vector<1x1x512xf32> to vector<1x512xf32>
    %263 = vector.broadcast %262 : vector<1x512xf32> to vector<8x512xf32>
    %264 = arith.mulf %260, %263 : vector<8x512xf32>
    %c112_241 = arith.constant 112 : index
    %c0_242 = arith.constant 0 : index
    %265 = vector.load %arg9[%c112_241, %c0_242] : memref<216x512xf32, #tpu.memory_space<vmem>>, vector<8x512xf32>
    tpu.vector_store %arg9[%c112_241, %c0_242], %264 {strides = array<i32>} : memref<216x512xf32, #tpu.memory_space<vmem>>, vector<8x512xf32>,
    %c0_243 = arith.constant 0 : index
    %c135_244 = arith.constant 135 : index
    %266 = vector.load %arg8[%c0_243, %c135_244] : memref<8x768xf32, #tpu.memory_space<vmem>>, vector<8x512xf32>
    %c15_245 = arith.constant 15 : index
    %c0_246 = arith.constant 0 : index
    %c0_247 = arith.constant 0 : index
    %267 = vector.load %arg6[%c15_245, %c0_246, %c0_247] : memref<27x1x512xf32, #tpu.memory_space<vmem>>, vector<1x1x512xf32>
    %268 = vector.shape_cast %267 : vector<1x1x512xf32> to vector<1x512xf32>
    %269 = vector.broadcast %268 : vector<1x512xf32> to vector<8x512xf32>
    %270 = arith.mulf %266, %269 : vector<8x512xf32>
    %c120_248 = arith.constant 120 : index
    %c0_249 = arith.constant 0 : index
    %271 = vector.load %arg9[%c120_248, %c0_249] : memref<216x512xf32, #tpu.memory_space<vmem>>, vector<8x512xf32>
    tpu.vector_store %arg9[%c120_248, %c0_249], %270 {strides = array<i32>} : memref<216x512xf32, #tpu.memory_space<vmem>>, vector<8x512xf32>,
    %c0_250 = arith.constant 0 : index
    %c136_251 = arith.constant 136 : index
    %272 = vector.load %arg8[%c0_250, %c136_251] : memref<8x768xf32, #tpu.memory_space<vmem>>, vector<8x512xf32>
    %c16_252 = arith.constant 16 : index
    %c0_253 = arith.constant 0 : index
    %c0_254 = arith.constant 0 : index
    %273 = vector.load %arg6[%c16_252, %c0_253, %c0_254] : memref<27x1x512xf32, #tpu.memory_space<vmem>>, vector<1x1x512xf32>
    %274 = vector.shape_cast %273 : vector<1x1x512xf32> to vector<1x512xf32>
    %275 = vector.broadcast %274 : vector<1x512xf32> to vector<8x512xf32>
    %276 = arith.mulf %272, %275 : vector<8x512xf32>
    %c128_255 = arith.constant 128 : index
    %c0_256 = arith.constant 0 : index
    %277 = vector.load %arg9[%c128_255, %c0_256] : memref<216x512xf32, #tpu.memory_space<vmem>>, vector<8x512xf32>
    tpu.vector_store %arg9[%c128_255, %c0_256], %276 {strides = array<i32>} : memref<216x512xf32, #tpu.memory_space<vmem>>, vector<8x512xf32>,
    %c0_257 = arith.constant 0 : index
    %c137_258 = arith.constant 137 : index
    %278 = vector.load %arg8[%c0_257, %c137_258] : memref<8x768xf32, #tpu.memory_space<vmem>>, vector<8x512xf32>
    %c17_259 = arith.constant 17 : index
    %c0_260 = arith.constant 0 : index
    %c0_261 = arith.constant 0 : index
    %279 = vector.load %arg6[%c17_259, %c0_260, %c0_261] : memref<27x1x512xf32, #tpu.memory_space<vmem>>, vector<1x1x512xf32>
    %280 = vector.shape_cast %279 : vector<1x1x512xf32> to vector<1x512xf32>
    %281 = vector.broadcast %280 : vector<1x512xf32> to vector<8x512xf32>
    %282 = arith.mulf %278, %281 : vector<8x512xf32>
    %c136_262 = arith.constant 136 : index
    %c0_263 = arith.constant 0 : index
    %283 = vector.load %arg9[%c136_262, %c0_263] : memref<216x512xf32, #tpu.memory_space<vmem>>, vector<8x512xf32>
    tpu.vector_store %arg9[%c136_262, %c0_263], %282 {strides = array<i32>} : memref<216x512xf32, #tpu.memory_space<vmem>>, vector<8x512xf32>,
    %c0_264 = arith.constant 0 : index
    %c183_265 = arith.constant 183 : index
    %284 = vector.load %arg8[%c0_264, %c183_265] : memref<8x768xf32, #tpu.memory_space<vmem>>, vector<8x512xf32>
    %c18_266 = arith.constant 18 : index
    %c0_267 = arith.constant 0 : index
    %c0_268 = arith.constant 0 : index
    %285 = vector.load %arg6[%c18_266, %c0_267, %c0_268] : memref<27x1x512xf32, #tpu.memory_space<vmem>>, vector<1x1x512xf32>
    %286 = vector.shape_cast %285 : vector<1x1x512xf32> to vector<1x512xf32>
    %287 = vector.broadcast %286 : vector<1x512xf32> to vector<8x512xf32>
    %288 = arith.mulf %284, %287 : vector<8x512xf32>
    %c144_269 = arith.constant 144 : index
    %c0_270 = arith.constant 0 : index
    %289 = vector.load %arg9[%c144_269, %c0_270] : memref<216x512xf32, #tpu.memory_space<vmem>>, vector<8x512xf32>
    tpu.vector_store %arg9[%c144_269, %c0_270], %288 {strides = array<i32>} : memref<216x512xf32, #tpu.memory_space<vmem>>, vector<8x512xf32>,
    %c0_271 = arith.constant 0 : index
    %c184_272 = arith.constant 184 : index
    %290 = vector.load %arg8[%c0_271, %c184_272] : memref<8x768xf32, #tpu.memory_space<vmem>>, vector<8x512xf32>
    %c19_273 = arith.constant 19 : index
    %c0_274 = arith.constant 0 : index
    %c0_275 = arith.constant 0 : index
    %291 = vector.load %arg6[%c19_273, %c0_274, %c0_275] : memref<27x1x512xf32, #tpu.memory_space<vmem>>, vector<1x1x512xf32>
    %292 = vector.shape_cast %291 : vector<1x1x512xf32> to vector<1x512xf32>
    %293 = vector.broadcast %292 : vector<1x512xf32> to vector<8x512xf32>
    %294 = arith.mulf %290, %293 : vector<8x512xf32>
    %c152_276 = arith.constant 152 : index
    %c0_277 = arith.constant 0 : index
    %295 = vector.load %arg9[%c152_276, %c0_277] : memref<216x512xf32, #tpu.memory_space<vmem>>, vector<8x512xf32>
    tpu.vector_store %arg9[%c152_276, %c0_277], %294 {strides = array<i32>} : memref<216x512xf32, #tpu.memory_space<vmem>>, vector<8x512xf32>,
    %c0_278 = arith.constant 0 : index
    %c185_279 = arith.constant 185 : index
    %296 = vector.load %arg8[%c0_278, %c185_279] : memref<8x768xf32, #tpu.memory_space<vmem>>, vector<8x512xf32>
    %c20_280 = arith.constant 20 : index
    %c0_281 = arith.constant 0 : index
    %c0_282 = arith.constant 0 : index
    %297 = vector.load %arg6[%c20_280, %c0_281, %c0_282] : memref<27x1x512xf32, #tpu.memory_space<vmem>>, vector<1x1x512xf32>
    %298 = vector.shape_cast %297 : vector<1x1x512xf32> to vector<1x512xf32>
    %299 = vector.broadcast %298 : vector<1x512xf32> to vector<8x512xf32>
    %300 = arith.mulf %296, %299 : vector<8x512xf32>
    %c160_283 = arith.constant 160 : index
    %c0_284 = arith.constant 0 : index
    %301 = vector.load %arg9[%c160_283, %c0_284] : memref<216x512xf32, #tpu.memory_space<vmem>>, vector<8x512xf32>
    tpu.vector_store %arg9[%c160_283, %c0_284], %300 {strides = array<i32>} : memref<216x512xf32, #tpu.memory_space<vmem>>, vector<8x512xf32>,
    %c0_285 = arith.constant 0 : index
    %c191_286 = arith.constant 191 : index
    %302 = vector.load %arg8[%c0_285, %c191_286] : memref<8x768xf32, #tpu.memory_space<vmem>>, vector<8x512xf32>
    %c21_287 = arith.constant 21 : index
    %c0_288 = arith.constant 0 : index
    %c0_289 = arith.constant 0 : index
    %303 = vector.load %arg6[%c21_287, %c0_288, %c0_289] : memref<27x1x512xf32, #tpu.memory_space<vmem>>, vector<1x1x512xf32>
    %304 = vector.shape_cast %303 : vector<1x1x512xf32> to vector<1x512xf32>
    %305 = vector.broadcast %304 : vector<1x512xf32> to vector<8x512xf32>
    %306 = arith.mulf %302, %305 : vector<8x512xf32>
    %c168_290 = arith.constant 168 : index
    %c0_291 = arith.constant 0 : index
    %307 = vector.load %arg9[%c168_290, %c0_291] : memref<216x512xf32, #tpu.memory_space<vmem>>, vector<8x512xf32>
    tpu.vector_store %arg9[%c168_290, %c0_291], %306 {strides = array<i32>} : memref<216x512xf32, #tpu.memory_space<vmem>>, vector<8x512xf32>,
    %c0_292 = arith.constant 0 : index
    %c192_293 = arith.constant 192 : index
    %308 = vector.load %arg8[%c0_292, %c192_293] : memref<8x768xf32, #tpu.memory_space<vmem>>, vector<8x512xf32>
    %c22_294 = arith.constant 22 : index
    %c0_295 = arith.constant 0 : index
    %c0_296 = arith.constant 0 : index
    %309 = vector.load %arg6[%c22_294, %c0_295, %c0_296] : memref<27x1x512xf32, #tpu.memory_space<vmem>>, vector<1x1x512xf32>
    %310 = vector.shape_cast %309 : vector<1x1x512xf32> to vector<1x512xf32>
    %311 = vector.broadcast %310 : vector<1x512xf32> to vector<8x512xf32>
    %312 = arith.mulf %308, %311 : vector<8x512xf32>
    %c176_297 = arith.constant 176 : index
    %c0_298 = arith.constant 0 : index
    %313 = vector.load %arg9[%c176_297, %c0_298] : memref<216x512xf32, #tpu.memory_space<vmem>>, vector<8x512xf32>
    tpu.vector_store %arg9[%c176_297, %c0_298], %312 {strides = array<i32>} : memref<216x512xf32, #tpu.memory_space<vmem>>, vector<8x512xf32>,
    %c0_299 = arith.constant 0 : index
    %c193_300 = arith.constant 193 : index
    %314 = vector.load %arg8[%c0_299, %c193_300] : memref<8x768xf32, #tpu.memory_space<vmem>>, vector<8x512xf32>
    %c23_301 = arith.constant 23 : index
    %c0_302 = arith.constant 0 : index
    %c0_303 = arith.constant 0 : index
    %315 = vector.load %arg6[%c23_301, %c0_302, %c0_303] : memref<27x1x512xf32, #tpu.memory_space<vmem>>, vector<1x1x512xf32>
    %316 = vector.shape_cast %315 : vector<1x1x512xf32> to vector<1x512xf32>
    %317 = vector.broadcast %316 : vector<1x512xf32> to vector<8x512xf32>
    %318 = arith.mulf %314, %317 : vector<8x512xf32>
    %c184_304 = arith.constant 184 : index
    %c0_305 = arith.constant 0 : index
    %319 = vector.load %arg9[%c184_304, %c0_305] : memref<216x512xf32, #tpu.memory_space<vmem>>, vector<8x512xf32>
    tpu.vector_store %arg9[%c184_304, %c0_305], %318 {strides = array<i32>} : memref<216x512xf32, #tpu.memory_space<vmem>>, vector<8x512xf32>,
    %c0_306 = arith.constant 0 : index
    %c199_307 = arith.constant 199 : index
    %320 = vector.load %arg8[%c0_306, %c199_307] : memref<8x768xf32, #tpu.memory_space<vmem>>, vector<8x512xf32>
    %c24_308 = arith.constant 24 : index
    %c0_309 = arith.constant 0 : index
    %c0_310 = arith.constant 0 : index
    %321 = vector.load %arg6[%c24_308, %c0_309, %c0_310] : memref<27x1x512xf32, #tpu.memory_space<vmem>>, vector<1x1x512xf32>
    %322 = vector.shape_cast %321 : vector<1x1x512xf32> to vector<1x512xf32>
    %323 = vector.broadcast %322 : vector<1x512xf32> to vector<8x512xf32>
    %324 = arith.mulf %320, %323 : vector<8x512xf32>
    %c192_311 = arith.constant 192 : index
    %c0_312 = arith.constant 0 : index
    %325 = vector.load %arg9[%c192_311, %c0_312] : memref<216x512xf32, #tpu.memory_space<vmem>>, vector<8x512xf32>
    tpu.vector_store %arg9[%c192_311, %c0_312], %324 {strides = array<i32>} : memref<216x512xf32, #tpu.memory_space<vmem>>, vector<8x512xf32>,
    %c0_313 = arith.constant 0 : index
    %c200_314 = arith.constant 200 : index
    %326 = vector.load %arg8[%c0_313, %c200_314] : memref<8x768xf32, #tpu.memory_space<vmem>>, vector<8x512xf32>
    %c25_315 = arith.constant 25 : index
    %c0_316 = arith.constant 0 : index
    %c0_317 = arith.constant 0 : index
    %327 = vector.load %arg6[%c25_315, %c0_316, %c0_317] : memref<27x1x512xf32, #tpu.memory_space<vmem>>, vector<1x1x512xf32>
    %328 = vector.shape_cast %327 : vector<1x1x512xf32> to vector<1x512xf32>
    %329 = vector.broadcast %328 : vector<1x512xf32> to vector<8x512xf32>
    %330 = arith.mulf %326, %329 : vector<8x512xf32>
    %c200_318 = arith.constant 200 : index
    %c0_319 = arith.constant 0 : index
    %331 = vector.load %arg9[%c200_318, %c0_319] : memref<216x512xf32, #tpu.memory_space<vmem>>, vector<8x512xf32>
    tpu.vector_store %arg9[%c200_318, %c0_319], %330 {strides = array<i32>} : memref<216x512xf32, #tpu.memory_space<vmem>>, vector<8x512xf32>,
    %c0_320 = arith.constant 0 : index
    %c201_321 = arith.constant 201 : index
    %332 = vector.load %arg8[%c0_320, %c201_321] : memref<8x768xf32, #tpu.memory_space<vmem>>, vector<8x512xf32>
    %c26_322 = arith.constant 26 : index
    %c0_323 = arith.constant 0 : index
    %c0_324 = arith.constant 0 : index
    %333 = vector.load %arg6[%c26_322, %c0_323, %c0_324] : memref<27x1x512xf32, #tpu.memory_space<vmem>>, vector<1x1x512xf32>
    %334 = vector.shape_cast %333 : vector<1x1x512xf32> to vector<1x512xf32>
    %335 = vector.broadcast %334 : vector<1x512xf32> to vector<8x512xf32>
    %336 = arith.mulf %332, %335 : vector<8x512xf32>
    %c208_325 = arith.constant 208 : index
    %c0_326 = arith.constant 0 : index
    %337 = vector.load %arg9[%c208_325, %c0_326] : memref<216x512xf32, #tpu.memory_space<vmem>>, vector<8x512xf32>
    tpu.vector_store %arg9[%c208_325, %c0_326], %336 {strides = array<i32>} : memref<216x512xf32, #tpu.memory_space<vmem>>, vector<8x512xf32>,
    %c0_327 = arith.constant 0 : index
    %c0_328 = arith.constant 0 : index
    %338 = vector.load %arg4[%c0_327, %c0_328] : memref<8x216xf32, #tpu.memory_space<vmem>>, vector<8x216xf32>
    %c0_329 = arith.constant 0 : index
    %c0_330 = arith.constant 0 : index
    %339 = vector.load %arg9[%c0_329, %c0_330] : memref<216x512xf32, #tpu.memory_space<vmem>>, vector<216x512xf32>
    %cst_331 = arith.constant dense<0.000000e+00> : vector<8x512xf32>
    %340 = tpu.matmul %338, %339, %cst_331 {dimension_numbers = #tpu.dot_dimension_numbers<[1], [0], [0], [1], [0, 0, 1, 1], [], []>} : vector<8x216xf32>, vector<216x512xf32>, vector<8x512xf32> -> vector<8x512xf32>
    %c0_332 = arith.constant 0 : index
    %c0_333 = arith.constant 0 : index
    %341 = vector.load %arg5[%c0_332, %c0_333] : memref<8x1xf32, #tpu.memory_space<vmem>>, vector<8x1xf32>
    %342 = vector.broadcast %341 : vector<8x1xf32> to vector<8x512xf32>
    %343 = arith.addf %340, %342 : vector<8x512xf32>
    %344 = arith.addf %343, %3 : vector<8x512xf32>
    %cst_334 = arith.constant 0.000000e+00 : f32
    %345 = vector.broadcast %cst_334 : f32 to vector<8x512xf32>
    %346 = arith.maximumf %344, %345 : vector<8x512xf32>
    %c0_335 = arith.constant 0 : index
    %c0_336 = arith.constant 0 : index
    %c0_337 = arith.constant 0 : index
    %347 = vector.load %arg7[%c0_335, %c0_336, %c0_337] : memref<1x8x512xf32, #tpu.memory_space<vmem>>, vector<1x8x512xf32>
    %348 = vector.shape_cast %347 : vector<1x8x512xf32> to vector<8x512xf32>
    %349 = vector.shape_cast %346 : vector<8x512xf32> to vector<1x8x512xf32>
    tpu.vector_store %arg7[%c0_335, %c0_336, %c0_337], %349 {strides = array<i32>} : memref<1x8x512xf32, #tpu.memory_space<vmem>>, vector<1x8x512xf32>,
    return
  }
  func.func @transform_0(%arg0: i32) -> (i32, i32, i32) {
    %c0_i32 = arith.constant 0 : i32
    %c0_i32_0 = arith.constant 0 : i32
    %c0_i32_1 = arith.constant 0 : i32
    return %arg0, %c0_i32, %c0_i32_0 : i32, i32, i32
  }
  func.func @transform_1(%arg0: i32) -> (i32, i32) {
    %c0_i32 = arith.constant 0 : i32
    %c0_i32_0 = arith.constant 0 : i32
    %c0_i32_1 = arith.constant 0 : i32
    return %c0_i32, %c0_i32_0 : i32, i32
  }
  func.func @transform_2(%arg0: i32) -> (i32, i32) {
    %c0_i32 = arith.constant 0 : i32
    %c0_i32_0 = arith.constant 0 : i32
    %c0_i32_1 = arith.constant 0 : i32
    return %c0_i32, %c0_i32_0 : i32, i32
  }
  func.func @transform_3(%arg0: i32) -> (i32, i32) {
    %c0_i32 = arith.constant 0 : i32
    %c0_i32_0 = arith.constant 0 : i32
    %c0_i32_1 = arith.constant 0 : i32
    return %c0_i32, %c0_i32_0 : i32, i32
  }
  func.func @transform_4(%arg0: i32) -> (i32, i32) {
    %c0_i32 = arith.constant 0 : i32
    %c0_i32_0 = arith.constant 0 : i32
    %c0_i32_1 = arith.constant 0 : i32
    return %c0_i32, %c0_i32_0 : i32, i32
  }
  func.func @transform_5(%arg0: i32) -> (i32, i32, i32) {
    %c0_i32 = arith.constant 0 : i32
    %c0_i32_0 = arith.constant 0 : i32
    %c0_i32_1 = arith.constant 0 : i32
    %c0_i32_2 = arith.constant 0 : i32
    return %c0_i32, %c0_i32_0, %c0_i32_1 : i32, i32, i32
  }
  func.func @transform_6(%arg0: i32) -> (i32, i32, i32) {
    %c0_i32 = arith.constant 0 : i32
    %c0_i32_0 = arith.constant 0 : i32
    %c0_i32_1 = arith.constant 0 : i32
    return %arg0, %c0_i32, %c0_i32_0 : i32, i32, i32
  }
}

</mosaic_0001>

<llo_original>
// kernel: tpu_custom_call.1
$region0: #{tpu_custom_call.1}
  #allocation0 [shape = 'u32[]', space=smem, size = 0x4, offset = 0x4, fixed_abs, tag = 'smem constant byte address 0x4 - core index']
  #allocation1 [shape = 'u32[144,128]{1,0:T(1,128)}', space=vmem, size = 0x12000, scoped, tag = 'internal scratch']
  #allocation2 [shape = 'f32[8,768]{1,0:T(8,128)}', space=vmem, size = 0x6000, scoped, tag = 'scratch operand']
  #allocation3 [shape = 'f32[216,512]{1,0:T(8,128)}', space=vmem, size = 0x6c000, scoped, tag = 'scratch operand']
  %s0 = inlined_call_operand.hbm [shape: f32[2,8,512], index: 0, kind: input, shape index: {}]
  %s1 = inlined_call_operand.vmem [shape: f32[8,216], index: 1, kind: input, shape index: {}]
  %s2 = inlined_call_operand.vmem [shape: f32[8,1], index: 2, kind: input, shape index: {}]
  %s3 = inlined_call_operand.hbm [shape: f32[8,216], index: 3, kind: input, shape index: {}]
  %s4 = inlined_call_operand.vmem [shape: f32[8,1], index: 4, kind: input, shape index: {}]
  %s5 = inlined_call_operand.hbm [shape: f32[27,1,512], index: 5, kind: input, shape index: {}]
  %s6 = inlined_call_operand.hbm [shape: f32[2,8,512], index: 6, kind: output, shape index: {}]
  %s7 = sld [smem:[#allocation0]]
  $region69: #{tpu_custom_call.1} parent=0
    _
  %s9 = ssub.s32 1, %s7
  %s10 = scalar_select 0, %s9, %s7
  $region1: #{tpu_custom_call.1} parent=0
    #allocation4 [shape = 'u8[32768]{0}', space=vmem, size = 0x8000, scoped, tag = 'input window, operand 0']
    #allocation5 [shape = 's32[2]{0}', space=sflag, size = 0x8, scoped, tag = 'scoped memory for tpu_custom_call.1']
    #allocation6 [shape = 's32[2]{0}', space=sflag, size = 0x8, scoped, tag = 'scoped memory for tpu_custom_call.1']
    #allocation7 [shape = 'u8[8192]{0}', space=vmem, size = 0x2000, scoped, tag = 'input window, operand 3, single buffered']
    #allocation8 [shape = 's32[1]{0}', space=sflag, size = 0x4, scoped, tag = 'scoped memory for tpu_custom_call.1']
    #allocation9 [shape = 'u8[55296]{0}', space=vmem, size = 0xd800, scoped, tag = 'input window, operand 5, single buffered']
    #allocation10 [shape = 'u8[32768]{0}', space=vmem, size = 0x8000, scoped, tag = 'output window, operand 0']
    %11 = vsyncpa [#allocation5], 0
    %s12 = scalar_lea.sflag [#allocation5], 1
    %13 = vsyncpa %s12, 0
    %14 = vsyncpa [#allocation8], 0
    %15 = vsyncpa [#allocation6], 0
    %s16 = scalar_lea.sflag [#allocation6], 1
    %17 = vsyncpa %s16, 0
    loop: start=0, step=1, limit=4
    $region2: #{tpu_custom_call.1} parent=1 // loop_pre_header
      _
    $region3: #{tpu_custom_call.1} parent=1 // loop_header
      %s19 = sphi 0, %s23
      %p20 = scmp.ge.s32.totalorder %s19, 4
      %s29 = sphi 0, %s31
      %s32 = sphi 0, %s29
      %s33 = sphi 0, %s32
      %s49 = sphi 0, %s33
      %s53 = sphi 0, %s53
      %s55 = sphi 0, %s53
      %s56 = sphi 0, %s55
      %s70 = sphi 0, %s56
      %s74 = sphi 0, %s74
      %s76 = sphi 0, %s74
      %s77 = sphi 0, %s76
      %s91 = sphi 0, %s77
      %s95 = sphi 0, %s95
      %s97 = sphi 0, %s95
      %s98 = sphi 0, %s97
      %s112 = sphi 0, %s98
      %s116 = sphi 0, %s116
      %s118 = sphi 0, %s116
      %s119 = sphi 0, %s118
      %s133 = sphi 0, %s119
      %s137 = sphi 0, %s137
      %s139 = sphi 0, %s137
      %s140 = sphi 0, %s139
      %s154 = sphi 0, %s140
      %s160 = sphi 0, %s162
      %s163 = sphi 0, %s160
      %s164 = sphi 0, %s163
      %s180 = sphi 0, %s164
    $region4: #{tpu_custom_call.1} parent=1 // loop_header_branch
      %22 = sbr.rel (%p20) target = $region8
    $region5: #{tpu_custom_call.1} parent=1 // loop_body
      %s24 = ssub.s32 %s19, 1
      %s25 = ssub.s32 %s19, 2
      %s26 = sadd.s32 %s19, 1
      %s27 = ssub.s32 %s19, %s26
      %p28 = scmp.eq.s32.totalorder %s27, 0
      %s30 = sadd.s32 %s29, 1
      %s31 = scalar_select %p28, %s29, %s30
      %p34 = pneg %p28
      %p35 = scmp.eq.s32.totalorder %s19, 1
      %p36 = por %p34, %p35
      %p37 = scmp.ne.s32.totalorder %s29, %s32
      %p38 = scmp.eq.s32.totalorder %s19, 0
      %p39 = por %p37, %p38
      %p40 = scmp.ne.s32.totalorder %s29, %s32
      %p41 = scmp.eq.s32.totalorder %s24, 1
      %p42 = por %p40, %p41
      %p43 = scmp.ne.s32.totalorder %s32, %s33
      %p44 = scmp.eq.s32.totalorder %s24, 0
      %p45 = por %p43, %p44
      %p46 = scmp.ne.s32.totalorder %s32, %s33
      %p47 = scmp.eq.s32.totalorder %s25, 1
      %p48 = por %p46, %p47
      %p50 = scmp.ne.s32.totalorder %s33, %s49
      %p51 = scmp.eq.s32.totalorder %s25, 0
      %p52 = por %p50, %p51
      %s54 = sadd.s32 %s53, 1
      %p57 = scmp.eq.s32.totalorder %s19, 1
      %p58 = scmp.ne.s32.totalorder %s53, %s55
      %p59 = scmp.eq.s32.totalorder %s19, 0
      %p60 = por %p58, %p59
      %p61 = scmp.ne.s32.totalorder %s53, %s55
      %p62 = scmp.eq.s32.totalorder %s24, 1
      %p63 = por %p61, %p62
      %p64 = scmp.ne.s32.totalorder %s55, %s56
      %p65 = scmp.eq.s32.totalorder %s24, 0
      %p66 = por %p64, %p65
      %p67 = scmp.ne.s32.totalorder %s55, %s56
      %p68 = scmp.eq.s32.totalorder %s25, 1
      %p69 = por %p67, %p68
      %p71 = scmp.ne.s32.totalorder %s56, %s70
      %p72 = scmp.eq.s32.totalorder %s25, 0
      %p73 = por %p71, %p72
      %s75 = sadd.s32 %s74, 1
      %p78 = scmp.eq.s32.totalorder %s19, 1
      %p79 = scmp.ne.s32.totalorder %s74, %s76
      %p80 = scmp.eq.s32.totalorder %s19, 0
      %p81 = por %p79, %p80
      %p82 = scmp.ne.s32.totalorder %s74, %s76
      %p83 = scmp.eq.s32.totalorder %s24, 1
      %p84 = por %p82, %p83
      %p85 = scmp.ne.s32.totalorder %s76, %s77
      %p86 = scmp.eq.s32.totalorder %s24, 0
      %p87 = por %p85, %p86
      %p88 = scmp.ne.s32.totalorder %s76, %s77
      %p89 = scmp.eq.s32.totalorder %s25, 1
      %p90 = por %p88, %p89
      %p92 = scmp.ne.s32.totalorder %s77, %s91
      %p93 = scmp.eq.s32.totalorder %s25, 0
      %p94 = por %p92, %p93
      %s96 = sadd.s32 %s95, 1
      %p99 = scmp.eq.s32.totalorder %s19, 1
      %p100 = scmp.ne.s32.totalorder %s95, %s97
      %p101 = scmp.eq.s32.totalorder %s19, 0
      %p102 = por %p100, %p101
      %p103 = scmp.ne.s32.totalorder %s95, %s97
      %p104 = scmp.eq.s32.totalorder %s24, 1
      %p105 = por %p103, %p104
      %p106 = scmp.ne.s32.totalorder %s97, %s98
      %p107 = scmp.eq.s32.totalorder %s24, 0
      %p108 = por %p106, %p107
      %p109 = scmp.ne.s32.totalorder %s97, %s98
      %p110 = scmp.eq.s32.totalorder %s25, 1
      %p111 = por %p109, %p110
      %p113 = scmp.ne.s32.totalorder %s98, %s112
      %p114 = scmp.eq.s32.totalorder %s25, 0
      %p115 = por %p113, %p114
      %s117 = sadd.s32 %s116, 1
      %p120 = scmp.eq.s32.totalorder %s19, 1
      %p121 = scmp.ne.s32.totalorder %s116, %s118
      %p122 = scmp.eq.s32.totalorder %s19, 0
      %p123 = por %p121, %p122
      %p124 = scmp.ne.s32.totalorder %s116, %s118
      %p125 = scmp.eq.s32.totalorder %s24, 1
      %p126 = por %p124, %p125
      %p127 = scmp.ne.s32.totalorder %s118, %s119
      %p128 = scmp.eq.s32.totalorder %s24, 0
      %p129 = por %p127, %p128
      %p130 = scmp.ne.s32.totalorder %s118, %s119
      %p131 = scmp.eq.s32.totalorder %s25, 1
      %p132 = por %p130, %p131
      %p134 = scmp.ne.s32.totalorder %s119, %s133
      %p135 = scmp.eq.s32.totalorder %s25, 0
      %p136 = por %p134, %p135
      %s138 = sadd.s32 %s137, 1
      %p141 = scmp.eq.s32.totalorder %s19, 1
      %p142 = scmp.ne.s32.totalorder %s137, %s139
      %p143 = scmp.eq.s32.totalorder %s19, 0
      %p144 = por %p142, %p143
      %p145 = scmp.ne.s32.totalorder %s137, %s139
      %p146 = scmp.eq.s32.totalorder %s24, 1
      %p147 = por %p145, %p146
      %p148 = scmp.ne.s32.totalorder %s139, %s140
      %p149 = scmp.eq.s32.totalorder %s24, 0
      %p150 = por %p148, %p149
      %p151 = scmp.ne.s32.totalorder %s139, %s140
      %p152 = scmp.eq.s32.totalorder %s25, 1
      %p153 = por %p151, %p152
      %p155 = scmp.ne.s32.totalorder %s140, %s154
      %p156 = scmp.eq.s32.totalorder %s25, 0
      %p157 = por %p155, %p156
      %s158 = ssub.s32 %s19, %s26
      %p159 = scmp.eq.s32.totalorder %s158, 0
      %s161 = sadd.s32 %s160, 1
      %s162 = scalar_select %p159, %s160, %s161
      %p165 = pneg %p159
      %p166 = scmp.eq.s32.totalorder %s19, 1
      %p167 = por %p165, %p166
      %p168 = scmp.ne.s32.totalorder %s160, %s163
      %p169 = scmp.eq.s32.totalorder %s19, 0
      %p170 = por %p168, %p169
      %p171 = scmp.ne.s32.totalorder %s160, %s163
      %p172 = scmp.eq.s32.totalorder %s24, 1
      %p173 = por %p171, %p172
      %p174 = scmp.ne.s32.totalorder %s163, %s164
      %p175 = scmp.eq.s32.totalorder %s24, 0
      %p176 = por %p174, %p175
      %p177 = scmp.ne.s32.totalorder %s163, %s164
      %p178 = scmp.eq.s32.totalorder %s25, 1
      %p179 = por %p177, %p178
      %p181 = scmp.ne.s32.totalorder %s164, %s180
      %p182 = scmp.eq.s32.totalorder %s25, 0
      %p183 = por %p181, %p182
      %p184 = scmp.le.s32.totalorder 1, %s19
      %p185 = scmp.lt.s32.totalorder %s19, 3
      %p186 = pnand %p184, %p185
      %p187 = pneg %p186
      // Predicated region
      $region9: #{tpu_custom_call.1} parent=5 // pred_check
        _
      $region10: #{tpu_custom_call.1} parent=5 // pred_check_branch
        %189 = sbr.rel (%p186) target = $region12
      $region11: #{tpu_custom_call.1} parent=5 // pred_region
        %s190 = ssub.s32 %s19, 1
        // Predicated region
        $region13: #{tpu_custom_call.1} parent=11 // pred_check
          %p191 = pneg %p66
        $region14: #{tpu_custom_call.1} parent=11 // pred_check_branch
          %193 = sbr.rel (%p191) target = $region16
        $region15: #{tpu_custom_call.1} parent=11 // pred_region
          _
        $region16: #{tpu_custom_call.1} parent=11 // pred_fallthru
          _
        // Predicated region
        $region17: #{tpu_custom_call.1} parent=11 // pred_check
          %p194 = pneg %p87
        $region18: #{tpu_custom_call.1} parent=11 // pred_check_branch
          %196 = sbr.rel (%p194) target = $region20
        $region19: #{tpu_custom_call.1} parent=11 // pred_region
          _
        $region20: #{tpu_custom_call.1} parent=11 // pred_fallthru
          _
        // Predicated region
        $region21: #{tpu_custom_call.1} parent=11 // pred_check
          %p197 = pneg %p108
        $region22: #{tpu_custom_call.1} parent=11 // pred_check_branch
          %199 = sbr.rel (%p197) target = $region24
        $region23: #{tpu_custom_call.1} parent=11 // pred_region
          %s201 = ssub.s32 256, 256
          %202 = vsyncadd [#allocation8], %s201
          %s204 = sshll.u32 [#allocation7], 4
          %s205 = int_to_ptr.vmem [resolvable:$true] %s204
          %207 = dma.hbm_to_vmem [thread:$0]  %s3, 256, %s205, [#allocation8]
        $region24: #{tpu_custom_call.1} parent=11 // pred_fallthru
          _
        // Predicated region
        $region25: #{tpu_custom_call.1} parent=11 // pred_check
          %p208 = pneg %p129
        $region26: #{tpu_custom_call.1} parent=11 // pred_check_branch
          %210 = sbr.rel (%p208) target = $region28
        $region27: #{tpu_custom_call.1} parent=11 // pred_region
          _
        $region28: #{tpu_custom_call.1} parent=11 // pred_fallthru
          _
        // Predicated region
        $region29: #{tpu_custom_call.1} parent=11 // pred_check
          %p211 = pneg %p150
        $region30: #{tpu_custom_call.1} parent=11 // pred_check_branch
          %213 = sbr.rel (%p211) target = $region32
        $region31: #{tpu_custom_call.1} parent=11 // pred_region
          %s215 = ssub.s32 1728, 1728
          %216 = vsyncadd [#allocation8], %s215
          %s217 = sshll.u32 [#allocation9], 4
          %s218 = int_to_ptr.vmem [resolvable:$true] %s217
          %223 = dma.hbm_to_vmem [thread:$0]  %s5, 1728, %s218, [#allocation8], 64, 64, 4
        $region32: #{tpu_custom_call.1} parent=11 // pred_fallthru
          _
      $region12: #{tpu_custom_call.1} parent=5 // pred_fallthru
        _
      %p224 = scmp.lt.s32.totalorder %s19, 2
      // Predicated region
      $region33: #{tpu_custom_call.1} parent=5 // pred_check
        %p225 = pneg %p224
      $region34: #{tpu_custom_call.1} parent=5 // pred_check_branch
        %227 = sbr.rel (%p225) target = $region36
      $region35: #{tpu_custom_call.1} parent=5 // pred_region
        // Predicated region
        $region37: #{tpu_custom_call.1} parent=35 // pred_check
          %p228 = pneg %p39
        $region38: #{tpu_custom_call.1} parent=35 // pred_check_branch
          %230 = sbr.rel (%p228) target = $region40
        $region39: #{tpu_custom_call.1} parent=35 // pred_region
          %s231 = sand.u32 %s29, 1
          %s232 = scalar_lea.sflag [#allocation5], %s231
          %s233 = sand.u32 %s29, 1
          %s234 = smul.addr %s233, 32
          %s235 = scalar_lea.vmem [#allocation4], %s234
          %s237 = ssub.s32 512, 512
          %238 = vsyncadd %s232, %s237
          %s239 = smul.addr %s19, 4
          %s240 = smul.addr %s239, 128
          %s241 = scalar_lea.hbm %s0, %s240
          %s243 = sshll.u32 %s235, 4
          %s244 = int_to_ptr.vmem [resolvable:$true] %s243
          %246 = dma.hbm_to_vmem [thread:$0]  %s241, 512, %s244, %s232
        $region40: #{tpu_custom_call.1} parent=35 // pred_fallthru
          _
      $region36: #{tpu_custom_call.1} parent=5 // pred_fallthru
        _
      %p247 = scmp.le.s32.totalorder 1, %s19
      %p248 = scmp.lt.s32.totalorder %s19, 3
      %p249 = pnand %p247, %p248
      %p250 = pneg %p249
      // Predicated region
      $region41: #{tpu_custom_call.1} parent=5 // pred_check
        _
      $region42: #{tpu_custom_call.1} parent=5 // pred_check_branch
        %252 = sbr.rel (%p249) target = $region44
      $region43: #{tpu_custom_call.1} parent=5 // pred_region
        %s253 = ssub.s32 %s19, 1
        %s254 = sand.u32 %s32, 1
        %s255 = scalar_lea.sflag [#allocation5], %s254
        %s256 = sand.u32 %s32, 1
        %s257 = smul.addr %s256, 32
        %s258 = scalar_lea.vmem [#allocation4], %s257
        // Predicated region
        $region45: #{tpu_custom_call.1} parent=43 // pred_check
          %p259 = pneg %p45
        $region46: #{tpu_custom_call.1} parent=43 // pred_check_branch
          %261 = sbr.rel (%p259) target = $region48
        $region47: #{tpu_custom_call.1} parent=43 // pred_region
          %262 = dma.done %s255, 512
        $region48: #{tpu_custom_call.1} parent=43 // pred_fallthru
          _
        // Predicated region
        $region49: #{tpu_custom_call.1} parent=43 // pred_check
          %p263 = pneg %p108
        $region50: #{tpu_custom_call.1} parent=43 // pred_check_branch
          %265 = sbr.rel (%p263) target = $region52
        $region51: #{tpu_custom_call.1} parent=43 // pred_region
          %266 = dma.done [#allocation8], 256
        $region52: #{tpu_custom_call.1} parent=43 // pred_fallthru
          _
        // Predicated region
        $region53: #{tpu_custom_call.1} parent=43 // pred_check
          %p267 = pneg %p150
        $region54: #{tpu_custom_call.1} parent=43 // pred_check_branch
          %269 = sbr.rel (%p267) target = $region56
        $region55: #{tpu_custom_call.1} parent=43 // pred_region
          %270 = dma.done [#allocation8], 1728
        $region56: #{tpu_custom_call.1} parent=43 // pred_fallthru
          _
        %s271 = sand.u32 %s32, 1
        %s272 = scalar_lea.sflag [#allocation5], %s271
        %s273 = sand.u32 %s32, 1
        %s274 = smul.addr %s273, 32
        %s275 = scalar_lea.vmem [#allocation4], %s274
        %p276 = pneg %p45
        %p277 = pneg %p42
        %p278 = pneg %p66
        %p279 = pneg %p63
        %p280 = pneg %p87
        %p281 = pneg %p84
        %p282 = pneg %p108
        %p283 = pneg %p105
        %p284 = pneg %p129
        %p285 = pneg %p126
        %p286 = pneg %p150
        %p287 = pneg %p147
        %p288 = pneg %p176
        %p289 = pneg %p173
        %s290 = sand.u32 %s163, 1
        %s291 = scalar_lea.sflag [#allocation6], %s290
        %s292 = sand.u32 %s163, 1
        %s293 = smul.addr %s292, 32
        %s294 = scalar_lea.vmem [#allocation10], %s293
        %295 = vst [vmem:[#allocation2] sm:$0xff] 0.0
        %296 = vst [vmem:[#allocation2 + $0x8] sm:$0xff] 0.0
        %297 = vst [vmem:[#allocation2 + $0x10] sm:$0xff] 0.0
        %298 = vst [vmem:[#allocation2 + $0x18] sm:$0xff] 0.0
        %299 = vst [vmem:[#allocation2 + $0x20] sm:$0xff] 0.0
        %300 = vst [vmem:[#allocation2 + $0x28] sm:$0xff] 0.0
        %v301 = vld [vmem:[%s258] sm:$0xff]
        %v302 = vld [vmem:[%s258 + $0x8] sm:$0xff]
        %v303 = vld [vmem:[%s258 + $0x10] sm:$0xff]
        %v304 = vld [vmem:[%s258 + $0x18] sm:$0xff]
        %305 = vst [vmem:[#allocation2 + $0x8] sm:$0xff] %v301
        %306 = vst [vmem:[#allocation2 + $0x10] sm:$0xff] %v302
        %307 = vst [vmem:[#allocation2 + $0x18] sm:$0xff] %v303
        %308 = vst [vmem:[#allocation2 + $0x20] sm:$0xff] %v304
        %v309 = vld [vmem:[#allocation2] sm:$0xff]
        %v310 = vld [vmem:[#allocation2 + $0x8] sm:$0xff]
        %v311 = vld [vmem:[#allocation2 + $0x10] sm:$0xff]
        %v312 = vld [vmem:[#allocation2 + $0x18] sm:$0xff]
        %v313 = vld [vmem:[#allocation2 + $0x20] sm:$0xff]
        %v314 = vld [vmem:[#allocation9] sm:$0xf]
        %v316 = vlaneseq
        %v317 = vshrl.u32 %v316, 7
        %v318 = vsub.s32 0, %v317
        %v319 = vrot.slane %v314, %v318
        %v320 = vlaneseq
        %v321 = vshrl.u32 %v320, 7
        %v322 = vsub.s32 1, %v321
        %v323 = vrot.slane %v314, %v322
        %v324 = vlaneseq
        %v325 = vshrl.u32 %v324, 7
        %v326 = vsub.s32 2, %v325
        %v327 = vrot.slane %v314, %v326
        %v328 = vlaneseq
        %v329 = vshrl.u32 %v328, 7
        %v330 = vsub.s32 3, %v329
        %v331 = vrot.slane %v314, %v330
        %332 = vrot.lane.b32.xlu0 %v319, 55
        %v333 = vpop.permute.xlu0 %332
        %334 = vrot.lane.b32.xlu0 %v323, 55
        %v335 = vpop.permute.xlu0 %334
        %336 = vrot.lane.b32.xlu0 %v327, 55
        %v337 = vpop.permute.xlu0 %336
        %338 = vrot.lane.b32.xlu0 %v331, 55
        %v339 = vpop.permute.xlu0 %338
        %vm340 = vcmask 449536
        %v341 = vsel %vm340, %v333, %v335
        %v342 = vsel %vm340, %v335, %v337
        %v343 = vsel %vm340, %v337, %v339
        %v349 = vmul.f32 %v309, %v333
        %v350 = vmul.f32 %v310, %v341
        %v351 = vmul.f32 %v311, %v342
        %v352 = vmul.f32 %v312, %v343
        %v353 = vmul.f32 %v313, %v339
        %359 = vrot.lane.b32.xlu0 %v349, 73
        %v360 = vpop.permute.xlu0 %359
        %361 = vrot.lane.b32.xlu0 %v350, 73
        %v362 = vpop.permute.xlu0 %361
        %363 = vrot.lane.b32.xlu0 %v351, 73
        %v364 = vpop.permute.xlu0 %363
        %365 = vrot.lane.b32.xlu0 %v352, 73
        %v366 = vpop.permute.xlu0 %365
        %367 = vrot.lane.b32.xlu0 %v353, 73
        %v368 = vpop.permute.xlu0 %367
        %vm369 = vcmask 596992
        %v370 = vsel %vm369, %v360, %v362
        %v371 = vsel %vm369, %v362, %v364
        %v372 = vsel %vm369, %v364, %v366
        %v373 = vsel %vm369, %v366, %v368
        %378 = vst [vmem:[#allocation3] sm:$0xff] %v370
        %379 = vst [vmem:[#allocation3 + $0x8] sm:$0xff] %v371
        %380 = vst [vmem:[#allocation3 + $0x10] sm:$0xff] %v372
        %381 = vst [vmem:[#allocation3 + $0x18] sm:$0xff] %v373
        %v382 = vld [vmem:[#allocation2] sm:$0xff]
        %v383 = vld [vmem:[#allocation2 + $0x8] sm:$0xff]
        %v384 = vld [vmem:[#allocation2 + $0x10] sm:$0xff]
        %v385 = vld [vmem:[#allocation2 + $0x18] sm:$0xff]
        %v386 = vld [vmem:[#allocation2 + $0x20] sm:$0xff]
        %s387 = scalar_lea.vmem [#allocation9], 4
        %v388 = vld [vmem:[%s387] sm:$0xf]
        %v390 = vlaneseq
        %v391 = vshrl.u32 %v390, 7
        %v392 = vsub.s32 0, %v391
        %v393 = vrot.slane %v388, %v392
        %v394 = vlaneseq
        %v395 = vshrl.u32 %v394, 7
        %v396 = vsub.s32 1, %v395
        %v397 = vrot.slane %v388, %v396
        %v398 = vlaneseq
        %v399 = vshrl.u32 %v398, 7
        %v400 = vsub.s32 2, %v399
        %v401 = vrot.slane %v388, %v400
        %v402 = vlaneseq
        %v403 = vshrl.u32 %v402, 7
        %v404 = vsub.s32 3, %v403
        %v405 = vrot.slane %v388, %v404
        %406 = vrot.lane.b32.xlu0 %v393, 56
        %v407 = vpop.permute.xlu0 %406
        %408 = vrot.lane.b32.xlu0 %v397, 56
        %v409 = vpop.permute.xlu0 %408
        %410 = vrot.lane.b32.xlu0 %v401, 56
        %v411 = vpop.permute.xlu0 %410
        %412 = vrot.lane.b32.xlu0 %v405, 56
        %v413 = vpop.permute.xlu0 %412
        %vm414 = vcmask 457728
        %v415 = vsel %vm414, %v407, %v409
        %v416 = vsel %vm414, %v409, %v411
        %v417 = vsel %vm414, %v411, %v413
        %v423 = vmul.f32 %v382, %v407
        %v424 = vmul.f32 %v383, %v415
        %v425 = vmul.f32 %v384, %v416
        %v426 = vmul.f32 %v385, %v417
        %v427 = vmul.f32 %v386, %v413
        %433 = vrot.lane.b32.xlu0 %v423, 72
        %v434 = vpop.permute.xlu0 %433
        %435 = vrot.lane.b32.xlu0 %v424, 72
        %v436 = vpop.permute.xlu0 %435
        %437 = vrot.lane.b32.xlu0 %v425, 72
        %v438 = vpop.permute.xlu0 %437
        %439 = vrot.lane.b32.xlu0 %v426, 72
        %v440 = vpop.permute.xlu0 %439
        %441 = vrot.lane.b32.xlu0 %v427, 72
        %v442 = vpop.permute.xlu0 %441
        %vm443 = vcmask 588800
        %v444 = vsel %vm443, %v434, %v436
        %v445 = vsel %vm443, %v436, %v438
        %v446 = vsel %vm443, %v438, %v440
        %v447 = vsel %vm443, %v440, %v442
        %452 = vst [vmem:[#allocation3 + $0x20] sm:$0xff] %v444
        %453 = vst [vmem:[#allocation3 + $0x28] sm:$0xff] %v445
        %454 = vst [vmem:[#allocation3 + $0x30] sm:$0xff] %v446
        %455 = vst [vmem:[#allocation3 + $0x38] sm:$0xff] %v447
        %v456 = vld [vmem:[#allocation2] sm:$0xff]
        %v457 = vld [vmem:[#allocation2 + $0x8] sm:$0xff]
        %v458 = vld [vmem:[#allocation2 + $0x10] sm:$0xff]
        %v459 = vld [vmem:[#allocation2 + $0x18] sm:$0xff]
        %v460 = vld [vmem:[#allocation2 + $0x20] sm:$0xff]
        %s461 = scalar_lea.vmem [#allocation9], 8
        %v462 = vld [vmem:[%s461] sm:$0xf]
        %v464 = vlaneseq
        %v465 = vshrl.u32 %v464, 7
        %v466 = vsub.s32 0, %v465
        %v467 = vrot.slane %v462, %v466
        %v468 = vlaneseq
        %v469 = vshrl.u32 %v468, 7
        %v470 = vsub.s32 1, %v469
        %v471 = vrot.slane %v462, %v470
        %v472 = vlaneseq
        %v473 = vshrl.u32 %v472, 7
        %v474 = vsub.s32 2, %v473
        %v475 = vrot.slane %v462, %v474
        %v476 = vlaneseq
        %v477 = vshrl.u32 %v476, 7
        %v478 = vsub.s32 3, %v477
        %v479 = vrot.slane %v462, %v478
        %480 = vrot.lane.b32.xlu0 %v467, 57
        %v481 = vpop.permute.xlu0 %480
        %482 = vrot.lane.b32.xlu0 %v471, 57
        %v483 = vpop.permute.xlu0 %482
        %484 = vrot.lane.b32.xlu0 %v475, 57
        %v485 = vpop.permute.xlu0 %484
        %486 = vrot.lane.b32.xlu0 %v479, 57
        %v487 = vpop.permute.xlu0 %486
        %vm488 = vcmask 465920
        %v489 = vsel %vm488, %v481, %v483
        %v490 = vsel %vm488, %v483, %v485
        %v491 = vsel %vm488, %v485, %v487
        %v497 = vmul.f32 %v456, %v481
        %v498 = vmul.f32 %v457, %v489
        %v499 = vmul.f32 %v458, %v490
        %v500 = vmul.f32 %v459, %v491
        %v501 = vmul.f32 %v460, %v487
        %507 = vrot.lane.b32.xlu0 %v497, 71
        %v508 = vpop.permute.xlu0 %507
        %509 = vrot.lane.b32.xlu0 %v498, 71
        %v510 = vpop.permute.xlu0 %509
        %511 = vrot.lane.b32.xlu0 %v499, 71
        %v512 = vpop.permute.xlu0 %511
        %513 = vrot.lane.b32.xlu0 %v500, 71
        %v514 = vpop.permute.xlu0 %513
        %515 = vrot.lane.b32.xlu0 %v501, 71
        %v516 = vpop.permute.xlu0 %515
        %vm517 = vcmask 580608
        %v518 = vsel %vm517, %v508, %v510
        %v519 = vsel %vm517, %v510, %v512
        %v520 = vsel %vm517, %v512, %v514
        %v521 = vsel %vm517, %v514, %v516
        %526 = vst [vmem:[#allocation3 + $0x40] sm:$0xff] %v518
        %527 = vst [vmem:[#allocation3 + $0x48] sm:$0xff] %v519
        %528 = vst [vmem:[#allocation3 + $0x50] sm:$0xff] %v520
        %529 = vst [vmem:[#allocation3 + $0x58] sm:$0xff] %v521
        %v530 = vld [vmem:[#allocation2] sm:$0xff]
        %v531 = vld [vmem:[#allocation2 + $0x8] sm:$0xff]
        %v532 = vld [vmem:[#allocation2 + $0x10] sm:$0xff]
        %v533 = vld [vmem:[#allocation2 + $0x18] sm:$0xff]
        %v534 = vld [vmem:[#allocation2 + $0x20] sm:$0xff]
        %s535 = scalar_lea.vmem [#allocation9], 12
        %v536 = vld [vmem:[%s535] sm:$0xf]
        %v538 = vlaneseq
        %v539 = vshrl.u32 %v538, 7
        %v540 = vsub.s32 0, %v539
        %v541 = vrot.slane %v536, %v540
        %v542 = vlaneseq
        %v543 = vshrl.u32 %v542, 7
        %v544 = vsub.s32 1, %v543
        %v545 = vrot.slane %v536, %v544
        %v546 = vlaneseq
        %v547 = vshrl.u32 %v546, 7
        %v548 = vsub.s32 2, %v547
        %v549 = vrot.slane %v536, %v548
        %v550 = vlaneseq
        %v551 = vshrl.u32 %v550, 7
        %v552 = vsub.s32 3, %v551
        %v553 = vrot.slane %v536, %v552
        %554 = vrot.lane.b32.xlu0 %v541, 63
        %v555 = vpop.permute.xlu0 %554
        %556 = vrot.lane.b32.xlu0 %v545, 63
        %v557 = vpop.permute.xlu0 %556
        %558 = vrot.lane.b32.xlu0 %v549, 63
        %v559 = vpop.permute.xlu0 %558
        %560 = vrot.lane.b32.xlu0 %v553, 63
        %v561 = vpop.permute.xlu0 %560
        %vm562 = vcmask 515072
        %v563 = vsel %vm562, %v555, %v557
        %v564 = vsel %vm562, %v557, %v559
        %v565 = vsel %vm562, %v559, %v561
        %v571 = vmul.f32 %v530, %v555
        %v572 = vmul.f32 %v531, %v563
        %v573 = vmul.f32 %v532, %v564
        %v574 = vmul.f32 %v533, %v565
        %v575 = vmul.f32 %v534, %v561
        %581 = vrot.lane.b32.xlu0 %v571, 65
        %v582 = vpop.permute.xlu0 %581
        %583 = vrot.lane.b32.xlu0 %v572, 65
        %v584 = vpop.permute.xlu0 %583
        %585 = vrot.lane.b32.xlu0 %v573, 65
        %v586 = vpop.permute.xlu0 %585
        %587 = vrot.lane.b32.xlu0 %v574, 65
        %v588 = vpop.permute.xlu0 %587
        %589 = vrot.lane.b32.xlu0 %v575, 65
        %v590 = vpop.permute.xlu0 %589
        %vm591 = vcmask 531456
        %v592 = vsel %vm591, %v582, %v584
        %v593 = vsel %vm591, %v584, %v586
        %v594 = vsel %vm591, %v586, %v588
        %v595 = vsel %vm591, %v588, %v590
        %600 = vst [vmem:[#allocation3 + $0x60] sm:$0xff] %v592
        %601 = vst [vmem:[#allocation3 + $0x68] sm:$0xff] %v593
        %602 = vst [vmem:[#allocation3 + $0x70] sm:$0xff] %v594
        %603 = vst [vmem:[#allocation3 + $0x78] sm:$0xff] %v595
        %v604 = vld [vmem:[#allocation2] sm:$0xff]
        %v605 = vld [vmem:[#allocation2 + $0x8] sm:$0xff]
        %v606 = vld [vmem:[#allocation2 + $0x10] sm:$0xff]
        %v607 = vld [vmem:[#allocation2 + $0x18] sm:$0xff]
        %v608 = vld [vmem:[#allocation2 + $0x20] sm:$0xff]
        %s609 = scalar_lea.vmem [#allocation9], 16
        %v610 = vld [vmem:[%s609] sm:$0xf]
        %v612 = vlaneseq
        %v613 = vshrl.u32 %v612, 7
        %v614 = vsub.s32 0, %v613
        %v615 = vrot.slane %v610, %v614
        %v616 = vlaneseq
        %v617 = vshrl.u32 %v616, 7
        %v618 = vsub.s32 1, %v617
        %v619 = vrot.slane %v610, %v618
        %v620 = vlaneseq
        %v621 = vshrl.u32 %v620, 7
        %v622 = vsub.s32 2, %v621
        %v623 = vrot.slane %v610, %v622
        %v624 = vlaneseq
        %v625 = vshrl.u32 %v624, 7
        %v626 = vsub.s32 3, %v625
        %v627 = vrot.slane %v610, %v626
        %628 = vrot.lane.b32.xlu0 %v615, 64
        %v629 = vpop.permute.xlu0 %628
        %630 = vrot.lane.b32.xlu0 %v619, 64
        %v631 = vpop.permute.xlu0 %630
        %632 = vrot.lane.b32.xlu0 %v623, 64
        %v633 = vpop.permute.xlu0 %632
        %634 = vrot.lane.b32.xlu0 %v627, 64
        %v635 = vpop.permute.xlu0 %634
        %vm636 = vcmask 523264
        %v637 = vsel %vm636, %v629, %v631
        %v638 = vsel %vm636, %v631, %v633
        %v639 = vsel %vm636, %v633, %v635
        %v645 = vmul.f32 %v604, %v629
        %v646 = vmul.f32 %v605, %v637
        %v647 = vmul.f32 %v606, %v638
        %v648 = vmul.f32 %v607, %v639
        %v649 = vmul.f32 %v608, %v635
        %655 = vrot.lane.b32.xlu0 %v645, 64
        %v656 = vpop.permute.xlu0 %655
        %657 = vrot.lane.b32.xlu0 %v646, 64
        %v658 = vpop.permute.xlu0 %657
        %659 = vrot.lane.b32.xlu0 %v647, 64
        %v660 = vpop.permute.xlu0 %659
        %661 = vrot.lane.b32.xlu0 %v648, 64
        %v662 = vpop.permute.xlu0 %661
        %663 = vrot.lane.b32.xlu0 %v649, 64
        %v664 = vpop.permute.xlu0 %663
        %v665 = vsel %vm636, %v656, %v658
        %v666 = vsel %vm636, %v658, %v660
        %v667 = vsel %vm636, %v660, %v662
        %v668 = vsel %vm636, %v662, %v664
        %673 = vst [vmem:[#allocation3 + $0x80] sm:$0xff] %v665
        %674 = vst [vmem:[#allocation3 + $0x88] sm:$0xff] %v666
        %675 = vst [vmem:[#allocation3 + $0x90] sm:$0xff] %v667
        %676 = vst [vmem:[#allocation3 + $0x98] sm:$0xff] %v668
        %v677 = vld [vmem:[#allocation2] sm:$0xff]
        %v678 = vld [vmem:[#allocation2 + $0x8] sm:$0xff]
        %v679 = vld [vmem:[#allocation2 + $0x10] sm:$0xff]
        %v680 = vld [vmem:[#allocation2 + $0x18] sm:$0xff]
        %v681 = vld [vmem:[#allocation2 + $0x20] sm:$0xff]
        %s682 = scalar_lea.vmem [#allocation9], 20
        %v683 = vld [vmem:[%s682] sm:$0xf]
        %v685 = vlaneseq
        %v686 = vshrl.u32 %v685, 7
        %v687 = vsub.s32 0, %v686
        %v688 = vrot.slane %v683, %v687
        %v689 = vlaneseq
        %v690 = vshrl.u32 %v689, 7
        %v691 = vsub.s32 1, %v690
        %v692 = vrot.slane %v683, %v691
        %v693 = vlaneseq
        %v694 = vshrl.u32 %v693, 7
        %v695 = vsub.s32 2, %v694
        %v696 = vrot.slane %v683, %v695
        %v697 = vlaneseq
        %v698 = vshrl.u32 %v697, 7
        %v699 = vsub.s32 3, %v698
        %v700 = vrot.slane %v683, %v699
        %701 = vrot.lane.b32.xlu0 %v688, 65
        %v702 = vpop.permute.xlu0 %701
        %703 = vrot.lane.b32.xlu0 %v692, 65
        %v704 = vpop.permute.xlu0 %703
        %705 = vrot.lane.b32.xlu0 %v696, 65
        %v706 = vpop.permute.xlu0 %705
        %707 = vrot.lane.b32.xlu0 %v700, 65
        %v708 = vpop.permute.xlu0 %707
        %v709 = vsel %vm591, %v702, %v704
        %v710 = vsel %vm591, %v704, %v706
        %v711 = vsel %vm591, %v706, %v708
        %v717 = vmul.f32 %v677, %v702
        %v718 = vmul.f32 %v678, %v709
        %v719 = vmul.f32 %v679, %v710
        %v720 = vmul.f32 %v680, %v711
        %v721 = vmul.f32 %v681, %v708
        %727 = vrot.lane.b32.xlu0 %v717, 63
        %v728 = vpop.permute.xlu0 %727
        %729 = vrot.lane.b32.xlu0 %v718, 63
        %v730 = vpop.permute.xlu0 %729
        %731 = vrot.lane.b32.xlu0 %v719, 63
        %v732 = vpop.permute.xlu0 %731
        %733 = vrot.lane.b32.xlu0 %v720, 63
        %v734 = vpop.permute.xlu0 %733
        %735 = vrot.lane.b32.xlu0 %v721, 63
        %v736 = vpop.permute.xlu0 %735
        %v737 = vsel %vm562, %v728, %v730
        %v738 = vsel %vm562, %v730, %v732
        %v739 = vsel %vm562, %v732, %v734
        %v740 = vsel %vm562, %v734, %v736
        %745 = vst [vmem:[#allocation3 + $0xa0] sm:$0xff] %v737
        %746 = vst [vmem:[#allocation3 + $0xa8] sm:$0xff] %v738
        %747 = vst [vmem:[#allocation3 + $0xb0] sm:$0xff] %v739
        %748 = vst [vmem:[#allocation3 + $0xb8] sm:$0xff] %v740
        %v749 = vld [vmem:[#allocation2] sm:$0xff]
        %v750 = vld [vmem:[#allocation2 + $0x8] sm:$0xff]
        %v751 = vld [vmem:[#allocation2 + $0x10] sm:$0xff]
        %v752 = vld [vmem:[#allocation2 + $0x18] sm:$0xff]
        %v753 = vld [vmem:[#allocation2 + $0x20] sm:$0xff]
        %s754 = scalar_lea.vmem [#allocation9], 24
        %v755 = vld [vmem:[%s754] sm:$0xf]
        %v757 = vlaneseq
        %v758 = vshrl.u32 %v757, 7
        %v759 = vsub.s32 0, %v758
        %v760 = vrot.slane %v755, %v759
        %v761 = vlaneseq
        %v762 = vshrl.u32 %v761, 7
        %v763 = vsub.s32 1, %v762
        %v764 = vrot.slane %v755, %v763
        %v765 = vlaneseq
        %v766 = vshrl.u32 %v765, 7
        %v767 = vsub.s32 2, %v766
        %v768 = vrot.slane %v755, %v767
        %v769 = vlaneseq
        %v770 = vshrl.u32 %v769, 7
        %v771 = vsub.s32 3, %v770
        %v772 = vrot.slane %v755, %v771
        %773 = vrot.lane.b32.xlu0 %v760, 71
        %v774 = vpop.permute.xlu0 %773
        %775 = vrot.lane.b32.xlu0 %v764, 71
        %v776 = vpop.permute.xlu0 %775
        %777 = vrot.lane.b32.xlu0 %v768, 71
        %v778 = vpop.permute.xlu0 %777
        %779 = vrot.lane.b32.xlu0 %v772, 71
        %v780 = vpop.permute.xlu0 %779
        %v781 = vsel %vm517, %v774, %v776
        %v782 = vsel %vm517, %v776, %v778
        %v783 = vsel %vm517, %v778, %v780
        %v789 = vmul.f32 %v749, %v774
        %v790 = vmul.f32 %v750, %v781
        %v791 = vmul.f32 %v751, %v782
        %v792 = vmul.f32 %v752, %v783
        %v793 = vmul.f32 %v753, %v780
        %799 = vrot.lane.b32.xlu0 %v789, 57
        %v800 = vpop.permute.xlu0 %799
        %801 = vrot.lane.b32.xlu0 %v790, 57
        %v802 = vpop.permute.xlu0 %801
        %803 = vrot.lane.b32.xlu0 %v791, 57
        %v804 = vpop.permute.xlu0 %803
        %805 = vrot.lane.b32.xlu0 %v792, 57
        %v806 = vpop.permute.xlu0 %805
        %807 = vrot.lane.b32.xlu0 %v793, 57
        %v808 = vpop.permute.xlu0 %807
        %v809 = vsel %vm488, %v800, %v802
        %v810 = vsel %vm488, %v802, %v804
        %v811 = vsel %vm488, %v804, %v806
        %v812 = vsel %vm488, %v806, %v808
        %817 = vst [vmem:[#allocation3 + $0xc0] sm:$0xff] %v809
        %818 = vst [vmem:[#allocation3 + $0xc8] sm:$0xff] %v810
        %819 = vst [vmem:[#allocation3 + $0xd0] sm:$0xff] %v811
        %820 = vst [vmem:[#allocation3 + $0xd8] sm:$0xff] %v812
        %v821 = vld [vmem:[#allocation2] sm:$0xff]
        %v822 = vld [vmem:[#allocation2 + $0x8] sm:$0xff]
        %v823 = vld [vmem:[#allocation2 + $0x10] sm:$0xff]
        %v824 = vld [vmem:[#allocation2 + $0x18] sm:$0xff]
        %v825 = vld [vmem:[#allocation2 + $0x20] sm:$0xff]
        %s826 = scalar_lea.vmem [#allocation9], 28
        %v827 = vld [vmem:[%s826] sm:$0xf]
        %v829 = vlaneseq
        %v830 = vshrl.u32 %v829, 7
        %v831 = vsub.s32 0, %v830
        %v832 = vrot.slane %v827, %v831
        %v833 = vlaneseq
        %v834 = vshrl.u32 %v833, 7
        %v835 = vsub.s32 1, %v834
        %v836 = vrot.slane %v827, %v835
        %v837 = vlaneseq
        %v838 = vshrl.u32 %v837, 7
        %v839 = vsub.s32 2, %v838
        %v840 = vrot.slane %v827, %v839
        %v841 = vlaneseq
        %v842 = vshrl.u32 %v841, 7
        %v843 = vsub.s32 3, %v842
        %v844 = vrot.slane %v827, %v843
        %845 = vrot.lane.b32.xlu0 %v832, 72
        %v846 = vpop.permute.xlu0 %845
        %847 = vrot.lane.b32.xlu0 %v836, 72
        %v848 = vpop.permute.xlu0 %847
        %849 = vrot.lane.b32.xlu0 %v840, 72
        %v850 = vpop.permute.xlu0 %849
        %851 = vrot.lane.b32.xlu0 %v844, 72
        %v852 = vpop.permute.xlu0 %851
        %v853 = vsel %vm443, %v846, %v848
        %v854 = vsel %vm443, %v848, %v850
        %v855 = vsel %vm443, %v850, %v852
        %v861 = vmul.f32 %v821, %v846
        %v862 = vmul.f32 %v822, %v853
        %v863 = vmul.f32 %v823, %v854
        %v864 = vmul.f32 %v824, %v855
        %v865 = vmul.f32 %v825, %v852
        %871 = vrot.lane.b32.xlu0 %v861, 56
        %v872 = vpop.permute.xlu0 %871
        %873 = vrot.lane.b32.xlu0 %v862, 56
        %v874 = vpop.permute.xlu0 %873
        %875 = vrot.lane.b32.xlu0 %v863, 56
        %v876 = vpop.permute.xlu0 %875
        %877 = vrot.lane.b32.xlu0 %v864, 56
        %v878 = vpop.permute.xlu0 %877
        %879 = vrot.lane.b32.xlu0 %v865, 56
        %v880 = vpop.permute.xlu0 %879
        %v881 = vsel %vm414, %v872, %v874
        %v882 = vsel %vm414, %v874, %v876
        %v883 = vsel %vm414, %v876, %v878
        %v884 = vsel %vm414, %v878, %v880
        %889 = vst [vmem:[#allocation3 + $0xe0] sm:$0xff] %v881
        %890 = vst [vmem:[#allocation3 + $0xe8] sm:$0xff] %v882
        %891 = vst [vmem:[#allocation3 + $0xf0] sm:$0xff] %v883
        %892 = vst [vmem:[#allocation3 + $0xf8] sm:$0xff] %v884
        %v893 = vld [vmem:[#allocation2] sm:$0xff]
        %v894 = vld [vmem:[#allocation2 + $0x8] sm:$0xff]
        %v895 = vld [vmem:[#allocation2 + $0x10] sm:$0xff]
        %v896 = vld [vmem:[#allocation2 + $0x18] sm:$0xff]
        %v897 = vld [vmem:[#allocation2 + $0x20] sm:$0xff]
        %s898 = scalar_lea.vmem [#allocation9], 32
        %v899 = vld [vmem:[%s898] sm:$0xf]
        %v901 = vlaneseq
        %v902 = vshrl.u32 %v901, 7
        %v903 = vsub.s32 0, %v902
        %v904 = vrot.slane %v899, %v903
        %v905 = vlaneseq
        %v906 = vshrl.u32 %v905, 7
        %v907 = vsub.s32 1, %v906
        %v908 = vrot.slane %v899, %v907
        %v909 = vlaneseq
        %v910 = vshrl.u32 %v909, 7
        %v911 = vsub.s32 2, %v910
        %v912 = vrot.slane %v899, %v911
        %v913 = vlaneseq
        %v914 = vshrl.u32 %v913, 7
        %v915 = vsub.s32 3, %v914
        %v916 = vrot.slane %v899, %v915
        %917 = vrot.lane.b32.xlu0 %v904, 73
        %v918 = vpop.permute.xlu0 %917
        %919 = vrot.lane.b32.xlu0 %v908, 73
        %v920 = vpop.permute.xlu0 %919
        %921 = vrot.lane.b32.xlu0 %v912, 73
        %v922 = vpop.permute.xlu0 %921
        %923 = vrot.lane.b32.xlu0 %v916, 73
        %v924 = vpop.permute.xlu0 %923
        %v925 = vsel %vm369, %v918, %v920
        %v926 = vsel %vm369, %v920, %v922
        %v927 = vsel %vm369, %v922, %v924
        %v933 = vmul.f32 %v893, %v918
        %v934 = vmul.f32 %v894, %v925
        %v935 = vmul.f32 %v895, %v926
        %v936 = vmul.f32 %v896, %v927
        %v937 = vmul.f32 %v897, %v924
        %943 = vrot.lane.b32.xlu0 %v933, 55
        %v944 = vpop.permute.xlu0 %943
        %945 = vrot.lane.b32.xlu0 %v934, 55
        %v946 = vpop.permute.xlu0 %945
        %947 = vrot.lane.b32.xlu0 %v935, 55
        %v948 = vpop.permute.xlu0 %947
        %949 = vrot.lane.b32.xlu0 %v936, 55
        %v950 = vpop.permute.xlu0 %949
        %951 = vrot.lane.b32.xlu0 %v937, 55
        %v952 = vpop.permute.xlu0 %951
        %v953 = vsel %vm340, %v944, %v946
        %v954 = vsel %vm340, %v946, %v948
        %v955 = vsel %vm340, %v948, %v950
        %v956 = vsel %vm340, %v950, %v952
        %961 = vst [vmem:[#allocation3 + $0x100] sm:$0xff] %v953
        %962 = vst [vmem:[#allocation3 + $0x108] sm:$0xff] %v954
        %963 = vst [vmem:[#allocation3 + $0x110] sm:$0xff] %v955
        %964 = vst [vmem:[#allocation3 + $0x118] sm:$0xff] %v956
        %v965 = vld [vmem:[#allocation2] sm:$0xff]
        %v966 = vld [vmem:[#allocation2 + $0x8] sm:$0xff]
        %v967 = vld [vmem:[#allocation2 + $0x10] sm:$0xff]
        %v968 = vld [vmem:[#allocation2 + $0x18] sm:$0xff]
        %v969 = vld [vmem:[#allocation2 + $0x20] sm:$0xff]
        %s970 = scalar_lea.vmem [#allocation9], 36
        %v971 = vld [vmem:[%s970] sm:$0xf]
        %v973 = vlaneseq
        %v974 = vshrl.u32 %v973, 7
        %v975 = vsub.s32 0, %v974
        %v976 = vrot.slane %v971, %v975
        %v977 = vlaneseq
        %v978 = vshrl.u32 %v977, 7
        %v979 = vsub.s32 1, %v978
        %v980 = vrot.slane %v971, %v979
        %v981 = vlaneseq
        %v982 = vshrl.u32 %v981, 7
        %v983 = vsub.s32 2, %v982
        %v984 = vrot.slane %v971, %v983
        %v985 = vlaneseq
        %v986 = vshrl.u32 %v985, 7
        %v987 = vsub.s32 3, %v986
        %v988 = vrot.slane %v971, %v987
        %989 = vrot.lane.b32.xlu0 %v976, 119
        %v990 = vpop.permute.xlu0 %989
        %991 = vrot.lane.b32.xlu0 %v980, 119
        %v992 = vpop.permute.xlu0 %991
        %993 = vrot.lane.b32.xlu0 %v984, 119
        %v994 = vpop.permute.xlu0 %993
        %995 = vrot.lane.b32.xlu0 %v988, 119
        %v996 = vpop.permute.xlu0 %995
        %vm997 = vcmask 973824
        %v998 = vsel %vm997, %v990, %v992
        %v999 = vsel %vm997, %v992, %v994
        %v1000 = vsel %vm997, %v994, %v996
        %v1006 = vmul.f32 %v965, %v990
        %v1007 = vmul.f32 %v966, %v998
        %v1008 = vmul.f32 %v967, %v999
        %v1009 = vmul.f32 %v968, %v1000
        %v1010 = vmul.f32 %v969, %v996
        %1016 = vrot.lane.b32.xlu0 %v1006, 9
        %v1017 = vpop.permute.xlu0 %1016
        %1018 = vrot.lane.b32.xlu0 %v1007, 9
        %v1019 = vpop.permute.xlu0 %1018
        %1020 = vrot.lane.b32.xlu0 %v1008, 9
        %v1021 = vpop.permute.xlu0 %1020
        %1022 = vrot.lane.b32.xlu0 %v1009, 9
        %v1023 = vpop.permute.xlu0 %1022
        %1024 = vrot.lane.b32.xlu0 %v1010, 9
        %v1025 = vpop.permute.xlu0 %1024
        %vm1026 = vcmask 72704
        %v1027 = vsel %vm1026, %v1017, %v1019
        %v1028 = vsel %vm1026, %v1019, %v1021
        %v1029 = vsel %vm1026, %v1021, %v1023
        %v1030 = vsel %vm1026, %v1023, %v1025
        %1035 = vst [vmem:[#allocation3 + $0x120] sm:$0xff] %v1027
        %1036 = vst [vmem:[#allocation3 + $0x128] sm:$0xff] %v1028
        %1037 = vst [vmem:[#allocation3 + $0x130] sm:$0xff] %v1029
        %1038 = vst [vmem:[#allocation3 + $0x138] sm:$0xff] %v1030
        %v1039 = vld [vmem:[#allocation2] sm:$0xff]
        %v1040 = vld [vmem:[#allocation2 + $0x8] sm:$0xff]
        %v1041 = vld [vmem:[#allocation2 + $0x10] sm:$0xff]
        %v1042 = vld [vmem:[#allocation2 + $0x18] sm:$0xff]
        %v1043 = vld [vmem:[#allocation2 + $0x20] sm:$0xff]
        %s1044 = scalar_lea.vmem [#allocation9], 40
        %v1045 = vld [vmem:[%s1044] sm:$0xf]
        %v1047 = vlaneseq
        %v1048 = vshrl.u32 %v1047, 7
        %v1049 = vsub.s32 0, %v1048
        %v1050 = vrot.slane %v1045, %v1049
        %v1051 = vlaneseq
        %v1052 = vshrl.u32 %v1051, 7
        %v1053 = vsub.s32 1, %v1052
        %v1054 = vrot.slane %v1045, %v1053
        %v1055 = vlaneseq
        %v1056 = vshrl.u32 %v1055, 7
        %v1057 = vsub.s32 2, %v1056
        %v1058 = vrot.slane %v1045, %v1057
        %v1059 = vlaneseq
        %v1060 = vshrl.u32 %v1059, 7
        %v1061 = vsub.s32 3, %v1060
        %v1062 = vrot.slane %v1045, %v1061
        %1063 = vrot.lane.b32.xlu0 %v1050, 120
        %v1064 = vpop.permute.xlu0 %1063
        %1065 = vrot.lane.b32.xlu0 %v1054, 120
        %v1066 = vpop.permute.xlu0 %1065
        %1067 = vrot.lane.b32.xlu0 %v1058, 120
        %v1068 = vpop.permute.xlu0 %1067
        %1069 = vrot.lane.b32.xlu0 %v1062, 120
        %v1070 = vpop.permute.xlu0 %1069
        %vm1071 = vcmask 982016
        %v1072 = vsel %vm1071, %v1064, %v1066
        %v1073 = vsel %vm1071, %v1066, %v1068
        %v1074 = vsel %vm1071, %v1068, %v1070
        %v1080 = vmul.f32 %v1039, %v1064
        %v1081 = vmul.f32 %v1040, %v1072
        %v1082 = vmul.f32 %v1041, %v1073
        %v1083 = vmul.f32 %v1042, %v1074
        %v1084 = vmul.f32 %v1043, %v1070
        %1090 = vrot.lane.b32.xlu0 %v1080, 8
        %v1091 = vpop.permute.xlu0 %1090
        %1092 = vrot.lane.b32.xlu0 %v1081, 8
        %v1093 = vpop.permute.xlu0 %1092
        %1094 = vrot.lane.b32.xlu0 %v1082, 8
        %v1095 = vpop.permute.xlu0 %1094
        %1096 = vrot.lane.b32.xlu0 %v1083, 8
        %v1097 = vpop.permute.xlu0 %1096
        %1098 = vrot.lane.b32.xlu0 %v1084, 8
        %v1099 = vpop.permute.xlu0 %1098
        %vm1100 = vcmask 64512
        %v1101 = vsel %vm1100, %v1091, %v1093
        %v1102 = vsel %vm1100, %v1093, %v1095
        %v1103 = vsel %vm1100, %v1095, %v1097
        %v1104 = vsel %vm1100, %v1097, %v1099
        %1109 = vst [vmem:[#allocation3 + $0x140] sm:$0xff] %v1101
        %1110 = vst [vmem:[#allocation3 + $0x148] sm:$0xff] %v1102
        %1111 = vst [vmem:[#allocation3 + $0x150] sm:$0xff] %v1103
        %1112 = vst [vmem:[#allocation3 + $0x158] sm:$0xff] %v1104
        %v1113 = vld [vmem:[#allocation2] sm:$0xff]
        %v1114 = vld [vmem:[#allocation2 + $0x8] sm:$0xff]
        %v1115 = vld [vmem:[#allocation2 + $0x10] sm:$0xff]
        %v1116 = vld [vmem:[#allocation2 + $0x18] sm:$0xff]
        %v1117 = vld [vmem:[#allocation2 + $0x20] sm:$0xff]
        %s1118 = scalar_lea.vmem [#allocation9], 44
        %v1119 = vld [vmem:[%s1118] sm:$0xf]
        %v1121 = vlaneseq
        %v1122 = vshrl.u32 %v1121, 7
        %v1123 = vsub.s32 0, %v1122
        %v1124 = vrot.slane %v1119, %v1123
        %v1125 = vlaneseq
        %v1126 = vshrl.u32 %v1125, 7
        %v1127 = vsub.s32 1, %v1126
        %v1128 = vrot.slane %v1119, %v1127
        %v1129 = vlaneseq
        %v1130 = vshrl.u32 %v1129, 7
        %v1131 = vsub.s32 2, %v1130
        %v1132 = vrot.slane %v1119, %v1131
        %v1133 = vlaneseq
        %v1134 = vshrl.u32 %v1133, 7
        %v1135 = vsub.s32 3, %v1134
        %v1136 = vrot.slane %v1119, %v1135
        %1137 = vrot.lane.b32.xlu0 %v1124, 121
        %v1138 = vpop.permute.xlu0 %1137
        %1139 = vrot.lane.b32.xlu0 %v1128, 121
        %v1140 = vpop.permute.xlu0 %1139
        %1141 = vrot.lane.b32.xlu0 %v1132, 121
        %v1142 = vpop.permute.xlu0 %1141
        %1143 = vrot.lane.b32.xlu0 %v1136, 121
        %v1144 = vpop.permute.xlu0 %1143
        %vm1145 = vcmask 990208
        %v1146 = vsel %vm1145, %v1138, %v1140
        %v1147 = vsel %vm1145, %v1140, %v1142
        %v1148 = vsel %vm1145, %v1142, %v1144
        %v1154 = vmul.f32 %v1113, %v1138
        %v1155 = vmul.f32 %v1114, %v1146
        %v1156 = vmul.f32 %v1115, %v1147
        %v1157 = vmul.f32 %v1116, %v1148
        %v1158 = vmul.f32 %v1117, %v1144
        %1164 = vrot.lane.b32.xlu0 %v1154, 7
        %v1165 = vpop.permute.xlu0 %1164
        %1166 = vrot.lane.b32.xlu0 %v1155, 7
        %v1167 = vpop.permute.xlu0 %1166
        %1168 = vrot.lane.b32.xlu0 %v1156, 7
        %v1169 = vpop.permute.xlu0 %1168
        %1170 = vrot.lane.b32.xlu0 %v1157, 7
        %v1171 = vpop.permute.xlu0 %1170
        %1172 = vrot.lane.b32.xlu0 %v1158, 7
        %v1173 = vpop.permute.xlu0 %1172
        %vm1174 = vcmask 56320
        %v1175 = vsel %vm1174, %v1165, %v1167
        %v1176 = vsel %vm1174, %v1167, %v1169
        %v1177 = vsel %vm1174, %v1169, %v1171
        %v1178 = vsel %vm1174, %v1171, %v1173
        %1183 = vst [vmem:[#allocation3 + $0x160] sm:$0xff] %v1175
        %1184 = vst [vmem:[#allocation3 + $0x168] sm:$0xff] %v1176
        %1185 = vst [vmem:[#allocation3 + $0x170] sm:$0xff] %v1177
        %1186 = vst [vmem:[#allocation3 + $0x178] sm:$0xff] %v1178
        %v1187 = vld [vmem:[#allocation2] sm:$0xff]
        %v1188 = vld [vmem:[#allocation2 + $0x8] sm:$0xff]
        %v1189 = vld [vmem:[#allocation2 + $0x10] sm:$0xff]
        %v1190 = vld [vmem:[#allocation2 + $0x18] sm:$0xff]
        %v1191 = vld [vmem:[#allocation2 + $0x20] sm:$0xff]
        %s1192 = scalar_lea.vmem [#allocation9], 48
        %v1193 = vld [vmem:[%s1192] sm:$0xf]
        %v1195 = vlaneseq
        %v1196 = vshrl.u32 %v1195, 7
        %v1197 = vsub.s32 0, %v1196
        %v1198 = vrot.slane %v1193, %v1197
        %v1199 = vlaneseq
        %v1200 = vshrl.u32 %v1199, 7
        %v1201 = vsub.s32 1, %v1200
        %v1202 = vrot.slane %v1193, %v1201
        %v1203 = vlaneseq
        %v1204 = vshrl.u32 %v1203, 7
        %v1205 = vsub.s32 2, %v1204
        %v1206 = vrot.slane %v1193, %v1205
        %v1207 = vlaneseq
        %v1208 = vshrl.u32 %v1207, 7
        %v1209 = vsub.s32 3, %v1208
        %v1210 = vrot.slane %v1193, %v1209
        %1211 = vrot.lane.b32.xlu0 %v1198, 127
        %v1212 = vpop.permute.xlu0 %1211
        %1213 = vrot.lane.b32.xlu0 %v1202, 127
        %v1214 = vpop.permute.xlu0 %1213
        %1215 = vrot.lane.b32.xlu0 %v1206, 127
        %v1216 = vpop.permute.xlu0 %1215
        %1217 = vrot.lane.b32.xlu0 %v1210, 127
        %v1218 = vpop.permute.xlu0 %1217
        %vm1219 = vcmask 1039360
        %v1220 = vsel %vm1219, %v1212, %v1214
        %v1221 = vsel %vm1219, %v1214, %v1216
        %v1222 = vsel %vm1219, %v1216, %v1218
        %v1228 = vmul.f32 %v1187, %v1212
        %v1229 = vmul.f32 %v1188, %v1220
        %v1230 = vmul.f32 %v1189, %v1221
        %v1231 = vmul.f32 %v1190, %v1222
        %v1232 = vmul.f32 %v1191, %v1218
        %1238 = vrot.lane.b32.xlu0 %v1228, 1
        %v1239 = vpop.permute.xlu0 %1238
        %1240 = vrot.lane.b32.xlu0 %v1229, 1
        %v1241 = vpop.permute.xlu0 %1240
        %1242 = vrot.lane.b32.xlu0 %v1230, 1
        %v1243 = vpop.permute.xlu0 %1242
        %1244 = vrot.lane.b32.xlu0 %v1231, 1
        %v1245 = vpop.permute.xlu0 %1244
        %1246 = vrot.lane.b32.xlu0 %v1232, 1
        %v1247 = vpop.permute.xlu0 %1246
        %vm1248 = vcmask 7168
        %v1249 = vsel %vm1248, %v1239, %v1241
        %v1250 = vsel %vm1248, %v1241, %v1243
        %v1251 = vsel %vm1248, %v1243, %v1245
        %v1252 = vsel %vm1248, %v1245, %v1247
        %1257 = vst [vmem:[#allocation3 + $0x180] sm:$0xff] %v1249
        %1258 = vst [vmem:[#allocation3 + $0x188] sm:$0xff] %v1250
        %1259 = vst [vmem:[#allocation3 + $0x190] sm:$0xff] %v1251
        %1260 = vst [vmem:[#allocation3 + $0x198] sm:$0xff] %v1252
        %v1261 = vld [vmem:[#allocation2 + $0x8] sm:$0xff]
        %v1262 = vld [vmem:[#allocation2 + $0x10] sm:$0xff]
        %v1263 = vld [vmem:[#allocation2 + $0x18] sm:$0xff]
        %v1264 = vld [vmem:[#allocation2 + $0x20] sm:$0xff]
        %s1265 = scalar_lea.vmem [#allocation9], 52
        %v1266 = vld [vmem:[%s1265] sm:$0xf]
        %v1268 = vlaneseq
        %v1269 = vshrl.u32 %v1268, 7
        %v1270 = vsub.s32 0, %v1269
        %v1271 = vrot.slane %v1266, %v1270
        %v1272 = vlaneseq
        %v1273 = vshrl.u32 %v1272, 7
        %v1274 = vsub.s32 1, %v1273
        %v1275 = vrot.slane %v1266, %v1274
        %v1276 = vlaneseq
        %v1277 = vshrl.u32 %v1276, 7
        %v1278 = vsub.s32 2, %v1277
        %v1279 = vrot.slane %v1266, %v1278
        %v1280 = vlaneseq
        %v1281 = vshrl.u32 %v1280, 7
        %v1282 = vsub.s32 3, %v1281
        %v1283 = vrot.slane %v1266, %v1282
        %v1288 = vmul.f32 %v1261, %v1271
        %v1289 = vmul.f32 %v1262, %v1275
        %v1290 = vmul.f32 %v1263, %v1279
        %v1291 = vmul.f32 %v1264, %v1283
        %1292 = vst [vmem:[#allocation3 + $0x1a0] sm:$0xff] %v1288
        %1293 = vst [vmem:[#allocation3 + $0x1a8] sm:$0xff] %v1289
        %1294 = vst [vmem:[#allocation3 + $0x1b0] sm:$0xff] %v1290
        %1295 = vst [vmem:[#allocation3 + $0x1b8] sm:$0xff] %v1291
        %v1296 = vld [vmem:[#allocation2 + $0x8] sm:$0xff]
        %v1297 = vld [vmem:[#allocation2 + $0x10] sm:$0xff]
        %v1298 = vld [vmem:[#allocation2 + $0x18] sm:$0xff]
        %v1299 = vld [vmem:[#allocation2 + $0x20] sm:$0xff]
        %v1300 = vld [vmem:[#allocation2 + $0x28] sm:$0xff]
        %s1301 = scalar_lea.vmem [#allocation9], 56
        %v1302 = vld [vmem:[%s1301] sm:$0xf]
        %v1304 = vlaneseq
        %v1305 = vshrl.u32 %v1304, 7
        %v1306 = vsub.s32 0, %v1305
        %v1307 = vrot.slane %v1302, %v1306
        %v1308 = vlaneseq
        %v1309 = vshrl.u32 %v1308, 7
        %v1310 = vsub.s32 1, %v1309
        %v1311 = vrot.slane %v1302, %v1310
        %v1312 = vlaneseq
        %v1313 = vshrl.u32 %v1312, 7
        %v1314 = vsub.s32 2, %v1313
        %v1315 = vrot.slane %v1302, %v1314
        %v1316 = vlaneseq
        %v1317 = vshrl.u32 %v1316, 7
        %v1318 = vsub.s32 3, %v1317
        %v1319 = vrot.slane %v1302, %v1318
        %1320 = vrot.lane.b32.xlu0 %v1307, 1
        %v1321 = vpop.permute.xlu0 %1320
        %1322 = vrot.lane.b32.xlu0 %v1311, 1
        %v1323 = vpop.permute.xlu0 %1322
        %1324 = vrot.lane.b32.xlu0 %v1315, 1
        %v1325 = vpop.permute.xlu0 %1324
        %1326 = vrot.lane.b32.xlu0 %v1319, 1
        %v1327 = vpop.permute.xlu0 %1326
        %v1328 = vsel %vm1248, %v1321, %v1323
        %v1329 = vsel %vm1248, %v1323, %v1325
        %v1330 = vsel %vm1248, %v1325, %v1327
        %v1336 = vmul.f32 %v1296, %v1321
        %v1337 = vmul.f32 %v1297, %v1328
        %v1338 = vmul.f32 %v1298, %v1329
        %v1339 = vmul.f32 %v1299, %v1330
        %v1340 = vmul.f32 %v1300, %v1327
        %1346 = vrot.lane.b32.xlu0 %v1336, 127
        %v1347 = vpop.permute.xlu0 %1346
        %1348 = vrot.lane.b32.xlu0 %v1337, 127
        %v1349 = vpop.permute.xlu0 %1348
        %1350 = vrot.lane.b32.xlu0 %v1338, 127
        %v1351 = vpop.permute.xlu0 %1350
        %1352 = vrot.lane.b32.xlu0 %v1339, 127
        %v1353 = vpop.permute.xlu0 %1352
        %1354 = vrot.lane.b32.xlu0 %v1340, 127
        %v1355 = vpop.permute.xlu0 %1354
        %v1356 = vsel %vm1219, %v1347, %v1349
        %v1357 = vsel %vm1219, %v1349, %v1351
        %v1358 = vsel %vm1219, %v1351, %v1353
        %v1359 = vsel %vm1219, %v1353, %v1355
        %1364 = vst [vmem:[#allocation3 + $0x1c0] sm:$0xff] %v1356
        %1365 = vst [vmem:[#allocation3 + $0x1c8] sm:$0xff] %v1357
        %1366 = vst [vmem:[#allocation3 + $0x1d0] sm:$0xff] %v1358
        %1367 = vst [vmem:[#allocation3 + $0x1d8] sm:$0xff] %v1359
        %v1368 = vld [vmem:[#allocation2 + $0x8] sm:$0xff]
        %v1369 = vld [vmem:[#allocation2 + $0x10] sm:$0xff]
        %v1370 = vld [vmem:[#allocation2 + $0x18] sm:$0xff]
        %v1371 = vld [vmem:[#allocation2 + $0x20] sm:$0xff]
        %v1372 = vld [vmem:[#allocation2 + $0x28] sm:$0xff]
        %s1373 = scalar_lea.vmem [#allocation9], 60
        %v1374 = vld [vmem:[%s1373] sm:$0xf]
        %v1376 = vlaneseq
        %v1377 = vshrl.u32 %v1376, 7
        %v1378 = vsub.s32 0, %v1377
        %v1379 = vrot.slane %v1374, %v1378
        %v1380 = vlaneseq
        %v1381 = vshrl.u32 %v1380, 7
        %v1382 = vsub.s32 1, %v1381
        %v1383 = vrot.slane %v1374, %v1382
        %v1384 = vlaneseq
        %v1385 = vshrl.u32 %v1384, 7
        %v1386 = vsub.s32 2, %v1385
        %v1387 = vrot.slane %v1374, %v1386
        %v1388 = vlaneseq
        %v1389 = vshrl.u32 %v1388, 7
        %v1390 = vsub.s32 3, %v1389
        %v1391 = vrot.slane %v1374, %v1390
        %1392 = vrot.lane.b32.xlu0 %v1379, 7
        %v1393 = vpop.permute.xlu0 %1392
        %1394 = vrot.lane.b32.xlu0 %v1383, 7
        %v1395 = vpop.permute.xlu0 %1394
        %1396 = vrot.lane.b32.xlu0 %v1387, 7
        %v1397 = vpop.permute.xlu0 %1396
        %1398 = vrot.lane.b32.xlu0 %v1391, 7
        %v1399 = vpop.permute.xlu0 %1398
        %v1400 = vsel %vm1174, %v1393, %v1395
        %v1401 = vsel %vm1174, %v1395, %v1397
        %v1402 = vsel %vm1174, %v1397, %v1399
        %v1408 = vmul.f32 %v1368, %v1393
        %v1409 = vmul.f32 %v1369, %v1400
        %v1410 = vmul.f32 %v1370, %v1401
        %v1411 = vmul.f32 %v1371, %v1402
        %v1412 = vmul.f32 %v1372, %v1399
        %1418 = vrot.lane.b32.xlu0 %v1408, 121
        %v1419 = vpop.permute.xlu0 %1418
        %1420 = vrot.lane.b32.xlu0 %v1409, 121
        %v1421 = vpop.permute.xlu0 %1420
        %1422 = vrot.lane.b32.xlu0 %v1410, 121
        %v1423 = vpop.permute.xlu0 %1422
        %1424 = vrot.lane.b32.xlu0 %v1411, 121
        %v1425 = vpop.permute.xlu0 %1424
        %1426 = vrot.lane.b32.xlu0 %v1412, 121
        %v1427 = vpop.permute.xlu0 %1426
        %v1428 = vsel %vm1145, %v1419, %v1421
        %v1429 = vsel %vm1145, %v1421, %v1423
        %v1430 = vsel %vm1145, %v1423, %v1425
        %v1431 = vsel %vm1145, %v1425, %v1427
        %1436 = vst [vmem:[#allocation3 + $0x1e0] sm:$0xff] %v1428
        %1437 = vst [vmem:[#allocation3 + $0x1e8] sm:$0xff] %v1429
        %1438 = vst [vmem:[#allocation3 + $0x1f0] sm:$0xff] %v1430
        %1439 = vst [vmem:[#allocation3 + $0x1f8] sm:$0xff] %v1431
        %v1440 = vld [vmem:[#allocation2 + $0x8] sm:$0xff]
        %v1441 = vld [vmem:[#allocation2 + $0x10] sm:$0xff]
        %v1442 = vld [vmem:[#allocation2 + $0x18] sm:$0xff]
        %v1443 = vld [vmem:[#allocation2 + $0x20] sm:$0xff]
        %v1444 = vld [vmem:[#allocation2 + $0x28] sm:$0xff]
        %s1445 = scalar_lea.vmem [#allocation9], 64
        %v1446 = vld [vmem:[%s1445] sm:$0xf]
        %v1448 = vlaneseq
        %v1449 = vshrl.u32 %v1448, 7
        %v1450 = vsub.s32 0, %v1449
        %v1451 = vrot.slane %v1446, %v1450
        %v1452 = vlaneseq
        %v1453 = vshrl.u32 %v1452, 7
        %v1454 = vsub.s32 1, %v1453
        %v1455 = vrot.slane %v1446, %v1454
        %v1456 = vlaneseq
        %v1457 = vshrl.u32 %v1456, 7
        %v1458 = vsub.s32 2, %v1457
        %v1459 = vrot.slane %v1446, %v1458
        %v1460 = vlaneseq
        %v1461 = vshrl.u32 %v1460, 7
        %v1462 = vsub.s32 3, %v1461
        %v1463 = vrot.slane %v1446, %v1462
        %1464 = vrot.lane.b32.xlu0 %v1451, 8
        %v1465 = vpop.permute.xlu0 %1464
        %1466 = vrot.lane.b32.xlu0 %v1455, 8
        %v1467 = vpop.permute.xlu0 %1466
        %1468 = vrot.lane.b32.xlu0 %v1459, 8
        %v1469 = vpop.permute.xlu0 %1468
        %1470 = vrot.lane.b32.xlu0 %v1463, 8
        %v1471 = vpop.permute.xlu0 %1470
        %v1472 = vsel %vm1100, %v1465, %v1467
        %v1473 = vsel %vm1100, %v1467, %v1469
        %v1474 = vsel %vm1100, %v1469, %v1471
        %v1480 = vmul.f32 %v1440, %v1465
        %v1481 = vmul.f32 %v1441, %v1472
        %v1482 = vmul.f32 %v1442, %v1473
        %v1483 = vmul.f32 %v1443, %v1474
        %v1484 = vmul.f32 %v1444, %v1471
        %1490 = vrot.lane.b32.xlu0 %v1480, 120
        %v1491 = vpop.permute.xlu0 %1490
        %1492 = vrot.lane.b32.xlu0 %v1481, 120
        %v1493 = vpop.permute.xlu0 %1492
        %1494 = vrot.lane.b32.xlu0 %v1482, 120
        %v1495 = vpop.permute.xlu0 %1494
        %1496 = vrot.lane.b32.xlu0 %v1483, 120
        %v1497 = vpop.permute.xlu0 %1496
        %1498 = vrot.lane.b32.xlu0 %v1484, 120
        %v1499 = vpop.permute.xlu0 %1498
        %v1500 = vsel %vm1071, %v1491, %v1493
        %v1501 = vsel %vm1071, %v1493, %v1495
        %v1502 = vsel %vm1071, %v1495, %v1497
        %v1503 = vsel %vm1071, %v1497, %v1499
        %1508 = vst [vmem:[#allocation3 + $0x200] sm:$0xff] %v1500
        %1509 = vst [vmem:[#allocation3 + $0x208] sm:$0xff] %v1501
        %1510 = vst [vmem:[#allocation3 + $0x210] sm:$0xff] %v1502
        %1511 = vst [vmem:[#allocation3 + $0x218] sm:$0xff] %v1503
        %v1512 = vld [vmem:[#allocation2 + $0x8] sm:$0xff]
        %v1513 = vld [vmem:[#allocation2 + $0x10] sm:$0xff]
        %v1514 = vld [vmem:[#allocation2 + $0x18] sm:$0xff]
        %v1515 = vld [vmem:[#allocation2 + $0x20] sm:$0xff]
        %v1516 = vld [vmem:[#allocation2 + $0x28] sm:$0xff]
        %s1517 = scalar_lea.vmem [#allocation9], 68
        %v1518 = vld [vmem:[%s1517] sm:$0xf]
        %v1520 = vlaneseq
        %v1521 = vshrl.u32 %v1520, 7
        %v1522 = vsub.s32 0, %v1521
        %v1523 = vrot.slane %v1518, %v1522
        %v1524 = vlaneseq
        %v1525 = vshrl.u32 %v1524, 7
        %v1526 = vsub.s32 1, %v1525
        %v1527 = vrot.slane %v1518, %v1526
        %v1528 = vlaneseq
        %v1529 = vshrl.u32 %v1528, 7
        %v1530 = vsub.s32 2, %v1529
        %v1531 = vrot.slane %v1518, %v1530
        %v1532 = vlaneseq
        %v1533 = vshrl.u32 %v1532, 7
        %v1534 = vsub.s32 3, %v1533
        %v1535 = vrot.slane %v1518, %v1534
        %1536 = vrot.lane.b32.xlu0 %v1523, 9
        %v1537 = vpop.permute.xlu0 %1536
        %1538 = vrot.lane.b32.xlu0 %v1527, 9
        %v1539 = vpop.permute.xlu0 %1538
        %1540 = vrot.lane.b32.xlu0 %v1531, 9
        %v1541 = vpop.permute.xlu0 %1540
        %1542 = vrot.lane.b32.xlu0 %v1535, 9
        %v1543 = vpop.permute.xlu0 %1542
        %v1544 = vsel %vm1026, %v1537, %v1539
        %v1545 = vsel %vm1026, %v1539, %v1541
        %v1546 = vsel %vm1026, %v1541, %v1543
        %v1552 = vmul.f32 %v1512, %v1537
        %v1553 = vmul.f32 %v1513, %v1544
        %v1554 = vmul.f32 %v1514, %v1545
        %v1555 = vmul.f32 %v1515, %v1546
        %v1556 = vmul.f32 %v1516, %v1543
        %1562 = vrot.lane.b32.xlu0 %v1552, 119
        %v1563 = vpop.permute.xlu0 %1562
        %1564 = vrot.lane.b32.xlu0 %v1553, 119
        %v1565 = vpop.permute.xlu0 %1564
        %1566 = vrot.lane.b32.xlu0 %v1554, 119
        %v1567 = vpop.permute.xlu0 %1566
        %1568 = vrot.lane.b32.xlu0 %v1555, 119
        %v1569 = vpop.permute.xlu0 %1568
        %1570 = vrot.lane.b32.xlu0 %v1556, 119
        %v1571 = vpop.permute.xlu0 %1570
        %v1572 = vsel %vm997, %v1563, %v1565
        %v1573 = vsel %vm997, %v1565, %v1567
        %v1574 = vsel %vm997, %v1567, %v1569
        %v1575 = vsel %vm997, %v1569, %v1571
        %1580 = vst [vmem:[#allocation3 + $0x220] sm:$0xff] %v1572
        %1581 = vst [vmem:[#allocation3 + $0x228] sm:$0xff] %v1573
        %1582 = vst [vmem:[#allocation3 + $0x230] sm:$0xff] %v1574
        %1583 = vst [vmem:[#allocation3 + $0x238] sm:$0xff] %v1575
        %v1584 = vld [vmem:[#allocation2 + $0x8] sm:$0xff]
        %v1585 = vld [vmem:[#allocation2 + $0x10] sm:$0xff]
        %v1586 = vld [vmem:[#allocation2 + $0x18] sm:$0xff]
        %v1587 = vld [vmem:[#allocation2 + $0x20] sm:$0xff]
        %v1588 = vld [vmem:[#allocation2 + $0x28] sm:$0xff]
        %s1589 = scalar_lea.vmem [#allocation9], 72
        %v1590 = vld [vmem:[%s1589] sm:$0xf]
        %v1592 = vlaneseq
        %v1593 = vshrl.u32 %v1592, 7
        %v1594 = vsub.s32 0, %v1593
        %v1595 = vrot.slane %v1590, %v1594
        %v1596 = vlaneseq
        %v1597 = vshrl.u32 %v1596, 7
        %v1598 = vsub.s32 1, %v1597
        %v1599 = vrot.slane %v1590, %v1598
        %v1600 = vlaneseq
        %v1601 = vshrl.u32 %v1600, 7
        %v1602 = vsub.s32 2, %v1601
        %v1603 = vrot.slane %v1590, %v1602
        %v1604 = vlaneseq
        %v1605 = vshrl.u32 %v1604, 7
        %v1606 = vsub.s32 3, %v1605
        %v1607 = vrot.slane %v1590, %v1606
        %1608 = vrot.lane.b32.xlu0 %v1595, 55
        %v1609 = vpop.permute.xlu0 %1608
        %1610 = vrot.lane.b32.xlu0 %v1599, 55
        %v1611 = vpop.permute.xlu0 %1610
        %1612 = vrot.lane.b32.xlu0 %v1603, 55
        %v1613 = vpop.permute.xlu0 %1612
        %1614 = vrot.lane.b32.xlu0 %v1607, 55
        %v1615 = vpop.permute.xlu0 %1614
        %v1616 = vsel %vm340, %v1609, %v1611
        %v1617 = vsel %vm340, %v1611, %v1613
        %v1618 = vsel %vm340, %v1613, %v1615
        %v1624 = vmul.f32 %v1584, %v1609
        %v1625 = vmul.f32 %v1585, %v1616
        %v1626 = vmul.f32 %v1586, %v1617
        %v1627 = vmul.f32 %v1587, %v1618
        %v1628 = vmul.f32 %v1588, %v1615
        %1634 = vrot.lane.b32.xlu0 %v1624, 73
        %v1635 = vpop.permute.xlu0 %1634
        %1636 = vrot.lane.b32.xlu0 %v1625, 73
        %v1637 = vpop.permute.xlu0 %1636
        %1638 = vrot.lane.b32.xlu0 %v1626, 73
        %v1639 = vpop.permute.xlu0 %1638
        %1640 = vrot.lane.b32.xlu0 %v1627, 73
        %v1641 = vpop.permute.xlu0 %1640
        %1642 = vrot.lane.b32.xlu0 %v1628, 73
        %v1643 = vpop.permute.xlu0 %1642
        %v1644 = vsel %vm369, %v1635, %v1637
        %v1645 = vsel %vm369, %v1637, %v1639
        %v1646 = vsel %vm369, %v1639, %v1641
        %v1647 = vsel %vm369, %v1641, %v1643
        %1652 = vst [vmem:[#allocation3 + $0x240] sm:$0xff] %v1644
        %1653 = vst [vmem:[#allocation3 + $0x248] sm:$0xff] %v1645
        %1654 = vst [vmem:[#allocation3 + $0x250] sm:$0xff] %v1646
        %1655 = vst [vmem:[#allocation3 + $0x258] sm:$0xff] %v1647
        %v1656 = vld [vmem:[#allocation2 + $0x8] sm:$0xff]
        %v1657 = vld [vmem:[#allocation2 + $0x10] sm:$0xff]
        %v1658 = vld [vmem:[#allocation2 + $0x18] sm:$0xff]
        %v1659 = vld [vmem:[#allocation2 + $0x20] sm:$0xff]
        %v1660 = vld [vmem:[#allocation2 + $0x28] sm:$0xff]
        %s1661 = scalar_lea.vmem [#allocation9], 76
        %v1662 = vld [vmem:[%s1661] sm:$0xf]
        %v1664 = vlaneseq
        %v1665 = vshrl.u32 %v1664, 7
        %v1666 = vsub.s32 0, %v1665
        %v1667 = vrot.slane %v1662, %v1666
        %v1668 = vlaneseq
        %v1669 = vshrl.u32 %v1668, 7
        %v1670 = vsub.s32 1, %v1669
        %v1671 = vrot.slane %v1662, %v1670
        %v1672 = vlaneseq
        %v1673 = vshrl.u32 %v1672, 7
        %v1674 = vsub.s32 2, %v1673
        %v1675 = vrot.slane %v1662, %v1674
        %v1676 = vlaneseq
        %v1677 = vshrl.u32 %v1676, 7
        %v1678 = vsub.s32 3, %v1677
        %v1679 = vrot.slane %v1662, %v1678
        %1680 = vrot.lane.b32.xlu0 %v1667, 56
        %v1681 = vpop.permute.xlu0 %1680
        %1682 = vrot.lane.b32.xlu0 %v1671, 56
        %v1683 = vpop.permute.xlu0 %1682
        %1684 = vrot.lane.b32.xlu0 %v1675, 56
        %v1685 = vpop.permute.xlu0 %1684
        %1686 = vrot.lane.b32.xlu0 %v1679, 56
        %v1687 = vpop.permute.xlu0 %1686
        %v1688 = vsel %vm414, %v1681, %v1683
        %v1689 = vsel %vm414, %v1683, %v1685
        %v1690 = vsel %vm414, %v1685, %v1687
        %v1696 = vmul.f32 %v1656, %v1681
        %v1697 = vmul.f32 %v1657, %v1688
        %v1698 = vmul.f32 %v1658, %v1689
        %v1699 = vmul.f32 %v1659, %v1690
        %v1700 = vmul.f32 %v1660, %v1687
        %1706 = vrot.lane.b32.xlu0 %v1696, 72
        %v1707 = vpop.permute.xlu0 %1706
        %1708 = vrot.lane.b32.xlu0 %v1697, 72
        %v1709 = vpop.permute.xlu0 %1708
        %1710 = vrot.lane.b32.xlu0 %v1698, 72
        %v1711 = vpop.permute.xlu0 %1710
        %1712 = vrot.lane.b32.xlu0 %v1699, 72
        %v1713 = vpop.permute.xlu0 %1712
        %1714 = vrot.lane.b32.xlu0 %v1700, 72
        %v1715 = vpop.permute.xlu0 %1714
        %v1716 = vsel %vm443, %v1707, %v1709
        %v1717 = vsel %vm443, %v1709, %v1711
        %v1718 = vsel %vm443, %v1711, %v1713
        %v1719 = vsel %vm443, %v1713, %v1715
        %1724 = vst [vmem:[#allocation3 + $0x260] sm:$0xff] %v1716
        %1725 = vst [vmem:[#allocation3 + $0x268] sm:$0xff] %v1717
        %1726 = vst [vmem:[#allocation3 + $0x270] sm:$0xff] %v1718
        %1727 = vst [vmem:[#allocation3 + $0x278] sm:$0xff] %v1719
        %v1728 = vld [vmem:[#allocation2 + $0x8] sm:$0xff]
        %v1729 = vld [vmem:[#allocation2 + $0x10] sm:$0xff]
        %v1730 = vld [vmem:[#allocation2 + $0x18] sm:$0xff]
        %v1731 = vld [vmem:[#allocation2 + $0x20] sm:$0xff]
        %v1732 = vld [vmem:[#allocation2 + $0x28] sm:$0xff]
        %s1733 = scalar_lea.vmem [#allocation9], 80
        %v1734 = vld [vmem:[%s1733] sm:$0xf]
        %v1736 = vlaneseq
        %v1737 = vshrl.u32 %v1736, 7
        %v1738 = vsub.s32 0, %v1737
        %v1739 = vrot.slane %v1734, %v1738
        %v1740 = vlaneseq
        %v1741 = vshrl.u32 %v1740, 7
        %v1742 = vsub.s32 1, %v1741
        %v1743 = vrot.slane %v1734, %v1742
        %v1744 = vlaneseq
        %v1745 = vshrl.u32 %v1744, 7
        %v1746 = vsub.s32 2, %v1745
        %v1747 = vrot.slane %v1734, %v1746
        %v1748 = vlaneseq
        %v1749 = vshrl.u32 %v1748, 7
        %v1750 = vsub.s32 3, %v1749
        %v1751 = vrot.slane %v1734, %v1750
        %1752 = vrot.lane.b32.xlu0 %v1739, 57
        %v1753 = vpop.permute.xlu0 %1752
        %1754 = vrot.lane.b32.xlu0 %v1743, 57
        %v1755 = vpop.permute.xlu0 %1754
        %1756 = vrot.lane.b32.xlu0 %v1747, 57
        %v1757 = vpop.permute.xlu0 %1756
        %1758 = vrot.lane.b32.xlu0 %v1751, 57
        %v1759 = vpop.permute.xlu0 %1758
        %v1760 = vsel %vm488, %v1753, %v1755
        %v1761 = vsel %vm488, %v1755, %v1757
        %v1762 = vsel %vm488, %v1757, %v1759
        %v1768 = vmul.f32 %v1728, %v1753
        %v1769 = vmul.f32 %v1729, %v1760
        %v1770 = vmul.f32 %v1730, %v1761
        %v1771 = vmul.f32 %v1731, %v1762
        %v1772 = vmul.f32 %v1732, %v1759
        %1778 = vrot.lane.b32.xlu0 %v1768, 71
        %v1779 = vpop.permute.xlu0 %1778
        %1780 = vrot.lane.b32.xlu0 %v1769, 71
        %v1781 = vpop.permute.xlu0 %1780
        %1782 = vrot.lane.b32.xlu0 %v1770, 71
        %v1783 = vpop.permute.xlu0 %1782
        %1784 = vrot.lane.b32.xlu0 %v1771, 71
        %v1785 = vpop.permute.xlu0 %1784
        %1786 = vrot.lane.b32.xlu0 %v1772, 71
        %v1787 = vpop.permute.xlu0 %1786
        %v1788 = vsel %vm517, %v1779, %v1781
        %v1789 = vsel %vm517, %v1781, %v1783
        %v1790 = vsel %vm517, %v1783, %v1785
        %v1791 = vsel %vm517, %v1785, %v1787
        %1796 = vst [vmem:[#allocation3 + $0x280] sm:$0xff] %v1788
        %1797 = vst [vmem:[#allocation3 + $0x288] sm:$0xff] %v1789
        %1798 = vst [vmem:[#allocation3 + $0x290] sm:$0xff] %v1790
        %1799 = vst [vmem:[#allocation3 + $0x298] sm:$0xff] %v1791
        %v1800 = vld [vmem:[#allocation2 + $0x8] sm:$0xff]
        %v1801 = vld [vmem:[#allocation2 + $0x10] sm:$0xff]
        %v1802 = vld [vmem:[#allocation2 + $0x18] sm:$0xff]
        %v1803 = vld [vmem:[#allocation2 + $0x20] sm:$0xff]
        %v1804 = vld [vmem:[#allocation2 + $0x28] sm:$0xff]
        %s1805 = scalar_lea.vmem [#allocation9], 84
        %v1806 = vld [vmem:[%s1805] sm:$0xf]
        %v1808 = vlaneseq
        %v1809 = vshrl.u32 %v1808, 7
        %v1810 = vsub.s32 0, %v1809
        %v1811 = vrot.slane %v1806, %v1810
        %v1812 = vlaneseq
        %v1813 = vshrl.u32 %v1812, 7
        %v1814 = vsub.s32 1, %v1813
        %v1815 = vrot.slane %v1806, %v1814
        %v1816 = vlaneseq
        %v1817 = vshrl.u32 %v1816, 7
        %v1818 = vsub.s32 2, %v1817
        %v1819 = vrot.slane %v1806, %v1818
        %v1820 = vlaneseq
        %v1821 = vshrl.u32 %v1820, 7
        %v1822 = vsub.s32 3, %v1821
        %v1823 = vrot.slane %v1806, %v1822
        %1824 = vrot.lane.b32.xlu0 %v1811, 63
        %v1825 = vpop.permute.xlu0 %1824
        %1826 = vrot.lane.b32.xlu0 %v1815, 63
        %v1827 = vpop.permute.xlu0 %1826
        %1828 = vrot.lane.b32.xlu0 %v1819, 63
        %v1829 = vpop.permute.xlu0 %1828
        %1830 = vrot.lane.b32.xlu0 %v1823, 63
        %v1831 = vpop.permute.xlu0 %1830
        %v1832 = vsel %vm562, %v1825, %v1827
        %v1833 = vsel %vm562, %v1827, %v1829
        %v1834 = vsel %vm562, %v1829, %v1831
        %v1840 = vmul.f32 %v1800, %v1825
        %v1841 = vmul.f32 %v1801, %v1832
        %v1842 = vmul.f32 %v1802, %v1833
        %v1843 = vmul.f32 %v1803, %v1834
        %v1844 = vmul.f32 %v1804, %v1831
        %1850 = vrot.lane.b32.xlu0 %v1840, 65
        %v1851 = vpop.permute.xlu0 %1850
        %1852 = vrot.lane.b32.xlu0 %v1841, 65
        %v1853 = vpop.permute.xlu0 %1852
        %1854 = vrot.lane.b32.xlu0 %v1842, 65
        %v1855 = vpop.permute.xlu0 %1854
        %1856 = vrot.lane.b32.xlu0 %v1843, 65
        %v1857 = vpop.permute.xlu0 %1856
        %1858 = vrot.lane.b32.xlu0 %v1844, 65
        %v1859 = vpop.permute.xlu0 %1858
        %v1860 = vsel %vm591, %v1851, %v1853
        %v1861 = vsel %vm591, %v1853, %v1855
        %v1862 = vsel %vm591, %v1855, %v1857
        %v1863 = vsel %vm591, %v1857, %v1859
        %1868 = vst [vmem:[#allocation3 + $0x2a0] sm:$0xff] %v1860
        %1869 = vst [vmem:[#allocation3 + $0x2a8] sm:$0xff] %v1861
        %1870 = vst [vmem:[#allocation3 + $0x2b0] sm:$0xff] %v1862
        %1871 = vst [vmem:[#allocation3 + $0x2b8] sm:$0xff] %v1863
        %v1872 = vld [vmem:[#allocation2 + $0x8] sm:$0xff]
        %v1873 = vld [vmem:[#allocation2 + $0x10] sm:$0xff]
        %v1874 = vld [vmem:[#allocation2 + $0x18] sm:$0xff]
        %v1875 = vld [vmem:[#allocation2 + $0x20] sm:$0xff]
        %v1876 = vld [vmem:[#allocation2 + $0x28] sm:$0xff]
        %s1877 = scalar_lea.vmem [#allocation9], 88
        %v1878 = vld [vmem:[%s1877] sm:$0xf]
        %v1880 = vlaneseq
        %v1881 = vshrl.u32 %v1880, 7
        %v1882 = vsub.s32 0, %v1881
        %v1883 = vrot.slane %v1878, %v1882
        %v1884 = vlaneseq
        %v1885 = vshrl.u32 %v1884, 7
        %v1886 = vsub.s32 1, %v1885
        %v1887 = vrot.slane %v1878, %v1886
        %v1888 = vlaneseq
        %v1889 = vshrl.u32 %v1888, 7
        %v1890 = vsub.s32 2, %v1889
        %v1891 = vrot.slane %v1878, %v1890
        %v1892 = vlaneseq
        %v1893 = vshrl.u32 %v1892, 7
        %v1894 = vsub.s32 3, %v1893
        %v1895 = vrot.slane %v1878, %v1894
        %1896 = vrot.lane.b32.xlu0 %v1883, 64
        %v1897 = vpop.permute.xlu0 %1896
        %1898 = vrot.lane.b32.xlu0 %v1887, 64
        %v1899 = vpop.permute.xlu0 %1898
        %1900 = vrot.lane.b32.xlu0 %v1891, 64
        %v1901 = vpop.permute.xlu0 %1900
        %1902 = vrot.lane.b32.xlu0 %v1895, 64
        %v1903 = vpop.permute.xlu0 %1902
        %v1904 = vsel %vm636, %v1897, %v1899
        %v1905 = vsel %vm636, %v1899, %v1901
        %v1906 = vsel %vm636, %v1901, %v1903
        %v1912 = vmul.f32 %v1872, %v1897
        %v1913 = vmul.f32 %v1873, %v1904
        %v1914 = vmul.f32 %v1874, %v1905
        %v1915 = vmul.f32 %v1875, %v1906
        %v1916 = vmul.f32 %v1876, %v1903
        %1922 = vrot.lane.b32.xlu0 %v1912, 64
        %v1923 = vpop.permute.xlu0 %1922
        %1924 = vrot.lane.b32.xlu0 %v1913, 64
        %v1925 = vpop.permute.xlu0 %1924
        %1926 = vrot.lane.b32.xlu0 %v1914, 64
        %v1927 = vpop.permute.xlu0 %1926
        %1928 = vrot.lane.b32.xlu0 %v1915, 64
        %v1929 = vpop.permute.xlu0 %1928
        %1930 = vrot.lane.b32.xlu0 %v1916, 64
        %v1931 = vpop.permute.xlu0 %1930
        %v1932 = vsel %vm636, %v1923, %v1925
        %v1933 = vsel %vm636, %v1925, %v1927
        %v1934 = vsel %vm636, %v1927, %v1929
        %v1935 = vsel %vm636, %v1929, %v1931
        %1940 = vst [vmem:[#allocation3 + $0x2c0] sm:$0xff] %v1932
        %1941 = vst [vmem:[#allocation3 + $0x2c8] sm:$0xff] %v1933
        %1942 = vst [vmem:[#allocation3 + $0x2d0] sm:$0xff] %v1934
        %1943 = vst [vmem:[#allocation3 + $0x2d8] sm:$0xff] %v1935
        %v1944 = vld [vmem:[#allocation2 + $0x8] sm:$0xff]
        %v1945 = vld [vmem:[#allocation2 + $0x10] sm:$0xff]
        %v1946 = vld [vmem:[#allocation2 + $0x18] sm:$0xff]
        %v1947 = vld [vmem:[#allocation2 + $0x20] sm:$0xff]
        %v1948 = vld [vmem:[#allocation2 + $0x28] sm:$0xff]
        %s1949 = scalar_lea.vmem [#allocation9], 92
        %v1950 = vld [vmem:[%s1949] sm:$0xf]
        %v1952 = vlaneseq
        %v1953 = vshrl.u32 %v1952, 7
        %v1954 = vsub.s32 0, %v1953
        %v1955 = vrot.slane %v1950, %v1954
        %v1956 = vlaneseq
        %v1957 = vshrl.u32 %v1956, 7
        %v1958 = vsub.s32 1, %v1957
        %v1959 = vrot.slane %v1950, %v1958
        %v1960 = vlaneseq
        %v1961 = vshrl.u32 %v1960, 7
        %v1962 = vsub.s32 2, %v1961
        %v1963 = vrot.slane %v1950, %v1962
        %v1964 = vlaneseq
        %v1965 = vshrl.u32 %v1964, 7
        %v1966 = vsub.s32 3, %v1965
        %v1967 = vrot.slane %v1950, %v1966
        %1968 = vrot.lane.b32.xlu0 %v1955, 65
        %v1969 = vpop.permute.xlu0 %1968
        %1970 = vrot.lane.b32.xlu0 %v1959, 65
        %v1971 = vpop.permute.xlu0 %1970
        %1972 = vrot.lane.b32.xlu0 %v1963, 65
        %v1973 = vpop.permute.xlu0 %1972
        %1974 = vrot.lane.b32.xlu0 %v1967, 65
        %v1975 = vpop.permute.xlu0 %1974
        %v1976 = vsel %vm591, %v1969, %v1971
        %v1977 = vsel %vm591, %v1971, %v1973
        %v1978 = vsel %vm591, %v1973, %v1975
        %v1984 = vmul.f32 %v1944, %v1969
        %v1985 = vmul.f32 %v1945, %v1976
        %v1986 = vmul.f32 %v1946, %v1977
        %v1987 = vmul.f32 %v1947, %v1978
        %v1988 = vmul.f32 %v1948, %v1975
        %1994 = vrot.lane.b32.xlu0 %v1984, 63
        %v1995 = vpop.permute.xlu0 %1994
        %1996 = vrot.lane.b32.xlu0 %v1985, 63
        %v1997 = vpop.permute.xlu0 %1996
        %1998 = vrot.lane.b32.xlu0 %v1986, 63
        %v1999 = vpop.permute.xlu0 %1998
        %2000 = vrot.lane.b32.xlu0 %v1987, 63
        %v2001 = vpop.permute.xlu0 %2000
        %2002 = vrot.lane.b32.xlu0 %v1988, 63
        %v2003 = vpop.permute.xlu0 %2002
        %v2004 = vsel %vm562, %v1995, %v1997
        %v2005 = vsel %vm562, %v1997, %v1999
        %v2006 = vsel %vm562, %v1999, %v2001
        %v2007 = vsel %vm562, %v2001, %v2003
        %2012 = vst [vmem:[#allocation3 + $0x2e0] sm:$0xff] %v2004
        %2013 = vst [vmem:[#allocation3 + $0x2e8] sm:$0xff] %v2005
        %2014 = vst [vmem:[#allocation3 + $0x2f0] sm:$0xff] %v2006
        %2015 = vst [vmem:[#allocation3 + $0x2f8] sm:$0xff] %v2007
        %v2016 = vld [vmem:[#allocation2 + $0x8] sm:$0xff]
        %v2017 = vld [vmem:[#allocation2 + $0x10] sm:$0xff]
        %v2018 = vld [vmem:[#allocation2 + $0x18] sm:$0xff]
        %v2019 = vld [vmem:[#allocation2 + $0x20] sm:$0xff]
        %v2020 = vld [vmem:[#allocation2 + $0x28] sm:$0xff]
        %s2021 = scalar_lea.vmem [#allocation9], 96
        %v2022 = vld [vmem:[%s2021] sm:$0xf]
        %v2024 = vlaneseq
        %v2025 = vshrl.u32 %v2024, 7
        %v2026 = vsub.s32 0, %v2025
        %v2027 = vrot.slane %v2022, %v2026
        %v2028 = vlaneseq
        %v2029 = vshrl.u32 %v2028, 7
        %v2030 = vsub.s32 1, %v2029
        %v2031 = vrot.slane %v2022, %v2030
        %v2032 = vlaneseq
        %v2033 = vshrl.u32 %v2032, 7
        %v2034 = vsub.s32 2, %v2033
        %v2035 = vrot.slane %v2022, %v2034
        %v2036 = vlaneseq
        %v2037 = vshrl.u32 %v2036, 7
        %v2038 = vsub.s32 3, %v2037
        %v2039 = vrot.slane %v2022, %v2038
        %2040 = vrot.lane.b32.xlu0 %v2027, 71
        %v2041 = vpop.permute.xlu0 %2040
        %2042 = vrot.lane.b32.xlu0 %v2031, 71
        %v2043 = vpop.permute.xlu0 %2042
        %2044 = vrot.lane.b32.xlu0 %v2035, 71
        %v2045 = vpop.permute.xlu0 %2044
        %2046 = vrot.lane.b32.xlu0 %v2039, 71
        %v2047 = vpop.permute.xlu0 %2046
        %v2048 = vsel %vm517, %v2041, %v2043
        %v2049 = vsel %vm517, %v2043, %v2045
        %v2050 = vsel %vm517, %v2045, %v2047
        %v2056 = vmul.f32 %v2016, %v2041
        %v2057 = vmul.f32 %v2017, %v2048
        %v2058 = vmul.f32 %v2018, %v2049
        %v2059 = vmul.f32 %v2019, %v2050
        %v2060 = vmul.f32 %v2020, %v2047
        %2066 = vrot.lane.b32.xlu0 %v2056, 57
        %v2067 = vpop.permute.xlu0 %2066
        %2068 = vrot.lane.b32.xlu0 %v2057, 57
        %v2069 = vpop.permute.xlu0 %2068
        %2070 = vrot.lane.b32.xlu0 %v2058, 57
        %v2071 = vpop.permute.xlu0 %2070
        %2072 = vrot.lane.b32.xlu0 %v2059, 57
        %v2073 = vpop.permute.xlu0 %2072
        %2074 = vrot.lane.b32.xlu0 %v2060, 57
        %v2075 = vpop.permute.xlu0 %2074
        %v2076 = vsel %vm488, %v2067, %v2069
        %v2077 = vsel %vm488, %v2069, %v2071
        %v2078 = vsel %vm488, %v2071, %v2073
        %v2079 = vsel %vm488, %v2073, %v2075
        %2084 = vst [vmem:[#allocation3 + $0x300] sm:$0xff] %v2076
        %2085 = vst [vmem:[#allocation3 + $0x308] sm:$0xff] %v2077
        %2086 = vst [vmem:[#allocation3 + $0x310] sm:$0xff] %v2078
        %2087 = vst [vmem:[#allocation3 + $0x318] sm:$0xff] %v2079
        %v2088 = vld [vmem:[#allocation2 + $0x8] sm:$0xff]
        %v2089 = vld [vmem:[#allocation2 + $0x10] sm:$0xff]
        %v2090 = vld [vmem:[#allocation2 + $0x18] sm:$0xff]
        %v2091 = vld [vmem:[#allocation2 + $0x20] sm:$0xff]
        %v2092 = vld [vmem:[#allocation2 + $0x28] sm:$0xff]
        %s2093 = scalar_lea.vmem [#allocation9], 100
        %v2094 = vld [vmem:[%s2093] sm:$0xf]
        %v2096 = vlaneseq
        %v2097 = vshrl.u32 %v2096, 7
        %v2098 = vsub.s32 0, %v2097
        %v2099 = vrot.slane %v2094, %v2098
        %v2100 = vlaneseq
        %v2101 = vshrl.u32 %v2100, 7
        %v2102 = vsub.s32 1, %v2101
        %v2103 = vrot.slane %v2094, %v2102
        %v2104 = vlaneseq
        %v2105 = vshrl.u32 %v2104, 7
        %v2106 = vsub.s32 2, %v2105
        %v2107 = vrot.slane %v2094, %v2106
        %v2108 = vlaneseq
        %v2109 = vshrl.u32 %v2108, 7
        %v2110 = vsub.s32 3, %v2109
        %v2111 = vrot.slane %v2094, %v2110
        %2112 = vrot.lane.b32.xlu0 %v2099, 72
        %v2113 = vpop.permute.xlu0 %2112
        %2114 = vrot.lane.b32.xlu0 %v2103, 72
        %v2115 = vpop.permute.xlu0 %2114
        %2116 = vrot.lane.b32.xlu0 %v2107, 72
        %v2117 = vpop.permute.xlu0 %2116
        %2118 = vrot.lane.b32.xlu0 %v2111, 72
        %v2119 = vpop.permute.xlu0 %2118
        %v2120 = vsel %vm443, %v2113, %v2115
        %v2121 = vsel %vm443, %v2115, %v2117
        %v2122 = vsel %vm443, %v2117, %v2119
        %v2128 = vmul.f32 %v2088, %v2113
        %v2129 = vmul.f32 %v2089, %v2120
        %v2130 = vmul.f32 %v2090, %v2121
        %v2131 = vmul.f32 %v2091, %v2122
        %v2132 = vmul.f32 %v2092, %v2119
        %2138 = vrot.lane.b32.xlu0 %v2128, 56
        %v2139 = vpop.permute.xlu0 %2138
        %2140 = vrot.lane.b32.xlu0 %v2129, 56
        %v2141 = vpop.permute.xlu0 %2140
        %2142 = vrot.lane.b32.xlu0 %v2130, 56
        %v2143 = vpop.permute.xlu0 %2142
        %2144 = vrot.lane.b32.xlu0 %v2131, 56
        %v2145 = vpop.permute.xlu0 %2144
        %2146 = vrot.lane.b32.xlu0 %v2132, 56
        %v2147 = vpop.permute.xlu0 %2146
        %v2148 = vsel %vm414, %v2139, %v2141
        %v2149 = vsel %vm414, %v2141, %v2143
        %v2150 = vsel %vm414, %v2143, %v2145
        %v2151 = vsel %vm414, %v2145, %v2147
        %2156 = vst [vmem:[#allocation3 + $0x320] sm:$0xff] %v2148
        %2157 = vst [vmem:[#allocation3 + $0x328] sm:$0xff] %v2149
        %2158 = vst [vmem:[#allocation3 + $0x330] sm:$0xff] %v2150
        %2159 = vst [vmem:[#allocation3 + $0x338] sm:$0xff] %v2151
        %v2160 = vld [vmem:[#allocation2 + $0x8] sm:$0xff]
        %v2161 = vld [vmem:[#allocation2 + $0x10] sm:$0xff]
        %v2162 = vld [vmem:[#allocation2 + $0x18] sm:$0xff]
        %v2163 = vld [vmem:[#allocation2 + $0x20] sm:$0xff]
        %v2164 = vld [vmem:[#allocation2 + $0x28] sm:$0xff]
        %s2165 = scalar_lea.vmem [#allocation9], 104
        %v2166 = vld [vmem:[%s2165] sm:$0xf]
        %v2168 = vlaneseq
        %v2169 = vshrl.u32 %v2168, 7
        %v2170 = vsub.s32 0, %v2169
        %v2171 = vrot.slane %v2166, %v2170
        %v2172 = vlaneseq
        %v2173 = vshrl.u32 %v2172, 7
        %v2174 = vsub.s32 1, %v2173
        %v2175 = vrot.slane %v2166, %v2174
        %v2176 = vlaneseq
        %v2177 = vshrl.u32 %v2176, 7
        %v2178 = vsub.s32 2, %v2177
        %v2179 = vrot.slane %v2166, %v2178
        %v2180 = vlaneseq
        %v2181 = vshrl.u32 %v2180, 7
        %v2182 = vsub.s32 3, %v2181
        %v2183 = vrot.slane %v2166, %v2182
        %2184 = vrot.lane.b32.xlu0 %v2171, 73
        %v2185 = vpop.permute.xlu0 %2184
        %2186 = vrot.lane.b32.xlu0 %v2175, 73
        %v2187 = vpop.permute.xlu0 %2186
        %2188 = vrot.lane.b32.xlu0 %v2179, 73
        %v2189 = vpop.permute.xlu0 %2188
        %2190 = vrot.lane.b32.xlu0 %v2183, 73
        %v2191 = vpop.permute.xlu0 %2190
        %v2192 = vsel %vm369, %v2185, %v2187
        %v2193 = vsel %vm369, %v2187, %v2189
        %v2194 = vsel %vm369, %v2189, %v2191
        %v2200 = vmul.f32 %v2160, %v2185
        %v2201 = vmul.f32 %v2161, %v2192
        %v2202 = vmul.f32 %v2162, %v2193
        %v2203 = vmul.f32 %v2163, %v2194
        %v2204 = vmul.f32 %v2164, %v2191
        %2210 = vrot.lane.b32.xlu0 %v2200, 55
        %v2211 = vpop.permute.xlu0 %2210
        %2212 = vrot.lane.b32.xlu0 %v2201, 55
        %v2213 = vpop.permute.xlu0 %2212
        %2214 = vrot.lane.b32.xlu0 %v2202, 55
        %v2215 = vpop.permute.xlu0 %2214
        %2216 = vrot.lane.b32.xlu0 %v2203, 55
        %v2217 = vpop.permute.xlu0 %2216
        %2218 = vrot.lane.b32.xlu0 %v2204, 55
        %v2219 = vpop.permute.xlu0 %2218
        %v2220 = vsel %vm340, %v2211, %v2213
        %v2221 = vsel %vm340, %v2213, %v2215
        %v2222 = vsel %vm340, %v2215, %v2217
        %v2223 = vsel %vm340, %v2217, %v2219
        %2228 = vst [vmem:[#allocation3 + $0x340] sm:$0xff] %v2220
        %2229 = vst [vmem:[#allocation3 + $0x348] sm:$0xff] %v2221
        %2230 = vst [vmem:[#allocation3 + $0x350] sm:$0xff] %v2222
        %2231 = vst [vmem:[#allocation3 + $0x358] sm:$0xff] %v2223
        %v2232 = vld [vmem:[%s1] sm:$0xff]
        %v2233 = vld [vmem:[%s1 + $0x8] sm:$0xff]
        %v2234 = vld [vmem:[#allocation3] sm:$0xff]
        %v2235 = vld [vmem:[#allocation3 + $0x8] sm:$0xff]
        %v2236 = vld [vmem:[#allocation3 + $0x10] sm:$0xff]
        %v2237 = vld [vmem:[#allocation3 + $0x18] sm:$0xff]
        %v2238 = vld [vmem:[#allocation3 + $0x20] sm:$0xff]
        %v2239 = vld [vmem:[#allocation3 + $0x28] sm:$0xff]
        %v2240 = vld [vmem:[#allocation3 + $0x30] sm:$0xff]
        %v2241 = vld [vmem:[#allocation3 + $0x38] sm:$0xff]
        %v2242 = vld [vmem:[#allocation3 + $0x40] sm:$0xff]
        %v2243 = vld [vmem:[#allocation3 + $0x48] sm:$0xff]
        %v2244 = vld [vmem:[#allocation3 + $0x50] sm:$0xff]
        %v2245 = vld [vmem:[#allocation3 + $0x58] sm:$0xff]
        %v2246 = vld [vmem:[#allocation3 + $0x60] sm:$0xff]
        %v2247 = vld [vmem:[#allocation3 + $0x68] sm:$0xff]
        %v2248 = vld [vmem:[#allocation3 + $0x70] sm:$0xff]
        %v2249 = vld [vmem:[#allocation3 + $0x78] sm:$0xff]
        %v2250 = vld [vmem:[#allocation3 + $0x80] sm:$0xff]
        %v2251 = vld [vmem:[#allocation3 + $0x88] sm:$0xff]
        %v2252 = vld [vmem:[#allocation3 + $0x90] sm:$0xff]
        %v2253 = vld [vmem:[#allocation3 + $0x98] sm:$0xff]
        %v2254 = vld [vmem:[#allocation3 + $0xa0] sm:$0xff]
        %v2255 = vld [vmem:[#allocation3 + $0xa8] sm:$0xff]
        %v2256 = vld [vmem:[#allocation3 + $0xb0] sm:$0xff]
        %v2257 = vld [vmem:[#allocation3 + $0xb8] sm:$0xff]
        %v2258 = vld [vmem:[#allocation3 + $0xc0] sm:$0xff]
        %v2259 = vld [vmem:[#allocation3 + $0xc8] sm:$0xff]
        %v2260 = vld [vmem:[#allocation3 + $0xd0] sm:$0xff]
        %v2261 = vld [vmem:[#allocation3 + $0xd8] sm:$0xff]
        %v2262 = vld [vmem:[#allocation3 + $0xe0] sm:$0xff]
        %v2263 = vld [vmem:[#allocation3 + $0xe8] sm:$0xff]
        %v2264 = vld [vmem:[#allocation3 + $0xf0] sm:$0xff]
        %v2265 = vld [vmem:[#allocation3 + $0xf8] sm:$0xff]
        %v2266 = vld [vmem:[#allocation3 + $0x100] sm:$0xff]
        %v2267 = vld [vmem:[#allocation3 + $0x108] sm:$0xff]
        %v2268 = vld [vmem:[#allocation3 + $0x110] sm:$0xff]
        %v2269 = vld [vmem:[#allocation3 + $0x118] sm:$0xff]
        %v2270 = vld [vmem:[#allocation3 + $0x120] sm:$0xff]
        %v2271 = vld [vmem:[#allocation3 + $0x128] sm:$0xff]
        %v2272 = vld [vmem:[#allocation3 + $0x130] sm:$0xff]
        %v2273 = vld [vmem:[#allocation3 + $0x138] sm:$0xff]
        %v2274 = vld [vmem:[#allocation3 + $0x140] sm:$0xff]
        %v2275 = vld [vmem:[#allocation3 + $0x148] sm:$0xff]
        %v2276 = vld [vmem:[#allocation3 + $0x150] sm:$0xff]
        %v2277 = vld [vmem:[#allocation3 + $0x158] sm:$0xff]
        %v2278 = vld [vmem:[#allocation3 + $0x160] sm:$0xff]
        %v2279 = vld [vmem:[#allocation3 + $0x168] sm:$0xff]
        %v2280 = vld [vmem:[#allocation3 + $0x170] sm:$0xff]
        %v2281 = vld [vmem:[#allocation3 + $0x178] sm:$0xff]
        %v2282 = vld [vmem:[#allocation3 + $0x180] sm:$0xff]
        %v2283 = vld [vmem:[#allocation3 + $0x188] sm:$0xff]
        %v2284 = vld [vmem:[#allocation3 + $0x190] sm:$0xff]
        %v2285 = vld [vmem:[#allocation3 + $0x198] sm:$0xff]
        %v2286 = vld [vmem:[#allocation3 + $0x1a0] sm:$0xff]
        %v2287 = vld [vmem:[#allocation3 + $0x1a8] sm:$0xff]
        %v2288 = vld [vmem:[#allocation3 + $0x1b0] sm:$0xff]
        %v2289 = vld [vmem:[#allocation3 + $0x1b8] sm:$0xff]
        %v2290 = vld [vmem:[#allocation3 + $0x1c0] sm:$0xff]
        %v2291 = vld [vmem:[#allocation3 + $0x1c8] sm:$0xff]
        %v2292 = vld [vmem:[#allocation3 + $0x1d0] sm:$0xff]
        %v2293 = vld [vmem:[#allocation3 + $0x1d8] sm:$0xff]
        %v2294 = vld [vmem:[#allocation3 + $0x1e0] sm:$0xff]
        %v2295 = vld [vmem:[#allocation3 + $0x1e8] sm:$0xff]
        %v2296 = vld [vmem:[#allocation3 + $0x1f0] sm:$0xff]
        %v2297 = vld [vmem:[#allocation3 + $0x1f8] sm:$0xff]
        %v2298 = vld [vmem:[#allocation3 + $0x200] sm:$0xff]
        %v2299 = vld [vmem:[#allocation3 + $0x208] sm:$0xff]
        %v2300 = vld [vmem:[#allocation3 + $0x210] sm:$0xff]
        %v2301 = vld [vmem:[#allocation3 + $0x218] sm:$0xff]
        %v2302 = vld [vmem:[#allocation3 + $0x220] sm:$0xff]
        %v2303 = vld [vmem:[#allocation3 + $0x228] sm:$0xff]
        %v2304 = vld [vmem:[#allocation3 + $0x230] sm:$0xff]
        %v2305 = vld [vmem:[#allocation3 + $0x238] sm:$0xff]
        %v2306 = vld [vmem:[#allocation3 + $0x240] sm:$0xff]
        %v2307 = vld [vmem:[#allocation3 + $0x248] sm:$0xff]
        %v2308 = vld [vmem:[#allocation3 + $0x250] sm:$0xff]
        %v2309 = vld [vmem:[#allocation3 + $0x258] sm:$0xff]
        %v2310 = vld [vmem:[#allocation3 + $0x260] sm:$0xff]
        %v2311 = vld [vmem:[#allocation3 + $0x268] sm:$0xff]
        %v2312 = vld [vmem:[#allocation3 + $0x270] sm:$0xff]
        %v2313 = vld [vmem:[#allocation3 + $0x278] sm:$0xff]
        %v2314 = vld [vmem:[#allocation3 + $0x280] sm:$0xff]
        %v2315 = vld [vmem:[#allocation3 + $0x288] sm:$0xff]
        %v2316 = vld [vmem:[#allocation3 + $0x290] sm:$0xff]
        %v2317 = vld [vmem:[#allocation3 + $0x298] sm:$0xff]
        %v2318 = vld [vmem:[#allocation3 + $0x2a0] sm:$0xff]
        %v2319 = vld [vmem:[#allocation3 + $0x2a8] sm:$0xff]
        %v2320 = vld [vmem:[#allocation3 + $0x2b0] sm:$0xff]
        %v2321 = vld [vmem:[#allocation3 + $0x2b8] sm:$0xff]
        %v2322 = vld [vmem:[#allocation3 + $0x2c0] sm:$0xff]
        %v2323 = vld [vmem:[#allocation3 + $0x2c8] sm:$0xff]
        %v2324 = vld [vmem:[#allocation3 + $0x2d0] sm:$0xff]
        %v2325 = vld [vmem:[#allocation3 + $0x2d8] sm:$0xff]
        %v2326 = vld [vmem:[#allocation3 + $0x2e0] sm:$0xff]
        %v2327 = vld [vmem:[#allocation3 + $0x2e8] sm:$0xff]
        %v2328 = vld [vmem:[#allocation3 + $0x2f0] sm:$0xff]
        %v2329 = vld [vmem:[#allocation3 + $0x2f8] sm:$0xff]
        %v2330 = vld [vmem:[#allocation3 + $0x300] sm:$0xff]
        %v2331 = vld [vmem:[#allocation3 + $0x308] sm:$0xff]
        %v2332 = vld [vmem:[#allocation3 + $0x310] sm:$0xff]
        %v2333 = vld [vmem:[#allocation3 + $0x318] sm:$0xff]
        %v2334 = vld [vmem:[#allocation3 + $0x320] sm:$0xff]
        %v2335 = vld [vmem:[#allocation3 + $0x328] sm:$0xff]
        %v2336 = vld [vmem:[#allocation3 + $0x330] sm:$0xff]
        %v2337 = vld [vmem:[#allocation3 + $0x338] sm:$0xff]
        %v2338 = vld [vmem:[#allocation3 + $0x340] sm:$0xff]
        %v2339 = vld [vmem:[#allocation3 + $0x348] sm:$0xff]
        %v2340 = vld [vmem:[#allocation3 + $0x350] sm:$0xff]
        %v2341 = vld [vmem:[#allocation3 + $0x358] sm:$0xff]
        %v2342 = vld [vmem:[%s2] sm:$0xff]
        %2344 = vset.pattern.permute.xlu0 0
        %2345 = vperm.xlu0 %2344, %v2342
        %v2346 = vpop.permute.xlu0 %2345
        %vm2348 = vcmask 719872
        %v2350 = vsel %vm2348, %v2233, 0
        %2352 = vmatprep.subr.mxu0 %v2235
        %2353 = vmatpush1.msra.mxu0 %v2234
        %2354 = vmatprep.subr.mxu0 %v2239
        %2355 = vmatpush1.msra.mxu0 %v2238
        %2356 = vmatprep.subr.mxu0 %v2243
        %2357 = vmatpush1.msra.mxu0 %v2242
        %2358 = vmatprep.subr.mxu0 %v2247
        %2359 = vmatpush1.msra.mxu0 %v2246
        %2360 = vmatprep.subr.mxu0 %v2251
        %2361 = vmatpush1.msra.mxu0 %v2250
        %2362 = vmatprep.subr.mxu0 %v2255
        %2363 = vmatpush1.msra.mxu0 %v2254
        %2364 = vmatprep.subr.mxu0 %v2259
        %2365 = vmatpush1.msra.mxu0 %v2258
        %2366 = vmatprep.subr.mxu0 %v2263
        %2367 = vmatpush1.msra.mxu0 %v2262
        %2368 = vmatprep.subr.mxu0 %v2267
        %2369 = vmatpush1.msra.mxu0 %v2266
        %2370 = vmatprep.subr.mxu0 %v2271
        %2371 = vmatpush1.msra.mxu0 %v2270
        %2372 = vmatprep.subr.mxu0 %v2275
        %2373 = vmatpush1.msra.mxu0 %v2274
        %2374 = vmatprep.subr.mxu0 %v2279
        %2375 = vmatpush1.msra.mxu0 %v2278
        %2376 = vmatprep.subr.mxu0 %v2283
        %2377 = vmatpush1.msra.mxu0 %v2282
        %2378 = vmatprep.subr.mxu0 %v2287
        %2379 = vmatpush1.msra.mxu0 %v2286
        %2380 = vmatprep.subr.mxu0 %v2291
        %2381 = vmatpush1.msra.mxu0 %v2290
        %2382 = vmatprep.subr.mxu0 %v2295
        %2383 = vmatpush1.msra.mxu0 %v2294
        %2384 = vmatprep.subr.mxu0 %v2299
        %2385 = vmatpush1.msra.mxu0 %v2298
        %2386 = vmatprep.subr.mxu0 %v2303
        %2387 = vmatpush1.msra.mxu0 %v2302
        %2388 = vmatprep.subr.mxu0 %v2307
        %2389 = vmatpush1.msra.mxu0 %v2306
        %2390 = vmatprep.subr.mxu0 %v2311
        %2391 = vmatpush1.msra.mxu0 %v2310
        %2392 = vmatprep.subr.mxu0 %v2315
        %2393 = vmatpush1.msra.mxu0 %v2314
        %2394 = vmatprep.subr.mxu0 %v2319
        %2395 = vmatpush1.msra.mxu0 %v2318
        %2396 = vmatprep.subr.mxu0 %v2323
        %2397 = vmatpush1.msra.mxu0 %v2322
        %2398 = vmatprep.subr.mxu0 %v2327
        %2399 = vmatpush1.msra.mxu0 %v2326
        %2400 = vmatprep.subr.mxu0 %v2331
        %2401 = vmatpush1.msra.mxu0 %v2330
        %2402 = vmatprep.subr.mxu0 %v2335
        %2403 = vmatpush1.msra.mxu0 %v2334
        %2404 = vmatprep.subr.mxu0 %v2339
        %2405 = vmatpush1.msra.mxu0 %v2338
        %2406 = vmatprep.subr.mxu0 0.0
        %2407 = vmatpush1.msra.mxu0 0.0
        %2408 = vmatprep.subr.mxu0 0.0
        %2409 = vmatpush1.msra.mxu0 0.0
        %2410 = vmatprep.subr.mxu0 0.0
        %2411 = vmatpush1.msra.mxu0 0.0
        %2412 = vmatprep.subr.mxu0 0.0
        %2413 = vmatpush1.msra.mxu0 0.0
        %2414 = vmatprep.subr.mxu0 0.0
        %2415 = vmatpush1.msra.mxu0 0.0
        %2416 = vmatprep.mubr.f32.mxu0 %v2350
        %2417 = vmatmul.mubr.f32.gmra.mrb[0].mxu0 %v2232
        %v2418 = vpop.f32.mrb[0].mxu0
        %v2419 = vadd.f32 %v2346, %v2418
        %v2420 = vpop.f32.mrb[0].mxu0
        %v2421 = vadd.f32 %v2346, %v2420
        %2422 = vdwg.mxu0
        %2423 = vmatprep.subr.mxu0 %v2237
        %2424 = vmatpush1.msra.mxu0 %v2236
        %2425 = vmatprep.subr.mxu0 %v2241
        %2426 = vmatpush1.msra.mxu0 %v2240
        %2427 = vmatprep.subr.mxu0 %v2245
        %2428 = vmatpush1.msra.mxu0 %v2244
        %2429 = vmatprep.subr.mxu0 %v2249
        %2430 = vmatpush1.msra.mxu0 %v2248
        %2431 = vmatprep.subr.mxu0 %v2253
        %2432 = vmatpush1.msra.mxu0 %v2252
        %2433 = vmatprep.subr.mxu0 %v2257
        %2434 = vmatpush1.msra.mxu0 %v2256
        %2435 = vmatprep.subr.mxu0 %v2261
        %2436 = vmatpush1.msra.mxu0 %v2260
        %2437 = vmatprep.subr.mxu0 %v2265
        %2438 = vmatpush1.msra.mxu0 %v2264
        %2439 = vmatprep.subr.mxu0 %v2269
        %2440 = vmatpush1.msra.mxu0 %v2268
        %2441 = vmatprep.subr.mxu0 %v2273
        %2442 = vmatpush1.msra.mxu0 %v2272
        %2443 = vmatprep.subr.mxu0 %v2277
        %2444 = vmatpush1.msra.mxu0 %v2276
        %2445 = vmatprep.subr.mxu0 %v2281
        %2446 = vmatpush1.msra.mxu0 %v2280
        %2447 = vmatprep.subr.mxu0 %v2285
        %2448 = vmatpush1.msra.mxu0 %v2284
        %2449 = vmatprep.subr.mxu0 %v2289
        %2450 = vmatpush1.msra.mxu0 %v2288
        %2451 = vmatprep.subr.mxu0 %v2293
        %2452 = vmatpush1.msra.mxu0 %v2292
        %2453 = vmatprep.subr.mxu0 %v2297
        %2454 = vmatpush1.msra.mxu0 %v2296
        %2455 = vmatprep.subr.mxu0 %v2301
        %2456 = vmatpush1.msra.mxu0 %v2300
        %2457 = vmatprep.subr.mxu0 %v2305
        %2458 = vmatpush1.msra.mxu0 %v2304
        %2459 = vmatprep.subr.mxu0 %v2309
        %2460 = vmatpush1.msra.mxu0 %v2308
        %2461 = vmatprep.subr.mxu0 %v2313
        %2462 = vmatpush1.msra.mxu0 %v2312
        %2463 = vmatprep.subr.mxu0 %v2317
        %2464 = vmatpush1.msra.mxu0 %v2316
        %2465 = vmatprep.subr.mxu0 %v2321
        %2466 = vmatpush1.msra.mxu0 %v2320
        %2467 = vmatprep.subr.mxu0 %v2325
        %2468 = vmatpush1.msra.mxu0 %v2324
        %2469 = vmatprep.subr.mxu0 %v2329
        %2470 = vmatpush1.msra.mxu0 %v2328
        %2471 = vmatprep.subr.mxu0 %v2333
        %2472 = vmatpush1.msra.mxu0 %v2332
        %2473 = vmatprep.subr.mxu0 %v2337
        %2474 = vmatpush1.msra.mxu0 %v2336
        %2475 = vmatprep.subr.mxu0 %v2341
        %2476 = vmatpush1.msra.mxu0 %v2340
        %2477 = vmatprep.subr.mxu0 0.0
        %2478 = vmatpush1.msra.mxu0 0.0
        %2479 = vmatprep.subr.mxu0 0.0
        %2480 = vmatpush1.msra.mxu0 0.0
        %2481 = vmatprep.subr.mxu0 0.0
        %2482 = vmatpush1.msra.mxu0 0.0
        %2483 = vmatprep.subr.mxu0 0.0
        %2484 = vmatpush1.msra.mxu0 0.0
        %2485 = vmatprep.subr.mxu0 0.0
        %2486 = vmatpush1.msra.mxu0 0.0
        %2487 = vmatprep.mubr.f32.mxu0 %v2350
        %2488 = vmatmul.mubr.f32.gmra.mrb[0].mxu0 %v2232
        %v2489 = vpop.f32.mrb[0].mxu0
        %v2490 = vadd.f32 %v2346, %v2489
        %v2491 = vpop.f32.mrb[0].mxu0
        %v2492 = vadd.f32 %v2346, %v2491
        %2493 = vdwg.mxu0
        %v2494 = vmax.f32 %v2419, 0.0
        %v2495 = vmax.f32 %v2421, 0.0
        %v2496 = vmax.f32 %v2490, 0.0
        %v2497 = vmax.f32 %v2492, 0.0
        %2498 = vst [vmem:[#allocation2 + $0x8] sm:$0xff] %v2494
        %2499 = vst [vmem:[#allocation2 + $0x10] sm:$0xff] %v2495
        %2500 = vst [vmem:[#allocation2 + $0x18] sm:$0xff] %v2496
        %2501 = vst [vmem:[#allocation2 + $0x20] sm:$0xff] %v2497
        %v2502 = vld [vmem:[#allocation2] sm:$0xff]
        %v2503 = vld [vmem:[#allocation2 + $0x8] sm:$0xff]
        %v2504 = vld [vmem:[#allocation2 + $0x10] sm:$0xff]
        %v2505 = vld [vmem:[#allocation2 + $0x18] sm:$0xff]
        %v2506 = vld [vmem:[#allocation2 + $0x20] sm:$0xff]
        %v2507 = vld [vmem:[#allocation9] sm:$0xf]
        %v2509 = vlaneseq
        %v2510 = vshrl.u32 %v2509, 7
        %v2511 = vsub.s32 0, %v2510
        %v2512 = vrot.slane %v2507, %v2511
        %v2513 = vlaneseq
        %v2514 = vshrl.u32 %v2513, 7
        %v2515 = vsub.s32 1, %v2514
        %v2516 = vrot.slane %v2507, %v2515
        %v2517 = vlaneseq
        %v2518 = vshrl.u32 %v2517, 7
        %v2519 = vsub.s32 2, %v2518
        %v2520 = vrot.slane %v2507, %v2519
        %v2521 = vlaneseq
        %v2522 = vshrl.u32 %v2521, 7
        %v2523 = vsub.s32 3, %v2522
        %v2524 = vrot.slane %v2507, %v2523
        %2525 = vrot.lane.b32.xlu0 %v2512, 55
        %v2526 = vpop.permute.xlu0 %2525
        %2527 = vrot.lane.b32.xlu0 %v2516, 55
        %v2528 = vpop.permute.xlu0 %2527
        %2529 = vrot.lane.b32.xlu0 %v2520, 55
        %v2530 = vpop.permute.xlu0 %2529
        %2531 = vrot.lane.b32.xlu0 %v2524, 55
        %v2532 = vpop.permute.xlu0 %2531
        %v2533 = vsel %vm340, %v2526, %v2528
        %v2534 = vsel %vm340, %v2528, %v2530
        %v2535 = vsel %vm340, %v2530, %v2532
        %v2541 = vmul.f32 %v2502, %v2526
        %v2542 = vmul.f32 %v2503, %v2533
        %v2543 = vmul.f32 %v2504, %v2534
        %v2544 = vmul.f32 %v2505, %v2535
        %v2545 = vmul.f32 %v2506, %v2532
        %2551 = vrot.lane.b32.xlu0 %v2541, 73
        %v2552 = vpop.permute.xlu0 %2551
        %2553 = vrot.lane.b32.xlu0 %v2542, 73
        %v2554 = vpop.permute.xlu0 %2553
        %2555 = vrot.lane.b32.xlu0 %v2543, 73
        %v2556 = vpop.permute.xlu0 %2555
        %2557 = vrot.lane.b32.xlu0 %v2544, 73
        %v2558 = vpop.permute.xlu0 %2557
        %2559 = vrot.lane.b32.xlu0 %v2545, 73
        %v2560 = vpop.permute.xlu0 %2559
        %v2561 = vsel %vm369, %v2552, %v2554
        %v2562 = vsel %vm369, %v2554, %v2556
        %v2563 = vsel %vm369, %v2556, %v2558
        %v2564 = vsel %vm369, %v2558, %v2560
        %2569 = vst [vmem:[#allocation3] sm:$0xff] %v2561
        %2570 = vst [vmem:[#allocation3 + $0x8] sm:$0xff] %v2562
        %2571 = vst [vmem:[#allocation3 + $0x10] sm:$0xff] %v2563
        %2572 = vst [vmem:[#allocation3 + $0x18] sm:$0xff] %v2564
        %v2573 = vld [vmem:[#allocation2] sm:$0xff]
        %v2574 = vld [vmem:[#allocation2 + $0x8] sm:$0xff]
        %v2575 = vld [vmem:[#allocation2 + $0x10] sm:$0xff]
        %v2576 = vld [vmem:[#allocation2 + $0x18] sm:$0xff]
        %v2577 = vld [vmem:[#allocation2 + $0x20] sm:$0xff]
        %v2578 = vld [vmem:[%s387] sm:$0xf]
        %v2580 = vlaneseq
        %v2581 = vshrl.u32 %v2580, 7
        %v2582 = vsub.s32 0, %v2581
        %v2583 = vrot.slane %v2578, %v2582
        %v2584 = vlaneseq
        %v2585 = vshrl.u32 %v2584, 7
        %v2586 = vsub.s32 1, %v2585
        %v2587 = vrot.slane %v2578, %v2586
        %v2588 = vlaneseq
        %v2589 = vshrl.u32 %v2588, 7
        %v2590 = vsub.s32 2, %v2589
        %v2591 = vrot.slane %v2578, %v2590
        %v2592 = vlaneseq
        %v2593 = vshrl.u32 %v2592, 7
        %v2594 = vsub.s32 3, %v2593
        %v2595 = vrot.slane %v2578, %v2594
        %2596 = vrot.lane.b32.xlu0 %v2583, 56
        %v2597 = vpop.permute.xlu0 %2596
        %2598 = vrot.lane.b32.xlu0 %v2587, 56
        %v2599 = vpop.permute.xlu0 %2598
        %2600 = vrot.lane.b32.xlu0 %v2591, 56
        %v2601 = vpop.permute.xlu0 %2600
        %2602 = vrot.lane.b32.xlu0 %v2595, 56
        %v2603 = vpop.permute.xlu0 %2602
        %v2604 = vsel %vm414, %v2597, %v2599
        %v2605 = vsel %vm414, %v2599, %v2601
        %v2606 = vsel %vm414, %v2601, %v2603
        %v2612 = vmul.f32 %v2573, %v2597
        %v2613 = vmul.f32 %v2574, %v2604
        %v2614 = vmul.f32 %v2575, %v2605
        %v2615 = vmul.f32 %v2576, %v2606
        %v2616 = vmul.f32 %v2577, %v2603
        %2622 = vrot.lane.b32.xlu0 %v2612, 72
        %v2623 = vpop.permute.xlu0 %2622
        %2624 = vrot.lane.b32.xlu0 %v2613, 72
        %v2625 = vpop.permute.xlu0 %2624
        %2626 = vrot.lane.b32.xlu0 %v2614, 72
        %v2627 = vpop.permute.xlu0 %2626
        %2628 = vrot.lane.b32.xlu0 %v2615, 72
        %v2629 = vpop.permute.xlu0 %2628
        %2630 = vrot.lane.b32.xlu0 %v2616, 72
        %v2631 = vpop.permute.xlu0 %2630
        %v2632 = vsel %vm443, %v2623, %v2625
        %v2633 = vsel %vm443, %v2625, %v2627
        %v2634 = vsel %vm443, %v2627, %v2629
        %v2635 = vsel %vm443, %v2629, %v2631
        %2640 = vst [vmem:[#allocation3 + $0x20] sm:$0xff] %v2632
        %2641 = vst [vmem:[#allocation3 + $0x28] sm:$0xff] %v2633
        %2642 = vst [vmem:[#allocation3 + $0x30] sm:$0xff] %v2634
        %2643 = vst [vmem:[#allocation3 + $0x38] sm:$0xff] %v2635
        %v2644 = vld [vmem:[#allocation2] sm:$0xff]
        %v2645 = vld [vmem:[#allocation2 + $0x8] sm:$0xff]
        %v2646 = vld [vmem:[#allocation2 + $0x10] sm:$0xff]
        %v2647 = vld [vmem:[#allocation2 + $0x18] sm:$0xff]
        %v2648 = vld [vmem:[#allocation2 + $0x20] sm:$0xff]
        %v2649 = vld [vmem:[%s461] sm:$0xf]
        %v2651 = vlaneseq
        %v2652 = vshrl.u32 %v2651, 7
        %v2653 = vsub.s32 0, %v2652
        %v2654 = vrot.slane %v2649, %v2653
        %v2655 = vlaneseq
        %v2656 = vshrl.u32 %v2655, 7
        %v2657 = vsub.s32 1, %v2656
        %v2658 = vrot.slane %v2649, %v2657
        %v2659 = vlaneseq
        %v2660 = vshrl.u32 %v2659, 7
        %v2661 = vsub.s32 2, %v2660
        %v2662 = vrot.slane %v2649, %v2661
        %v2663 = vlaneseq
        %v2664 = vshrl.u32 %v2663, 7
        %v2665 = vsub.s32 3, %v2664
        %v2666 = vrot.slane %v2649, %v2665
        %2667 = vrot.lane.b32.xlu0 %v2654, 57
        %v2668 = vpop.permute.xlu0 %2667
        %2669 = vrot.lane.b32.xlu0 %v2658, 57
        %v2670 = vpop.permute.xlu0 %2669
        %2671 = vrot.lane.b32.xlu0 %v2662, 57
        %v2672 = vpop.permute.xlu0 %2671
        %2673 = vrot.lane.b32.xlu0 %v2666, 57
        %v2674 = vpop.permute.xlu0 %2673
        %v2675 = vsel %vm488, %v2668, %v2670
        %v2676 = vsel %vm488, %v2670, %v2672
        %v2677 = vsel %vm488, %v2672, %v2674
        %v2683 = vmul.f32 %v2644, %v2668
        %v2684 = vmul.f32 %v2645, %v2675
        %v2685 = vmul.f32 %v2646, %v2676
        %v2686 = vmul.f32 %v2647, %v2677
        %v2687 = vmul.f32 %v2648, %v2674
        %2693 = vrot.lane.b32.xlu0 %v2683, 71
        %v2694 = vpop.permute.xlu0 %2693
        %2695 = vrot.lane.b32.xlu0 %v2684, 71
        %v2696 = vpop.permute.xlu0 %2695
        %2697 = vrot.lane.b32.xlu0 %v2685, 71
        %v2698 = vpop.permute.xlu0 %2697
        %2699 = vrot.lane.b32.xlu0 %v2686, 71
        %v2700 = vpop.permute.xlu0 %2699
        %2701 = vrot.lane.b32.xlu0 %v2687, 71
        %v2702 = vpop.permute.xlu0 %2701
        %v2703 = vsel %vm517, %v2694, %v2696
        %v2704 = vsel %vm517, %v2696, %v2698
        %v2705 = vsel %vm517, %v2698, %v2700
        %v2706 = vsel %vm517, %v2700, %v2702
        %2711 = vst [vmem:[#allocation3 + $0x40] sm:$0xff] %v2703
        %2712 = vst [vmem:[#allocation3 + $0x48] sm:$0xff] %v2704
        %2713 = vst [vmem:[#allocation3 + $0x50] sm:$0xff] %v2705
        %2714 = vst [vmem:[#allocation3 + $0x58] sm:$0xff] %v2706
        %v2715 = vld [vmem:[#allocation2] sm:$0xff]
        %v2716 = vld [vmem:[#allocation2 + $0x8] sm:$0xff]
        %v2717 = vld [vmem:[#allocation2 + $0x10] sm:$0xff]
        %v2718 = vld [vmem:[#allocation2 + $0x18] sm:$0xff]
        %v2719 = vld [vmem:[#allocation2 + $0x20] sm:$0xff]
        %v2720 = vld [vmem:[%s535] sm:$0xf]
        %v2722 = vlaneseq
        %v2723 = vshrl.u32 %v2722, 7
        %v2724 = vsub.s32 0, %v2723
        %v2725 = vrot.slane %v2720, %v2724
        %v2726 = vlaneseq
        %v2727 = vshrl.u32 %v2726, 7
        %v2728 = vsub.s32 1, %v2727
        %v2729 = vrot.slane %v2720, %v2728
        %v2730 = vlaneseq
        %v2731 = vshrl.u32 %v2730, 7
        %v2732 = vsub.s32 2, %v2731
        %v2733 = vrot.slane %v2720, %v2732
        %v2734 = vlaneseq
        %v2735 = vshrl.u32 %v2734, 7
        %v2736 = vsub.s32 3, %v2735
        %v2737 = vrot.slane %v2720, %v2736
        %2738 = vrot.lane.b32.xlu0 %v2725, 63
        %v2739 = vpop.permute.xlu0 %2738
        %2740 = vrot.lane.b32.xlu0 %v2729, 63
        %v2741 = vpop.permute.xlu0 %2740
        %2742 = vrot.lane.b32.xlu0 %v2733, 63
        %v2743 = vpop.permute.xlu0 %2742
        %2744 = vrot.lane.b32.xlu0 %v2737, 63
        %v2745 = vpop.permute.xlu0 %2744
        %v2746 = vsel %vm562, %v2739, %v2741
        %v2747 = vsel %vm562, %v2741, %v2743
        %v2748 = vsel %vm562, %v2743, %v2745
        %v2754 = vmul.f32 %v2715, %v2739
        %v2755 = vmul.f32 %v2716, %v2746
        %v2756 = vmul.f32 %v2717, %v2747
        %v2757 = vmul.f32 %v2718, %v2748
        %v2758 = vmul.f32 %v2719, %v2745
        %2764 = vrot.lane.b32.xlu0 %v2754, 65
        %v2765 = vpop.permute.xlu0 %2764
        %2766 = vrot.lane.b32.xlu0 %v2755, 65
        %v2767 = vpop.permute.xlu0 %2766
        %2768 = vrot.lane.b32.xlu0 %v2756, 65
        %v2769 = vpop.permute.xlu0 %2768
        %2770 = vrot.lane.b32.xlu0 %v2757, 65
        %v2771 = vpop.permute.xlu0 %2770
        %2772 = vrot.lane.b32.xlu0 %v2758, 65
        %v2773 = vpop.permute.xlu0 %2772
        %v2774 = vsel %vm591, %v2765, %v2767
        %v2775 = vsel %vm591, %v2767, %v2769
        %v2776 = vsel %vm591, %v2769, %v2771
        %v2777 = vsel %vm591, %v2771, %v2773
        %2782 = vst [vmem:[#allocation3 + $0x60] sm:$0xff] %v2774
        %2783 = vst [vmem:[#allocation3 + $0x68] sm:$0xff] %v2775
        %2784 = vst [vmem:[#allocation3 + $0x70] sm:$0xff] %v2776
        %2785 = vst [vmem:[#allocation3 + $0x78] sm:$0xff] %v2777
        %v2786 = vld [vmem:[#allocation2] sm:$0xff]
        %v2787 = vld [vmem:[#allocation2 + $0x8] sm:$0xff]
        %v2788 = vld [vmem:[#allocation2 + $0x10] sm:$0xff]
        %v2789 = vld [vmem:[#allocation2 + $0x18] sm:$0xff]
        %v2790 = vld [vmem:[#allocation2 + $0x20] sm:$0xff]
        %v2791 = vld [vmem:[%s609] sm:$0xf]
        %v2793 = vlaneseq
        %v2794 = vshrl.u32 %v2793, 7
        %v2795 = vsub.s32 0, %v2794
        %v2796 = vrot.slane %v2791, %v2795
        %v2797 = vlaneseq
        %v2798 = vshrl.u32 %v2797, 7
        %v2799 = vsub.s32 1, %v2798
        %v2800 = vrot.slane %v2791, %v2799
        %v2801 = vlaneseq
        %v2802 = vshrl.u32 %v2801, 7
        %v2803 = vsub.s32 2, %v2802
        %v2804 = vrot.slane %v2791, %v2803
        %v2805 = vlaneseq
        %v2806 = vshrl.u32 %v2805, 7
        %v2807 = vsub.s32 3, %v2806
        %v2808 = vrot.slane %v2791, %v2807
        %2809 = vrot.lane.b32.xlu0 %v2796, 64
        %v2810 = vpop.permute.xlu0 %2809
        %2811 = vrot.lane.b32.xlu0 %v2800, 64
        %v2812 = vpop.permute.xlu0 %2811
        %2813 = vrot.lane.b32.xlu0 %v2804, 64
        %v2814 = vpop.permute.xlu0 %2813
        %2815 = vrot.lane.b32.xlu0 %v2808, 64
        %v2816 = vpop.permute.xlu0 %2815
        %v2817 = vsel %vm636, %v2810, %v2812
        %v2818 = vsel %vm636, %v2812, %v2814
        %v2819 = vsel %vm636, %v2814, %v2816
        %v2825 = vmul.f32 %v2786, %v2810
        %v2826 = vmul.f32 %v2787, %v2817
        %v2827 = vmul.f32 %v2788, %v2818
        %v2828 = vmul.f32 %v2789, %v2819
        %v2829 = vmul.f32 %v2790, %v2816
        %2835 = vrot.lane.b32.xlu0 %v2825, 64
        %v2836 = vpop.permute.xlu0 %2835
        %2837 = vrot.lane.b32.xlu0 %v2826, 64
        %v2838 = vpop.permute.xlu0 %2837
        %2839 = vrot.lane.b32.xlu0 %v2827, 64
        %v2840 = vpop.permute.xlu0 %2839
        %2841 = vrot.lane.b32.xlu0 %v2828, 64
        %v2842 = vpop.permute.xlu0 %2841
        %2843 = vrot.lane.b32.xlu0 %v2829, 64
        %v2844 = vpop.permute.xlu0 %2843
        %v2845 = vsel %vm636, %v2836, %v2838
        %v2846 = vsel %vm636, %v2838, %v2840
        %v2847 = vsel %vm636, %v2840, %v2842
        %v2848 = vsel %vm636, %v2842, %v2844
        %2853 = vst [vmem:[#allocation3 + $0x80] sm:$0xff] %v2845
        %2854 = vst [vmem:[#allocation3 + $0x88] sm:$0xff] %v2846
        %2855 = vst [vmem:[#allocation3 + $0x90] sm:$0xff] %v2847
        %2856 = vst [vmem:[#allocation3 + $0x98] sm:$0xff] %v2848
        %v2857 = vld [vmem:[#allocation2] sm:$0xff]
        %v2858 = vld [vmem:[#allocation2 + $0x8] sm:$0xff]
        %v2859 = vld [vmem:[#allocation2 + $0x10] sm:$0xff]
        %v2860 = vld [vmem:[#allocation2 + $0x18] sm:$0xff]
        %v2861 = vld [vmem:[#allocation2 + $0x20] sm:$0xff]
        %v2862 = vld [vmem:[%s682] sm:$0xf]
        %v2864 = vlaneseq
        %v2865 = vshrl.u32 %v2864, 7
        %v2866 = vsub.s32 0, %v2865
        %v2867 = vrot.slane %v2862, %v2866
        %v2868 = vlaneseq
        %v2869 = vshrl.u32 %v2868, 7
        %v2870 = vsub.s32 1, %v2869
        %v2871 = vrot.slane %v2862, %v2870
        %v2872 = vlaneseq
        %v2873 = vshrl.u32 %v2872, 7
        %v2874 = vsub.s32 2, %v2873
        %v2875 = vrot.slane %v2862, %v2874
        %v2876 = vlaneseq
        %v2877 = vshrl.u32 %v2876, 7
        %v2878 = vsub.s32 3, %v2877
        %v2879 = vrot.slane %v2862, %v2878
        %2880 = vrot.lane.b32.xlu0 %v2867, 65
        %v2881 = vpop.permute.xlu0 %2880
        %2882 = vrot.lane.b32.xlu0 %v2871, 65
        %v2883 = vpop.permute.xlu0 %2882
        %2884 = vrot.lane.b32.xlu0 %v2875, 65
        %v2885 = vpop.permute.xlu0 %2884
        %2886 = vrot.lane.b32.xlu0 %v2879, 65
        %v2887 = vpop.permute.xlu0 %2886
        %v2888 = vsel %vm591, %v2881, %v2883
        %v2889 = vsel %vm591, %v2883, %v2885
        %v2890 = vsel %vm591, %v2885, %v2887
        %v2896 = vmul.f32 %v2857, %v2881
        %v2897 = vmul.f32 %v2858, %v2888
        %v2898 = vmul.f32 %v2859, %v2889
        %v2899 = vmul.f32 %v2860, %v2890
        %v2900 = vmul.f32 %v2861, %v2887
        %2906 = vrot.lane.b32.xlu0 %v2896, 63
        %v2907 = vpop.permute.xlu0 %2906
        %2908 = vrot.lane.b32.xlu0 %v2897, 63
        %v2909 = vpop.permute.xlu0 %2908
        %2910 = vrot.lane.b32.xlu0 %v2898, 63
        %v2911 = vpop.permute.xlu0 %2910
        %2912 = vrot.lane.b32.xlu0 %v2899, 63
        %v2913 = vpop.permute.xlu0 %2912
        %2914 = vrot.lane.b32.xlu0 %v2900, 63
        %v2915 = vpop.permute.xlu0 %2914
        %v2916 = vsel %vm562, %v2907, %v2909
        %v2917 = vsel %vm562, %v2909, %v2911
        %v2918 = vsel %vm562, %v2911, %v2913
        %v2919 = vsel %vm562, %v2913, %v2915
        %2924 = vst [vmem:[#allocation3 + $0xa0] sm:$0xff] %v2916
        %2925 = vst [vmem:[#allocation3 + $0xa8] sm:$0xff] %v2917
        %2926 = vst [vmem:[#allocation3 + $0xb0] sm:$0xff] %v2918
        %2927 = vst [vmem:[#allocation3 + $0xb8] sm:$0xff] %v2919
        %v2928 = vld [vmem:[#allocation2] sm:$0xff]
        %v2929 = vld [vmem:[#allocation2 + $0x8] sm:$0xff]
        %v2930 = vld [vmem:[#allocation2 + $0x10] sm:$0xff]
        %v2931 = vld [vmem:[#allocation2 + $0x18] sm:$0xff]
        %v2932 = vld [vmem:[#allocation2 + $0x20] sm:$0xff]
        %v2933 = vld [vmem:[%s754] sm:$0xf]
        %v2935 = vlaneseq
        %v2936 = vshrl.u32 %v2935, 7
        %v2937 = vsub.s32 0, %v2936
        %v2938 = vrot.slane %v2933, %v2937
        %v2939 = vlaneseq
        %v2940 = vshrl.u32 %v2939, 7
        %v2941 = vsub.s32 1, %v2940
        %v2942 = vrot.slane %v2933, %v2941
        %v2943 = vlaneseq
        %v2944 = vshrl.u32 %v2943, 7
        %v2945 = vsub.s32 2, %v2944
        %v2946 = vrot.slane %v2933, %v2945
        %v2947 = vlaneseq
        %v2948 = vshrl.u32 %v2947, 7
        %v2949 = vsub.s32 3, %v2948
        %v2950 = vrot.slane %v2933, %v2949
        %2951 = vrot.lane.b32.xlu0 %v2938, 71
        %v2952 = vpop.permute.xlu0 %2951
        %2953 = vrot.lane.b32.xlu0 %v2942, 71
        %v2954 = vpop.permute.xlu0 %2953
        %2955 = vrot.lane.b32.xlu0 %v2946, 71
        %v2956 = vpop.permute.xlu0 %2955
        %2957 = vrot.lane.b32.xlu0 %v2950, 71
        %v2958 = vpop.permute.xlu0 %2957
        %v2959 = vsel %vm517, %v2952, %v2954
        %v2960 = vsel %vm517, %v2954, %v2956
        %v2961 = vsel %vm517, %v2956, %v2958
        %v2967 = vmul.f32 %v2928, %v2952
        %v2968 = vmul.f32 %v2929, %v2959
        %v2969 = vmul.f32 %v2930, %v2960
        %v2970 = vmul.f32 %v2931, %v2961
        %v2971 = vmul.f32 %v2932, %v2958
        %2977 = vrot.lane.b32.xlu0 %v2967, 57
        %v2978 = vpop.permute.xlu0 %2977
        %2979 = vrot.lane.b32.xlu0 %v2968, 57
        %v2980 = vpop.permute.xlu0 %2979
        %2981 = vrot.lane.b32.xlu0 %v2969, 57
        %v2982 = vpop.permute.xlu0 %2981
        %2983 = vrot.lane.b32.xlu0 %v2970, 57
        %v2984 = vpop.permute.xlu0 %2983
        %2985 = vrot.lane.b32.xlu0 %v2971, 57
        %v2986 = vpop.permute.xlu0 %2985
        %v2987 = vsel %vm488, %v2978, %v2980
        %v2988 = vsel %vm488, %v2980, %v2982
        %v2989 = vsel %vm488, %v2982, %v2984
        %v2990 = vsel %vm488, %v2984, %v2986
        %2995 = vst [vmem:[#allocation3 + $0xc0] sm:$0xff] %v2987
        %2996 = vst [vmem:[#allocation3 + $0xc8] sm:$0xff] %v2988
        %2997 = vst [vmem:[#allocation3 + $0xd0] sm:$0xff] %v2989
        %2998 = vst [vmem:[#allocation3 + $0xd8] sm:$0xff] %v2990
        %v2999 = vld [vmem:[#allocation2] sm:$0xff]
        %v3000 = vld [vmem:[#allocation2 + $0x8] sm:$0xff]
        %v3001 = vld [vmem:[#allocation2 + $0x10] sm:$0xff]
        %v3002 = vld [vmem:[#allocation2 + $0x18] sm:$0xff]
        %v3003 = vld [vmem:[#allocation2 + $0x20] sm:$0xff]
        %v3004 = vld [vmem:[%s826] sm:$0xf]
        %v3006 = vlaneseq
        %v3007 = vshrl.u32 %v3006, 7
        %v3008 = vsub.s32 0, %v3007
        %v3009 = vrot.slane %v3004, %v3008
        %v3010 = vlaneseq
        %v3011 = vshrl.u32 %v3010, 7
        %v3012 = vsub.s32 1, %v3011
        %v3013 = vrot.slane %v3004, %v3012
        %v3014 = vlaneseq
        %v3015 = vshrl.u32 %v3014, 7
        %v3016 = vsub.s32 2, %v3015
        %v3017 = vrot.slane %v3004, %v3016
        %v3018 = vlaneseq
        %v3019 = vshrl.u32 %v3018, 7
        %v3020 = vsub.s32 3, %v3019
        %v3021 = vrot.slane %v3004, %v3020
        %3022 = vrot.lane.b32.xlu0 %v3009, 72
        %v3023 = vpop.permute.xlu0 %3022
        %3024 = vrot.lane.b32.xlu0 %v3013, 72
        %v3025 = vpop.permute.xlu0 %3024
        %3026 = vrot.lane.b32.xlu0 %v3017, 72
        %v3027 = vpop.permute.xlu0 %3026
        %3028 = vrot.lane.b32.xlu0 %v3021, 72
        %v3029 = vpop.permute.xlu0 %3028
        %v3030 = vsel %vm443, %v3023, %v3025
        %v3031 = vsel %vm443, %v3025, %v3027
        %v3032 = vsel %vm443, %v3027, %v3029
        %v3038 = vmul.f32 %v2999, %v3023
        %v3039 = vmul.f32 %v3000, %v3030
        %v3040 = vmul.f32 %v3001, %v3031
        %v3041 = vmul.f32 %v3002, %v3032
        %v3042 = vmul.f32 %v3003, %v3029
        %3048 = vrot.lane.b32.xlu0 %v3038, 56
        %v3049 = vpop.permute.xlu0 %3048
        %3050 = vrot.lane.b32.xlu0 %v3039, 56
        %v3051 = vpop.permute.xlu0 %3050
        %3052 = vrot.lane.b32.xlu0 %v3040, 56
        %v3053 = vpop.permute.xlu0 %3052
        %3054 = vrot.lane.b32.xlu0 %v3041, 56
        %v3055 = vpop.permute.xlu0 %3054
        %3056 = vrot.lane.b32.xlu0 %v3042, 56
        %v3057 = vpop.permute.xlu0 %3056
        %v3058 = vsel %vm414, %v3049, %v3051
        %v3059 = vsel %vm414, %v3051, %v3053
        %v3060 = vsel %vm414, %v3053, %v3055
        %v3061 = vsel %vm414, %v3055, %v3057
        %3066 = vst [vmem:[#allocation3 + $0xe0] sm:$0xff] %v3058
        %3067 = vst [vmem:[#allocation3 + $0xe8] sm:$0xff] %v3059
        %3068 = vst [vmem:[#allocation3 + $0xf0] sm:$0xff] %v3060
        %3069 = vst [vmem:[#allocation3 + $0xf8] sm:$0xff] %v3061
        %v3070 = vld [vmem:[#allocation2] sm:$0xff]
        %v3071 = vld [vmem:[#allocation2 + $0x8] sm:$0xff]
        %v3072 = vld [vmem:[#allocation2 + $0x10] sm:$0xff]
        %v3073 = vld [vmem:[#allocation2 + $0x18] sm:$0xff]
        %v3074 = vld [vmem:[#allocation2 + $0x20] sm:$0xff]
        %v3075 = vld [vmem:[%s898] sm:$0xf]
        %v3077 = vlaneseq
        %v3078 = vshrl.u32 %v3077, 7
        %v3079 = vsub.s32 0, %v3078
        %v3080 = vrot.slane %v3075, %v3079
        %v3081 = vlaneseq
        %v3082 = vshrl.u32 %v3081, 7
        %v3083 = vsub.s32 1, %v3082
        %v3084 = vrot.slane %v3075, %v3083
        %v3085 = vlaneseq
        %v3086 = vshrl.u32 %v3085, 7
        %v3087 = vsub.s32 2, %v3086
        %v3088 = vrot.slane %v3075, %v3087
        %v3089 = vlaneseq
        %v3090 = vshrl.u32 %v3089, 7
        %v3091 = vsub.s32 3, %v3090
        %v3092 = vrot.slane %v3075, %v3091
        %3093 = vrot.lane.b32.xlu0 %v3080, 73
        %v3094 = vpop.permute.xlu0 %3093
        %3095 = vrot.lane.b32.xlu0 %v3084, 73
        %v3096 = vpop.permute.xlu0 %3095
        %3097 = vrot.lane.b32.xlu0 %v3088, 73
        %v3098 = vpop.permute.xlu0 %3097
        %3099 = vrot.lane.b32.xlu0 %v3092, 73
        %v3100 = vpop.permute.xlu0 %3099
        %v3101 = vsel %vm369, %v3094, %v3096
        %v3102 = vsel %vm369, %v3096, %v3098
        %v3103 = vsel %vm369, %v3098, %v3100
        %v3109 = vmul.f32 %v3070, %v3094
        %v3110 = vmul.f32 %v3071, %v3101
        %v3111 = vmul.f32 %v3072, %v3102
        %v3112 = vmul.f32 %v3073, %v3103
        %v3113 = vmul.f32 %v3074, %v3100
        %3119 = vrot.lane.b32.xlu0 %v3109, 55
        %v3120 = vpop.permute.xlu0 %3119
        %3121 = vrot.lane.b32.xlu0 %v3110, 55
        %v3122 = vpop.permute.xlu0 %3121
        %3123 = vrot.lane.b32.xlu0 %v3111, 55
        %v3124 = vpop.permute.xlu0 %3123
        %3125 = vrot.lane.b32.xlu0 %v3112, 55
        %v3126 = vpop.permute.xlu0 %3125
        %3127 = vrot.lane.b32.xlu0 %v3113, 55
        %v3128 = vpop.permute.xlu0 %3127
        %v3129 = vsel %vm340, %v3120, %v3122
        %v3130 = vsel %vm340, %v3122, %v3124
        %v3131 = vsel %vm340, %v3124, %v3126
        %v3132 = vsel %vm340, %v3126, %v3128
        %3137 = vst [vmem:[#allocation3 + $0x100] sm:$0xff] %v3129
        %3138 = vst [vmem:[#allocation3 + $0x108] sm:$0xff] %v3130
        %3139 = vst [vmem:[#allocation3 + $0x110] sm:$0xff] %v3131
        %3140 = vst [vmem:[#allocation3 + $0x118] sm:$0xff] %v3132
        %v3141 = vld [vmem:[#allocation2] sm:$0xff]
        %v3142 = vld [vmem:[#allocation2 + $0x8] sm:$0xff]
        %v3143 = vld [vmem:[#allocation2 + $0x10] sm:$0xff]
        %v3144 = vld [vmem:[#allocation2 + $0x18] sm:$0xff]
        %v3145 = vld [vmem:[#allocation2 + $0x20] sm:$0xff]
        %v3146 = vld [vmem:[%s970] sm:$0xf]
        %v3148 = vlaneseq
        %v3149 = vshrl.u32 %v3148, 7
        %v3150 = vsub.s32 0, %v3149
        %v3151 = vrot.slane %v3146, %v3150
        %v3152 = vlaneseq
        %v3153 = vshrl.u32 %v3152, 7
        %v3154 = vsub.s32 1, %v3153
        %v3155 = vrot.slane %v3146, %v3154
        %v3156 = vlaneseq
        %v3157 = vshrl.u32 %v3156, 7
        %v3158 = vsub.s32 2, %v3157
        %v3159 = vrot.slane %v3146, %v3158
        %v3160 = vlaneseq
        %v3161 = vshrl.u32 %v3160, 7
        %v3162 = vsub.s32 3, %v3161
        %v3163 = vrot.slane %v3146, %v3162
        %3164 = vrot.lane.b32.xlu0 %v3151, 119
        %v3165 = vpop.permute.xlu0 %3164
        %3166 = vrot.lane.b32.xlu0 %v3155, 119
        %v3167 = vpop.permute.xlu0 %3166
        %3168 = vrot.lane.b32.xlu0 %v3159, 119
        %v3169 = vpop.permute.xlu0 %3168
        %3170 = vrot.lane.b32.xlu0 %v3163, 119
        %v3171 = vpop.permute.xlu0 %3170
        %v3172 = vsel %vm997, %v3165, %v3167
        %v3173 = vsel %vm997, %v3167, %v3169
        %v3174 = vsel %vm997, %v3169, %v3171
        %v3180 = vmul.f32 %v3141, %v3165
        %v3181 = vmul.f32 %v3142, %v3172
        %v3182 = vmul.f32 %v3143, %v3173
        %v3183 = vmul.f32 %v3144, %v3174
        %v3184 = vmul.f32 %v3145, %v3171
        %3190 = vrot.lane.b32.xlu0 %v3180, 9
        %v3191 = vpop.permute.xlu0 %3190
        %3192 = vrot.lane.b32.xlu0 %v3181, 9
        %v3193 = vpop.permute.xlu0 %3192
        %3194 = vrot.lane.b32.xlu0 %v3182, 9
        %v3195 = vpop.permute.xlu0 %3194
        %3196 = vrot.lane.b32.xlu0 %v3183, 9
        %v3197 = vpop.permute.xlu0 %3196
        %3198 = vrot.lane.b32.xlu0 %v3184, 9
        %v3199 = vpop.permute.xlu0 %3198
        %v3200 = vsel %vm1026, %v3191, %v3193
        %v3201 = vsel %vm1026, %v3193, %v3195
        %v3202 = vsel %vm1026, %v3195, %v3197
        %v3203 = vsel %vm1026, %v3197, %v3199
        %3208 = vst [vmem:[#allocation3 + $0x120] sm:$0xff] %v3200
        %3209 = vst [vmem:[#allocation3 + $0x128] sm:$0xff] %v3201
        %3210 = vst [vmem:[#allocation3 + $0x130] sm:$0xff] %v3202
        %3211 = vst [vmem:[#allocation3 + $0x138] sm:$0xff] %v3203
        %v3212 = vld [vmem:[#allocation2] sm:$0xff]
        %v3213 = vld [vmem:[#allocation2 + $0x8] sm:$0xff]
        %v3214 = vld [vmem:[#allocation2 + $0x10] sm:$0xff]
        %v3215 = vld [vmem:[#allocation2 + $0x18] sm:$0xff]
        %v3216 = vld [vmem:[#allocation2 + $0x20] sm:$0xff]
        %v3217 = vld [vmem:[%s1044] sm:$0xf]
        %v3219 = vlaneseq
        %v3220 = vshrl.u32 %v3219, 7
        %v3221 = vsub.s32 0, %v3220
        %v3222 = vrot.slane %v3217, %v3221
        %v3223 = vlaneseq
        %v3224 = vshrl.u32 %v3223, 7
        %v3225 = vsub.s32 1, %v3224
        %v3226 = vrot.slane %v3217, %v3225
        %v3227 = vlaneseq
        %v3228 = vshrl.u32 %v3227, 7
        %v3229 = vsub.s32 2, %v3228
        %v3230 = vrot.slane %v3217, %v3229
        %v3231 = vlaneseq
        %v3232 = vshrl.u32 %v3231, 7
        %v3233 = vsub.s32 3, %v3232
        %v3234 = vrot.slane %v3217, %v3233
        %3235 = vrot.lane.b32.xlu0 %v3222, 120
        %v3236 = vpop.permute.xlu0 %3235
        %3237 = vrot.lane.b32.xlu0 %v3226, 120
        %v3238 = vpop.permute.xlu0 %3237
        %3239 = vrot.lane.b32.xlu0 %v3230, 120
        %v3240 = vpop.permute.xlu0 %3239
        %3241 = vrot.lane.b32.xlu0 %v3234, 120
        %v3242 = vpop.permute.xlu0 %3241
        %v3243 = vsel %vm1071, %v3236, %v3238
        %v3244 = vsel %vm1071, %v3238, %v3240
        %v3245 = vsel %vm1071, %v3240, %v3242
        %v3251 = vmul.f32 %v3212, %v3236
        %v3252 = vmul.f32 %v3213, %v3243
        %v3253 = vmul.f32 %v3214, %v3244
        %v3254 = vmul.f32 %v3215, %v3245
        %v3255 = vmul.f32 %v3216, %v3242
        %3261 = vrot.lane.b32.xlu0 %v3251, 8
        %v3262 = vpop.permute.xlu0 %3261
        %3263 = vrot.lane.b32.xlu0 %v3252, 8
        %v3264 = vpop.permute.xlu0 %3263
        %3265 = vrot.lane.b32.xlu0 %v3253, 8
        %v3266 = vpop.permute.xlu0 %3265
        %3267 = vrot.lane.b32.xlu0 %v3254, 8
        %v3268 = vpop.permute.xlu0 %3267
        %3269 = vrot.lane.b32.xlu0 %v3255, 8
        %v3270 = vpop.permute.xlu0 %3269
        %v3271 = vsel %vm1100, %v3262, %v3264
        %v3272 = vsel %vm1100, %v3264, %v3266
        %v3273 = vsel %vm1100, %v3266, %v3268
        %v3274 = vsel %vm1100, %v3268, %v3270
        %3279 = vst [vmem:[#allocation3 + $0x140] sm:$0xff] %v3271
        %3280 = vst [vmem:[#allocation3 + $0x148] sm:$0xff] %v3272
        %3281 = vst [vmem:[#allocation3 + $0x150] sm:$0xff] %v3273
        %3282 = vst [vmem:[#allocation3 + $0x158] sm:$0xff] %v3274
        %v3283 = vld [vmem:[#allocation2] sm:$0xff]
        %v3284 = vld [vmem:[#allocation2 + $0x8] sm:$0xff]
        %v3285 = vld [vmem:[#allocation2 + $0x10] sm:$0xff]
        %v3286 = vld [vmem:[#allocation2 + $0x18] sm:$0xff]
        %v3287 = vld [vmem:[#allocation2 + $0x20] sm:$0xff]
        %v3288 = vld [vmem:[%s1118] sm:$0xf]
        %v3290 = vlaneseq
        %v3291 = vshrl.u32 %v3290, 7
        %v3292 = vsub.s32 0, %v3291
        %v3293 = vrot.slane %v3288, %v3292
        %v3294 = vlaneseq
        %v3295 = vshrl.u32 %v3294, 7
        %v3296 = vsub.s32 1, %v3295
        %v3297 = vrot.slane %v3288, %v3296
        %v3298 = vlaneseq
        %v3299 = vshrl.u32 %v3298, 7
        %v3300 = vsub.s32 2, %v3299
        %v3301 = vrot.slane %v3288, %v3300
        %v3302 = vlaneseq
        %v3303 = vshrl.u32 %v3302, 7
        %v3304 = vsub.s32 3, %v3303
        %v3305 = vrot.slane %v3288, %v3304
        %3306 = vrot.lane.b32.xlu0 %v3293, 121
        %v3307 = vpop.permute.xlu0 %3306
        %3308 = vrot.lane.b32.xlu0 %v3297, 121
        %v3309 = vpop.permute.xlu0 %3308
        %3310 = vrot.lane.b32.xlu0 %v3301, 121
        %v3311 = vpop.permute.xlu0 %3310
        %3312 = vrot.lane.b32.xlu0 %v3305, 121
        %v3313 = vpop.permute.xlu0 %3312
        %v3314 = vsel %vm1145, %v3307, %v3309
        %v3315 = vsel %vm1145, %v3309, %v3311
        %v3316 = vsel %vm1145, %v3311, %v3313
        %v3322 = vmul.f32 %v3283, %v3307
        %v3323 = vmul.f32 %v3284, %v3314
        %v3324 = vmul.f32 %v3285, %v3315
        %v3325 = vmul.f32 %v3286, %v3316
        %v3326 = vmul.f32 %v3287, %v3313
        %3332 = vrot.lane.b32.xlu0 %v3322, 7
        %v3333 = vpop.permute.xlu0 %3332
        %3334 = vrot.lane.b32.xlu0 %v3323, 7
        %v3335 = vpop.permute.xlu0 %3334
        %3336 = vrot.lane.b32.xlu0 %v3324, 7
        %v3337 = vpop.permute.xlu0 %3336
        %3338 = vrot.lane.b32.xlu0 %v3325, 7
        %v3339 = vpop.permute.xlu0 %3338
        %3340 = vrot.lane.b32.xlu0 %v3326, 7
        %v3341 = vpop.permute.xlu0 %3340
        %v3342 = vsel %vm1174, %v3333, %v3335
        %v3343 = vsel %vm1174, %v3335, %v3337
        %v3344 = vsel %vm1174, %v3337, %v3339
        %v3345 = vsel %vm1174, %v3339, %v3341
        %3350 = vst [vmem:[#allocation3 + $0x160] sm:$0xff] %v3342
        %3351 = vst [vmem:[#allocation3 + $0x168] sm:$0xff] %v3343
        %3352 = vst [vmem:[#allocation3 + $0x170] sm:$0xff] %v3344
        %3353 = vst [vmem:[#allocation3 + $0x178] sm:$0xff] %v3345
        %v3354 = vld [vmem:[#allocation2] sm:$0xff]
        %v3355 = vld [vmem:[#allocation2 + $0x8] sm:$0xff]
        %v3356 = vld [vmem:[#allocation2 + $0x10] sm:$0xff]
        %v3357 = vld [vmem:[#allocation2 + $0x18] sm:$0xff]
        %v3358 = vld [vmem:[#allocation2 + $0x20] sm:$0xff]
        %v3359 = vld [vmem:[%s1192] sm:$0xf]
        %v3361 = vlaneseq
        %v3362 = vshrl.u32 %v3361, 7
        %v3363 = vsub.s32 0, %v3362
        %v3364 = vrot.slane %v3359, %v3363
        %v3365 = vlaneseq
        %v3366 = vshrl.u32 %v3365, 7
        %v3367 = vsub.s32 1, %v3366
        %v3368 = vrot.slane %v3359, %v3367
        %v3369 = vlaneseq
        %v3370 = vshrl.u32 %v3369, 7
        %v3371 = vsub.s32 2, %v3370
        %v3372 = vrot.slane %v3359, %v3371
        %v3373 = vlaneseq
        %v3374 = vshrl.u32 %v3373, 7
        %v3375 = vsub.s32 3, %v3374
        %v3376 = vrot.slane %v3359, %v3375
        %3377 = vrot.lane.b32.xlu0 %v3364, 127
        %v3378 = vpop.permute.xlu0 %3377
        %3379 = vrot.lane.b32.xlu0 %v3368, 127
        %v3380 = vpop.permute.xlu0 %3379
        %3381 = vrot.lane.b32.xlu0 %v3372, 127
        %v3382 = vpop.permute.xlu0 %3381
        %3383 = vrot.lane.b32.xlu0 %v3376, 127
        %v3384 = vpop.permute.xlu0 %3383
        %v3385 = vsel %vm1219, %v3378, %v3380
        %v3386 = vsel %vm1219, %v3380, %v3382
        %v3387 = vsel %vm1219, %v3382, %v3384
        %v3393 = vmul.f32 %v3354, %v3378
        %v3394 = vmul.f32 %v3355, %v3385
        %v3395 = vmul.f32 %v3356, %v3386
        %v3396 = vmul.f32 %v3357, %v3387
        %v3397 = vmul.f32 %v3358, %v3384
        %3403 = vrot.lane.b32.xlu0 %v3393, 1
        %v3404 = vpop.permute.xlu0 %3403
        %3405 = vrot.lane.b32.xlu0 %v3394, 1
        %v3406 = vpop.permute.xlu0 %3405
        %3407 = vrot.lane.b32.xlu0 %v3395, 1
        %v3408 = vpop.permute.xlu0 %3407
        %3409 = vrot.lane.b32.xlu0 %v3396, 1
        %v3410 = vpop.permute.xlu0 %3409
        %3411 = vrot.lane.b32.xlu0 %v3397, 1
        %v3412 = vpop.permute.xlu0 %3411
        %v3413 = vsel %vm1248, %v3404, %v3406
        %v3414 = vsel %vm1248, %v3406, %v3408
        %v3415 = vsel %vm1248, %v3408, %v3410
        %v3416 = vsel %vm1248, %v3410, %v3412
        %3421 = vst [vmem:[#allocation3 + $0x180] sm:$0xff] %v3413
        %3422 = vst [vmem:[#allocation3 + $0x188] sm:$0xff] %v3414
        %3423 = vst [vmem:[#allocation3 + $0x190] sm:$0xff] %v3415
        %3424 = vst [vmem:[#allocation3 + $0x198] sm:$0xff] %v3416
        %v3425 = vld [vmem:[#allocation2 + $0x8] sm:$0xff]
        %v3426 = vld [vmem:[#allocation2 + $0x10] sm:$0xff]
        %v3427 = vld [vmem:[#allocation2 + $0x18] sm:$0xff]
        %v3428 = vld [vmem:[#allocation2 + $0x20] sm:$0xff]
        %v3429 = vld [vmem:[%s1265] sm:$0xf]
        %v3431 = vlaneseq
        %v3432 = vshrl.u32 %v3431, 7
        %v3433 = vsub.s32 0, %v3432
        %v3434 = vrot.slane %v3429, %v3433
        %v3435 = vlaneseq
        %v3436 = vshrl.u32 %v3435, 7
        %v3437 = vsub.s32 1, %v3436
        %v3438 = vrot.slane %v3429, %v3437
        %v3439 = vlaneseq
        %v3440 = vshrl.u32 %v3439, 7
        %v3441 = vsub.s32 2, %v3440
        %v3442 = vrot.slane %v3429, %v3441
        %v3443 = vlaneseq
        %v3444 = vshrl.u32 %v3443, 7
        %v3445 = vsub.s32 3, %v3444
        %v3446 = vrot.slane %v3429, %v3445
        %v3451 = vmul.f32 %v3425, %v3434
        %v3452 = vmul.f32 %v3426, %v3438
        %v3453 = vmul.f32 %v3427, %v3442
        %v3454 = vmul.f32 %v3428, %v3446
        %3455 = vst [vmem:[#allocation3 + $0x1a0] sm:$0xff] %v3451
        %3456 = vst [vmem:[#allocation3 + $0x1a8] sm:$0xff] %v3452
        %3457 = vst [vmem:[#allocation3 + $0x1b0] sm:$0xff] %v3453
        %3458 = vst [vmem:[#allocation3 + $0x1b8] sm:$0xff] %v3454
        %v3459 = vld [vmem:[#allocation2 + $0x8] sm:$0xff]
        %v3460 = vld [vmem:[#allocation2 + $0x10] sm:$0xff]
        %v3461 = vld [vmem:[#allocation2 + $0x18] sm:$0xff]
        %v3462 = vld [vmem:[#allocation2 + $0x20] sm:$0xff]
        %v3463 = vld [vmem:[#allocation2 + $0x28] sm:$0xff]
        %v3464 = vld [vmem:[%s1301] sm:$0xf]
        %v3466 = vlaneseq
        %v3467 = vshrl.u32 %v3466, 7
        %v3468 = vsub.s32 0, %v3467
        %v3469 = vrot.slane %v3464, %v3468
        %v3470 = vlaneseq
        %v3471 = vshrl.u32 %v3470, 7
        %v3472 = vsub.s32 1, %v3471
        %v3473 = vrot.slane %v3464, %v3472
        %v3474 = vlaneseq
        %v3475 = vshrl.u32 %v3474, 7
        %v3476 = vsub.s32 2, %v3475
        %v3477 = vrot.slane %v3464, %v3476
        %v3478 = vlaneseq
        %v3479 = vshrl.u32 %v3478, 7
        %v3480 = vsub.s32 3, %v3479
        %v3481 = vrot.slane %v3464, %v3480
        %3482 = vrot.lane.b32.xlu0 %v3469, 1
        %v3483 = vpop.permute.xlu0 %3482
        %3484 = vrot.lane.b32.xlu0 %v3473, 1
        %v3485 = vpop.permute.xlu0 %3484
        %3486 = vrot.lane.b32.xlu0 %v3477, 1
        %v3487 = vpop.permute.xlu0 %3486
        %3488 = vrot.lane.b32.xlu0 %v3481, 1
        %v3489 = vpop.permute.xlu0 %3488
        %v3490 = vsel %vm1248, %v3483, %v3485
        %v3491 = vsel %vm1248, %v3485, %v3487
        %v3492 = vsel %vm1248, %v3487, %v3489
        %v3498 = vmul.f32 %v3459, %v3483
        %v3499 = vmul.f32 %v3460, %v3490
        %v3500 = vmul.f32 %v3461, %v3491
        %v3501 = vmul.f32 %v3462, %v3492
        %v3502 = vmul.f32 %v3463, %v3489
        %3508 = vrot.lane.b32.xlu0 %v3498, 127
        %v3509 = vpop.permute.xlu0 %3508
        %3510 = vrot.lane.b32.xlu0 %v3499, 127
        %v3511 = vpop.permute.xlu0 %3510
        %3512 = vrot.lane.b32.xlu0 %v3500, 127
        %v3513 = vpop.permute.xlu0 %3512
        %3514 = vrot.lane.b32.xlu0 %v3501, 127
        %v3515 = vpop.permute.xlu0 %3514
        %3516 = vrot.lane.b32.xlu0 %v3502, 127
        %v3517 = vpop.permute.xlu0 %3516
        %v3518 = vsel %vm1219, %v3509, %v3511
        %v3519 = vsel %vm1219, %v3511, %v3513
        %v3520 = vsel %vm1219, %v3513, %v3515
        %v3521 = vsel %vm1219, %v3515, %v3517
        %3526 = vst [vmem:[#allocation3 + $0x1c0] sm:$0xff] %v3518
        %3527 = vst [vmem:[#allocation3 + $0x1c8] sm:$0xff] %v3519
        %3528 = vst [vmem:[#allocation3 + $0x1d0] sm:$0xff] %v3520
        %3529 = vst [vmem:[#allocation3 + $0x1d8] sm:$0xff] %v3521
        %v3530 = vld [vmem:[#allocation2 + $0x8] sm:$0xff]
        %v3531 = vld [vmem:[#allocation2 + $0x10] sm:$0xff]
        %v3532 = vld [vmem:[#allocation2 + $0x18] sm:$0xff]
        %v3533 = vld [vmem:[#allocation2 + $0x20] sm:$0xff]
        %v3534 = vld [vmem:[#allocation2 + $0x28] sm:$0xff]
        %v3535 = vld [vmem:[%s1373] sm:$0xf]
        %v3537 = vlaneseq
        %v3538 = vshrl.u32 %v3537, 7
        %v3539 = vsub.s32 0, %v3538
        %v3540 = vrot.slane %v3535, %v3539
        %v3541 = vlaneseq
        %v3542 = vshrl.u32 %v3541, 7
        %v3543 = vsub.s32 1, %v3542
        %v3544 = vrot.slane %v3535, %v3543
        %v3545 = vlaneseq
        %v3546 = vshrl.u32 %v3545, 7
        %v3547 = vsub.s32 2, %v3546
        %v3548 = vrot.slane %v3535, %v3547
        %v3549 = vlaneseq
        %v3550 = vshrl.u32 %v3549, 7
        %v3551 = vsub.s32 3, %v3550
        %v3552 = vrot.slane %v3535, %v3551
        %3553 = vrot.lane.b32.xlu0 %v3540, 7
        %v3554 = vpop.permute.xlu0 %3553
        %3555 = vrot.lane.b32.xlu0 %v3544, 7
        %v3556 = vpop.permute.xlu0 %3555
        %3557 = vrot.lane.b32.xlu0 %v3548, 7
        %v3558 = vpop.permute.xlu0 %3557
        %3559 = vrot.lane.b32.xlu0 %v3552, 7
        %v3560 = vpop.permute.xlu0 %3559
        %v3561 = vsel %vm1174, %v3554, %v3556
        %v3562 = vsel %vm1174, %v3556, %v3558
        %v3563 = vsel %vm1174, %v3558, %v3560
        %v3569 = vmul.f32 %v3530, %v3554
        %v3570 = vmul.f32 %v3531, %v3561
        %v3571 = vmul.f32 %v3532, %v3562
        %v3572 = vmul.f32 %v3533, %v3563
        %v3573 = vmul.f32 %v3534, %v3560
        %3579 = vrot.lane.b32.xlu0 %v3569, 121
        %v3580 = vpop.permute.xlu0 %3579
        %3581 = vrot.lane.b32.xlu0 %v3570, 121
        %v3582 = vpop.permute.xlu0 %3581
        %3583 = vrot.lane.b32.xlu0 %v3571, 121
        %v3584 = vpop.permute.xlu0 %3583
        %3585 = vrot.lane.b32.xlu0 %v3572, 121
        %v3586 = vpop.permute.xlu0 %3585
        %3587 = vrot.lane.b32.xlu0 %v3573, 121
        %v3588 = vpop.permute.xlu0 %3587
        %v3589 = vsel %vm1145, %v3580, %v3582
        %v3590 = vsel %vm1145, %v3582, %v3584
        %v3591 = vsel %vm1145, %v3584, %v3586
        %v3592 = vsel %vm1145, %v3586, %v3588
        %3597 = vst [vmem:[#allocation3 + $0x1e0] sm:$0xff] %v3589
        %3598 = vst [vmem:[#allocation3 + $0x1e8] sm:$0xff] %v3590
        %3599 = vst [vmem:[#allocation3 + $0x1f0] sm:$0xff] %v3591
        %3600 = vst [vmem:[#allocation3 + $0x1f8] sm:$0xff] %v3592
        %v3601 = vld [vmem:[#allocation2 + $0x8] sm:$0xff]
        %v3602 = vld [vmem:[#allocation2 + $0x10] sm:$0xff]
        %v3603 = vld [vmem:[#allocation2 + $0x18] sm:$0xff]
        %v3604 = vld [vmem:[#allocation2 + $0x20] sm:$0xff]
        %v3605 = vld [vmem:[#allocation2 + $0x28] sm:$0xff]
        %v3606 = vld [vmem:[%s1445] sm:$0xf]
        %v3608 = vlaneseq
        %v3609 = vshrl.u32 %v3608, 7
        %v3610 = vsub.s32 0, %v3609
        %v3611 = vrot.slane %v3606, %v3610
        %v3612 = vlaneseq
        %v3613 = vshrl.u32 %v3612, 7
        %v3614 = vsub.s32 1, %v3613
        %v3615 = vrot.slane %v3606, %v3614
        %v3616 = vlaneseq
        %v3617 = vshrl.u32 %v3616, 7
        %v3618 = vsub.s32 2, %v3617
        %v3619 = vrot.slane %v3606, %v3618
        %v3620 = vlaneseq
        %v3621 = vshrl.u32 %v3620, 7
        %v3622 = vsub.s32 3, %v3621
        %v3623 = vrot.slane %v3606, %v3622
        %3624 = vrot.lane.b32.xlu0 %v3611, 8
        %v3625 = vpop.permute.xlu0 %3624
        %3626 = vrot.lane.b32.xlu0 %v3615, 8
        %v3627 = vpop.permute.xlu0 %3626
        %3628 = vrot.lane.b32.xlu0 %v3619, 8
        %v3629 = vpop.permute.xlu0 %3628
        %3630 = vrot.lane.b32.xlu0 %v3623, 8
        %v3631 = vpop.permute.xlu0 %3630
        %v3632 = vsel %vm1100, %v3625, %v3627
        %v3633 = vsel %vm1100, %v3627, %v3629
        %v3634 = vsel %vm1100, %v3629, %v3631
        %v3640 = vmul.f32 %v3601, %v3625
        %v3641 = vmul.f32 %v3602, %v3632
        %v3642 = vmul.f32 %v3603, %v3633
        %v3643 = vmul.f32 %v3604, %v3634
        %v3644 = vmul.f32 %v3605, %v3631
        %3650 = vrot.lane.b32.xlu0 %v3640, 120
        %v3651 = vpop.permute.xlu0 %3650
        %3652 = vrot.lane.b32.xlu0 %v3641, 120
        %v3653 = vpop.permute.xlu0 %3652
        %3654 = vrot.lane.b32.xlu0 %v3642, 120
        %v3655 = vpop.permute.xlu0 %3654
        %3656 = vrot.lane.b32.xlu0 %v3643, 120
        %v3657 = vpop.permute.xlu0 %3656
        %3658 = vrot.lane.b32.xlu0 %v3644, 120
        %v3659 = vpop.permute.xlu0 %3658
        %v3660 = vsel %vm1071, %v3651, %v3653
        %v3661 = vsel %vm1071, %v3653, %v3655
        %v3662 = vsel %vm1071, %v3655, %v3657
        %v3663 = vsel %vm1071, %v3657, %v3659
        %3668 = vst [vmem:[#allocation3 + $0x200] sm:$0xff] %v3660
        %3669 = vst [vmem:[#allocation3 + $0x208] sm:$0xff] %v3661
        %3670 = vst [vmem:[#allocation3 + $0x210] sm:$0xff] %v3662
        %3671 = vst [vmem:[#allocation3 + $0x218] sm:$0xff] %v3663
        %v3672 = vld [vmem:[#allocation2 + $0x8] sm:$0xff]
        %v3673 = vld [vmem:[#allocation2 + $0x10] sm:$0xff]
        %v3674 = vld [vmem:[#allocation2 + $0x18] sm:$0xff]
        %v3675 = vld [vmem:[#allocation2 + $0x20] sm:$0xff]
        %v3676 = vld [vmem:[#allocation2 + $0x28] sm:$0xff]
        %v3677 = vld [vmem:[%s1517] sm:$0xf]
        %v3679 = vlaneseq
        %v3680 = vshrl.u32 %v3679, 7
        %v3681 = vsub.s32 0, %v3680
        %v3682 = vrot.slane %v3677, %v3681
        %v3683 = vlaneseq
        %v3684 = vshrl.u32 %v3683, 7
        %v3685 = vsub.s32 1, %v3684
        %v3686 = vrot.slane %v3677, %v3685
        %v3687 = vlaneseq
        %v3688 = vshrl.u32 %v3687, 7
        %v3689 = vsub.s32 2, %v3688
        %v3690 = vrot.slane %v3677, %v3689
        %v3691 = vlaneseq
        %v3692 = vshrl.u32 %v3691, 7
        %v3693 = vsub.s32 3, %v3692
        %v3694 = vrot.slane %v3677, %v3693
        %3695 = vrot.lane.b32.xlu0 %v3682, 9
        %v3696 = vpop.permute.xlu0 %3695
        %3697 = vrot.lane.b32.xlu0 %v3686, 9
        %v3698 = vpop.permute.xlu0 %3697
        %3699 = vrot.lane.b32.xlu0 %v3690, 9
        %v3700 = vpop.permute.xlu0 %3699
        %3701 = vrot.lane.b32.xlu0 %v3694, 9
        %v3702 = vpop.permute.xlu0 %3701
        %v3703 = vsel %vm1026, %v3696, %v3698
        %v3704 = vsel %vm1026, %v3698, %v3700
        %v3705 = vsel %vm1026, %v3700, %v3702
        %v3711 = vmul.f32 %v3672, %v3696
        %v3712 = vmul.f32 %v3673, %v3703
        %v3713 = vmul.f32 %v3674, %v3704
        %v3714 = vmul.f32 %v3675, %v3705
        %v3715 = vmul.f32 %v3676, %v3702
        %3721 = vrot.lane.b32.xlu0 %v3711, 119
        %v3722 = vpop.permute.xlu0 %3721
        %3723 = vrot.lane.b32.xlu0 %v3712, 119
        %v3724 = vpop.permute.xlu0 %3723
        %3725 = vrot.lane.b32.xlu0 %v3713, 119
        %v3726 = vpop.permute.xlu0 %3725
        %3727 = vrot.lane.b32.xlu0 %v3714, 119
        %v3728 = vpop.permute.xlu0 %3727
        %3729 = vrot.lane.b32.xlu0 %v3715, 119
        %v3730 = vpop.permute.xlu0 %3729
        %v3731 = vsel %vm997, %v3722, %v3724
        %v3732 = vsel %vm997, %v3724, %v3726
        %v3733 = vsel %vm997, %v3726, %v3728
        %v3734 = vsel %vm997, %v3728, %v3730
        %3739 = vst [vmem:[#allocation3 + $0x220] sm:$0xff] %v3731
        %3740 = vst [vmem:[#allocation3 + $0x228] sm:$0xff] %v3732
        %3741 = vst [vmem:[#allocation3 + $0x230] sm:$0xff] %v3733
        %3742 = vst [vmem:[#allocation3 + $0x238] sm:$0xff] %v3734
        %v3743 = vld [vmem:[#allocation2 + $0x8] sm:$0xff]
        %v3744 = vld [vmem:[#allocation2 + $0x10] sm:$0xff]
        %v3745 = vld [vmem:[#allocation2 + $0x18] sm:$0xff]
        %v3746 = vld [vmem:[#allocation2 + $0x20] sm:$0xff]
        %v3747 = vld [vmem:[#allocation2 + $0x28] sm:$0xff]
        %v3748 = vld [vmem:[%s1589] sm:$0xf]
        %v3750 = vlaneseq
        %v3751 = vshrl.u32 %v3750, 7
        %v3752 = vsub.s32 0, %v3751
        %v3753 = vrot.slane %v3748, %v3752
        %v3754 = vlaneseq
        %v3755 = vshrl.u32 %v3754, 7
        %v3756 = vsub.s32 1, %v3755
        %v3757 = vrot.slane %v3748, %v3756
        %v3758 = vlaneseq
        %v3759 = vshrl.u32 %v3758, 7
        %v3760 = vsub.s32 2, %v3759
        %v3761 = vrot.slane %v3748, %v3760
        %v3762 = vlaneseq
        %v3763 = vshrl.u32 %v3762, 7
        %v3764 = vsub.s32 3, %v3763
        %v3765 = vrot.slane %v3748, %v3764
        %3766 = vrot.lane.b32.xlu0 %v3753, 55
        %v3767 = vpop.permute.xlu0 %3766
        %3768 = vrot.lane.b32.xlu0 %v3757, 55
        %v3769 = vpop.permute.xlu0 %3768
        %3770 = vrot.lane.b32.xlu0 %v3761, 55
        %v3771 = vpop.permute.xlu0 %3770
        %3772 = vrot.lane.b32.xlu0 %v3765, 55
        %v3773 = vpop.permute.xlu0 %3772
        %v3774 = vsel %vm340, %v3767, %v3769
        %v3775 = vsel %vm340, %v3769, %v3771
        %v3776 = vsel %vm340, %v3771, %v3773
        %v3782 = vmul.f32 %v3743, %v3767
        %v3783 = vmul.f32 %v3744, %v3774
        %v3784 = vmul.f32 %v3745, %v3775
        %v3785 = vmul.f32 %v3746, %v3776
        %v3786 = vmul.f32 %v3747, %v3773
        %3792 = vrot.lane.b32.xlu0 %v3782, 73
        %v3793 = vpop.permute.xlu0 %3792
        %3794 = vrot.lane.b32.xlu0 %v3783, 73
        %v3795 = vpop.permute.xlu0 %3794
        %3796 = vrot.lane.b32.xlu0 %v3784, 73
        %v3797 = vpop.permute.xlu0 %3796
        %3798 = vrot.lane.b32.xlu0 %v3785, 73
        %v3799 = vpop.permute.xlu0 %3798
        %3800 = vrot.lane.b32.xlu0 %v3786, 73
        %v3801 = vpop.permute.xlu0 %3800
        %v3802 = vsel %vm369, %v3793, %v3795
        %v3803 = vsel %vm369, %v3795, %v3797
        %v3804 = vsel %vm369, %v3797, %v3799
        %v3805 = vsel %vm369, %v3799, %v3801
        %3810 = vst [vmem:[#allocation3 + $0x240] sm:$0xff] %v3802
        %3811 = vst [vmem:[#allocation3 + $0x248] sm:$0xff] %v3803
        %3812 = vst [vmem:[#allocation3 + $0x250] sm:$0xff] %v3804
        %3813 = vst [vmem:[#allocation3 + $0x258] sm:$0xff] %v3805
        %v3814 = vld [vmem:[#allocation2 + $0x8] sm:$0xff]
        %v3815 = vld [vmem:[#allocation2 + $0x10] sm:$0xff]
        %v3816 = vld [vmem:[#allocation2 + $0x18] sm:$0xff]
        %v3817 = vld [vmem:[#allocation2 + $0x20] sm:$0xff]
        %v3818 = vld [vmem:[#allocation2 + $0x28] sm:$0xff]
        %v3819 = vld [vmem:[%s1661] sm:$0xf]
        %v3821 = vlaneseq
        %v3822 = vshrl.u32 %v3821, 7
        %v3823 = vsub.s32 0, %v3822
        %v3824 = vrot.slane %v3819, %v3823
        %v3825 = vlaneseq
        %v3826 = vshrl.u32 %v3825, 7
        %v3827 = vsub.s32 1, %v3826
        %v3828 = vrot.slane %v3819, %v3827
        %v3829 = vlaneseq
        %v3830 = vshrl.u32 %v3829, 7
        %v3831 = vsub.s32 2, %v3830
        %v3832 = vrot.slane %v3819, %v3831
        %v3833 = vlaneseq
        %v3834 = vshrl.u32 %v3833, 7
        %v3835 = vsub.s32 3, %v3834
        %v3836 = vrot.slane %v3819, %v3835
        %3837 = vrot.lane.b32.xlu0 %v3824, 56
        %v3838 = vpop.permute.xlu0 %3837
        %3839 = vrot.lane.b32.xlu0 %v3828, 56
        %v3840 = vpop.permute.xlu0 %3839
        %3841 = vrot.lane.b32.xlu0 %v3832, 56
        %v3842 = vpop.permute.xlu0 %3841
        %3843 = vrot.lane.b32.xlu0 %v3836, 56
        %v3844 = vpop.permute.xlu0 %3843
        %v3845 = vsel %vm414, %v3838, %v3840
        %v3846 = vsel %vm414, %v3840, %v3842
        %v3847 = vsel %vm414, %v3842, %v3844
        %v3853 = vmul.f32 %v3814, %v3838
        %v3854 = vmul.f32 %v3815, %v3845
        %v3855 = vmul.f32 %v3816, %v3846
        %v3856 = vmul.f32 %v3817, %v3847
        %v3857 = vmul.f32 %v3818, %v3844
        %3863 = vrot.lane.b32.xlu0 %v3853, 72
        %v3864 = vpop.permute.xlu0 %3863
        %3865 = vrot.lane.b32.xlu0 %v3854, 72
        %v3866 = vpop.permute.xlu0 %3865
        %3867 = vrot.lane.b32.xlu0 %v3855, 72
        %v3868 = vpop.permute.xlu0 %3867
        %3869 = vrot.lane.b32.xlu0 %v3856, 72
        %v3870 = vpop.permute.xlu0 %3869
        %3871 = vrot.lane.b32.xlu0 %v3857, 72
        %v3872 = vpop.permute.xlu0 %3871
        %v3873 = vsel %vm443, %v3864, %v3866
        %v3874 = vsel %vm443, %v3866, %v3868
        %v3875 = vsel %vm443, %v3868, %v3870
        %v3876 = vsel %vm443, %v3870, %v3872
        %3881 = vst [vmem:[#allocation3 + $0x260] sm:$0xff] %v3873
        %3882 = vst [vmem:[#allocation3 + $0x268] sm:$0xff] %v3874
        %3883 = vst [vmem:[#allocation3 + $0x270] sm:$0xff] %v3875
        %3884 = vst [vmem:[#allocation3 + $0x278] sm:$0xff] %v3876
        %v3885 = vld [vmem:[#allocation2 + $0x8] sm:$0xff]
        %v3886 = vld [vmem:[#allocation2 + $0x10] sm:$0xff]
        %v3887 = vld [vmem:[#allocation2 + $0x18] sm:$0xff]
        %v3888 = vld [vmem:[#allocation2 + $0x20] sm:$0xff]
        %v3889 = vld [vmem:[#allocation2 + $0x28] sm:$0xff]
        %v3890 = vld [vmem:[%s1733] sm:$0xf]
        %v3892 = vlaneseq
        %v3893 = vshrl.u32 %v3892, 7
        %v3894 = vsub.s32 0, %v3893
        %v3895 = vrot.slane %v3890, %v3894
        %v3896 = vlaneseq
        %v3897 = vshrl.u32 %v3896, 7
        %v3898 = vsub.s32 1, %v3897
        %v3899 = vrot.slane %v3890, %v3898
        %v3900 = vlaneseq
        %v3901 = vshrl.u32 %v3900, 7
        %v3902 = vsub.s32 2, %v3901
        %v3903 = vrot.slane %v3890, %v3902
        %v3904 = vlaneseq
        %v3905 = vshrl.u32 %v3904, 7
        %v3906 = vsub.s32 3, %v3905
        %v3907 = vrot.slane %v3890, %v3906
        %3908 = vrot.lane.b32.xlu0 %v3895, 57
        %v3909 = vpop.permute.xlu0 %3908
        %3910 = vrot.lane.b32.xlu0 %v3899, 57
        %v3911 = vpop.permute.xlu0 %3910
        %3912 = vrot.lane.b32.xlu0 %v3903, 57
        %v3913 = vpop.permute.xlu0 %3912
        %3914 = vrot.lane.b32.xlu0 %v3907, 57
        %v3915 = vpop.permute.xlu0 %3914
        %v3916 = vsel %vm488, %v3909, %v3911
        %v3917 = vsel %vm488, %v3911, %v3913
        %v3918 = vsel %vm488, %v3913, %v3915
        %v3924 = vmul.f32 %v3885, %v3909
        %v3925 = vmul.f32 %v3886, %v3916
        %v3926 = vmul.f32 %v3887, %v3917
        %v3927 = vmul.f32 %v3888, %v3918
        %v3928 = vmul.f32 %v3889, %v3915
        %3934 = vrot.lane.b32.xlu0 %v3924, 71
        %v3935 = vpop.permute.xlu0 %3934
        %3936 = vrot.lane.b32.xlu0 %v3925, 71
        %v3937 = vpop.permute.xlu0 %3936
        %3938 = vrot.lane.b32.xlu0 %v3926, 71
        %v3939 = vpop.permute.xlu0 %3938
        %3940 = vrot.lane.b32.xlu0 %v3927, 71
        %v3941 = vpop.permute.xlu0 %3940
        %3942 = vrot.lane.b32.xlu0 %v3928, 71
        %v3943 = vpop.permute.xlu0 %3942
        %v3944 = vsel %vm517, %v3935, %v3937
        %v3945 = vsel %vm517, %v3937, %v3939
        %v3946 = vsel %vm517, %v3939, %v3941
        %v3947 = vsel %vm517, %v3941, %v3943
        %3952 = vst [vmem:[#allocation3 + $0x280] sm:$0xff] %v3944
        %3953 = vst [vmem:[#allocation3 + $0x288] sm:$0xff] %v3945
        %3954 = vst [vmem:[#allocation3 + $0x290] sm:$0xff] %v3946
        %3955 = vst [vmem:[#allocation3 + $0x298] sm:$0xff] %v3947
        %v3956 = vld [vmem:[#allocation2 + $0x8] sm:$0xff]
        %v3957 = vld [vmem:[#allocation2 + $0x10] sm:$0xff]
        %v3958 = vld [vmem:[#allocation2 + $0x18] sm:$0xff]
        %v3959 = vld [vmem:[#allocation2 + $0x20] sm:$0xff]
        %v3960 = vld [vmem:[#allocation2 + $0x28] sm:$0xff]
        %v3961 = vld [vmem:[%s1805] sm:$0xf]
        %v3963 = vlaneseq
        %v3964 = vshrl.u32 %v3963, 7
        %v3965 = vsub.s32 0, %v3964
        %v3966 = vrot.slane %v3961, %v3965
        %v3967 = vlaneseq
        %v3968 = vshrl.u32 %v3967, 7
        %v3969 = vsub.s32 1, %v3968
        %v3970 = vrot.slane %v3961, %v3969
        %v3971 = vlaneseq
        %v3972 = vshrl.u32 %v3971, 7
        %v3973 = vsub.s32 2, %v3972
        %v3974 = vrot.slane %v3961, %v3973
        %v3975 = vlaneseq
        %v3976 = vshrl.u32 %v3975, 7
        %v3977 = vsub.s32 3, %v3976
        %v3978 = vrot.slane %v3961, %v3977
        %3979 = vrot.lane.b32.xlu0 %v3966, 63
        %v3980 = vpop.permute.xlu0 %3979
        %3981 = vrot.lane.b32.xlu0 %v3970, 63
        %v3982 = vpop.permute.xlu0 %3981
        %3983 = vrot.lane.b32.xlu0 %v3974, 63
        %v3984 = vpop.permute.xlu0 %3983
        %3985 = vrot.lane.b32.xlu0 %v3978, 63
        %v3986 = vpop.permute.xlu0 %3985
        %v3987 = vsel %vm562, %v3980, %v3982
        %v3988 = vsel %vm562, %v3982, %v3984
        %v3989 = vsel %vm562, %v3984, %v3986
        %v3995 = vmul.f32 %v3956, %v3980
        %v3996 = vmul.f32 %v3957, %v3987
        %v3997 = vmul.f32 %v3958, %v3988
        %v3998 = vmul.f32 %v3959, %v3989
        %v3999 = vmul.f32 %v3960, %v3986
        %4005 = vrot.lane.b32.xlu0 %v3995, 65
        %v4006 = vpop.permute.xlu0 %4005
        %4007 = vrot.lane.b32.xlu0 %v3996, 65
        %v4008 = vpop.permute.xlu0 %4007
        %4009 = vrot.lane.b32.xlu0 %v3997, 65
        %v4010 = vpop.permute.xlu0 %4009
        %4011 = vrot.lane.b32.xlu0 %v3998, 65
        %v4012 = vpop.permute.xlu0 %4011
        %4013 = vrot.lane.b32.xlu0 %v3999, 65
        %v4014 = vpop.permute.xlu0 %4013
        %v4015 = vsel %vm591, %v4006, %v4008
        %v4016 = vsel %vm591, %v4008, %v4010
        %v4017 = vsel %vm591, %v4010, %v4012
        %v4018 = vsel %vm591, %v4012, %v4014
        %4023 = vst [vmem:[#allocation3 + $0x2a0] sm:$0xff] %v4015
        %4024 = vst [vmem:[#allocation3 + $0x2a8] sm:$0xff] %v4016
        %4025 = vst [vmem:[#allocation3 + $0x2b0] sm:$0xff] %v4017
        %4026 = vst [vmem:[#allocation3 + $0x2b8] sm:$0xff] %v4018
        %v4027 = vld [vmem:[#allocation2 + $0x8] sm:$0xff]
        %v4028 = vld [vmem:[#allocation2 + $0x10] sm:$0xff]
        %v4029 = vld [vmem:[#allocation2 + $0x18] sm:$0xff]
        %v4030 = vld [vmem:[#allocation2 + $0x20] sm:$0xff]
        %v4031 = vld [vmem:[#allocation2 + $0x28] sm:$0xff]
        %v4032 = vld [vmem:[%s1877] sm:$0xf]
        %v4034 = vlaneseq
        %v4035 = vshrl.u32 %v4034, 7
        %v4036 = vsub.s32 0, %v4035
        %v4037 = vrot.slane %v4032, %v4036
        %v4038 = vlaneseq
        %v4039 = vshrl.u32 %v4038, 7
        %v4040 = vsub.s32 1, %v4039
        %v4041 = vrot.slane %v4032, %v4040
        %v4042 = vlaneseq
        %v4043 = vshrl.u32 %v4042, 7
        %v4044 = vsub.s32 2, %v4043
        %v4045 = vrot.slane %v4032, %v4044
        %v4046 = vlaneseq
        %v4047 = vshrl.u32 %v4046, 7
        %v4048 = vsub.s32 3, %v4047
        %v4049 = vrot.slane %v4032, %v4048
        %4050 = vrot.lane.b32.xlu0 %v4037, 64
        %v4051 = vpop.permute.xlu0 %4050
        %4052 = vrot.lane.b32.xlu0 %v4041, 64
        %v4053 = vpop.permute.xlu0 %4052
        %4054 = vrot.lane.b32.xlu0 %v4045, 64
        %v4055 = vpop.permute.xlu0 %4054
        %4056 = vrot.lane.b32.xlu0 %v4049, 64
        %v4057 = vpop.permute.xlu0 %4056
        %v4058 = vsel %vm636, %v4051, %v4053
        %v4059 = vsel %vm636, %v4053, %v4055
        %v4060 = vsel %vm636, %v4055, %v4057
        %v4066 = vmul.f32 %v4027, %v4051
        %v4067 = vmul.f32 %v4028, %v4058
        %v4068 = vmul.f32 %v4029, %v4059
        %v4069 = vmul.f32 %v4030, %v4060
        %v4070 = vmul.f32 %v4031, %v4057
        %4076 = vrot.lane.b32.xlu0 %v4066, 64
        %v4077 = vpop.permute.xlu0 %4076
        %4078 = vrot.lane.b32.xlu0 %v4067, 64
        %v4079 = vpop.permute.xlu0 %4078
        %4080 = vrot.lane.b32.xlu0 %v4068, 64
        %v4081 = vpop.permute.xlu0 %4080
        %4082 = vrot.lane.b32.xlu0 %v4069, 64
        %v4083 = vpop.permute.xlu0 %4082
        %4084 = vrot.lane.b32.xlu0 %v4070, 64
        %v4085 = vpop.permute.xlu0 %4084
        %v4086 = vsel %vm636, %v4077, %v4079
        %v4087 = vsel %vm636, %v4079, %v4081
        %v4088 = vsel %vm636, %v4081, %v4083
        %v4089 = vsel %vm636, %v4083, %v4085
        %4094 = vst [vmem:[#allocation3 + $0x2c0] sm:$0xff] %v4086
        %4095 = vst [vmem:[#allocation3 + $0x2c8] sm:$0xff] %v4087
        %4096 = vst [vmem:[#allocation3 + $0x2d0] sm:$0xff] %v4088
        %4097 = vst [vmem:[#allocation3 + $0x2d8] sm:$0xff] %v4089
        %v4098 = vld [vmem:[#allocation2 + $0x8] sm:$0xff]
        %v4099 = vld [vmem:[#allocation2 + $0x10] sm:$0xff]
        %v4100 = vld [vmem:[#allocation2 + $0x18] sm:$0xff]
        %v4101 = vld [vmem:[#allocation2 + $0x20] sm:$0xff]
        %v4102 = vld [vmem:[#allocation2 + $0x28] sm:$0xff]
        %v4103 = vld [vmem:[%s1949] sm:$0xf]
        %v4105 = vlaneseq
        %v4106 = vshrl.u32 %v4105, 7
        %v4107 = vsub.s32 0, %v4106
        %v4108 = vrot.slane %v4103, %v4107
        %v4109 = vlaneseq
        %v4110 = vshrl.u32 %v4109, 7
        %v4111 = vsub.s32 1, %v4110
        %v4112 = vrot.slane %v4103, %v4111
        %v4113 = vlaneseq
        %v4114 = vshrl.u32 %v4113, 7
        %v4115 = vsub.s32 2, %v4114
        %v4116 = vrot.slane %v4103, %v4115
        %v4117 = vlaneseq
        %v4118 = vshrl.u32 %v4117, 7
        %v4119 = vsub.s32 3, %v4118
        %v4120 = vrot.slane %v4103, %v4119
        %4121 = vrot.lane.b32.xlu0 %v4108, 65
        %v4122 = vpop.permute.xlu0 %4121
        %4123 = vrot.lane.b32.xlu0 %v4112, 65
        %v4124 = vpop.permute.xlu0 %4123
        %4125 = vrot.lane.b32.xlu0 %v4116, 65
        %v4126 = vpop.permute.xlu0 %4125
        %4127 = vrot.lane.b32.xlu0 %v4120, 65
        %v4128 = vpop.permute.xlu0 %4127
        %v4129 = vsel %vm591, %v4122, %v4124
        %v4130 = vsel %vm591, %v4124, %v4126
        %v4131 = vsel %vm591, %v4126, %v4128
        %v4137 = vmul.f32 %v4098, %v4122
        %v4138 = vmul.f32 %v4099, %v4129
        %v4139 = vmul.f32 %v4100, %v4130
        %v4140 = vmul.f32 %v4101, %v4131
        %v4141 = vmul.f32 %v4102, %v4128
        %4147 = vrot.lane.b32.xlu0 %v4137, 63
        %v4148 = vpop.permute.xlu0 %4147
        %4149 = vrot.lane.b32.xlu0 %v4138, 63
        %v4150 = vpop.permute.xlu0 %4149
        %4151 = vrot.lane.b32.xlu0 %v4139, 63
        %v4152 = vpop.permute.xlu0 %4151
        %4153 = vrot.lane.b32.xlu0 %v4140, 63
        %v4154 = vpop.permute.xlu0 %4153
        %4155 = vrot.lane.b32.xlu0 %v4141, 63
        %v4156 = vpop.permute.xlu0 %4155
        %v4157 = vsel %vm562, %v4148, %v4150
        %v4158 = vsel %vm562, %v4150, %v4152
        %v4159 = vsel %vm562, %v4152, %v4154
        %v4160 = vsel %vm562, %v4154, %v4156
        %4165 = vst [vmem:[#allocation3 + $0x2e0] sm:$0xff] %v4157
        %4166 = vst [vmem:[#allocation3 + $0x2e8] sm:$0xff] %v4158
        %4167 = vst [vmem:[#allocation3 + $0x2f0] sm:$0xff] %v4159
        %4168 = vst [vmem:[#allocation3 + $0x2f8] sm:$0xff] %v4160
        %v4169 = vld [vmem:[#allocation2 + $0x8] sm:$0xff]
        %v4170 = vld [vmem:[#allocation2 + $0x10] sm:$0xff]
        %v4171 = vld [vmem:[#allocation2 + $0x18] sm:$0xff]
        %v4172 = vld [vmem:[#allocation2 + $0x20] sm:$0xff]
        %v4173 = vld [vmem:[#allocation2 + $0x28] sm:$0xff]
        %v4174 = vld [vmem:[%s2021] sm:$0xf]
        %v4176 = vlaneseq
        %v4177 = vshrl.u32 %v4176, 7
        %v4178 = vsub.s32 0, %v4177
        %v4179 = vrot.slane %v4174, %v4178
        %v4180 = vlaneseq
        %v4181 = vshrl.u32 %v4180, 7
        %v4182 = vsub.s32 1, %v4181
        %v4183 = vrot.slane %v4174, %v4182
        %v4184 = vlaneseq
        %v4185 = vshrl.u32 %v4184, 7
        %v4186 = vsub.s32 2, %v4185
        %v4187 = vrot.slane %v4174, %v4186
        %v4188 = vlaneseq
        %v4189 = vshrl.u32 %v4188, 7
        %v4190 = vsub.s32 3, %v4189
        %v4191 = vrot.slane %v4174, %v4190
        %4192 = vrot.lane.b32.xlu0 %v4179, 71
        %v4193 = vpop.permute.xlu0 %4192
        %4194 = vrot.lane.b32.xlu0 %v4183, 71
        %v4195 = vpop.permute.xlu0 %4194
        %4196 = vrot.lane.b32.xlu0 %v4187, 71
        %v4197 = vpop.permute.xlu0 %4196
        %4198 = vrot.lane.b32.xlu0 %v4191, 71
        %v4199 = vpop.permute.xlu0 %4198
        %v4200 = vsel %vm517, %v4193, %v4195
        %v4201 = vsel %vm517, %v4195, %v4197
        %v4202 = vsel %vm517, %v4197, %v4199
        %v4208 = vmul.f32 %v4169, %v4193
        %v4209 = vmul.f32 %v4170, %v4200
        %v4210 = vmul.f32 %v4171, %v4201
        %v4211 = vmul.f32 %v4172, %v4202
        %v4212 = vmul.f32 %v4173, %v4199
        %4218 = vrot.lane.b32.xlu0 %v4208, 57
        %v4219 = vpop.permute.xlu0 %4218
        %4220 = vrot.lane.b32.xlu0 %v4209, 57
        %v4221 = vpop.permute.xlu0 %4220
        %4222 = vrot.lane.b32.xlu0 %v4210, 57
        %v4223 = vpop.permute.xlu0 %4222
        %4224 = vrot.lane.b32.xlu0 %v4211, 57
        %v4225 = vpop.permute.xlu0 %4224
        %4226 = vrot.lane.b32.xlu0 %v4212, 57
        %v4227 = vpop.permute.xlu0 %4226
        %v4228 = vsel %vm488, %v4219, %v4221
        %v4229 = vsel %vm488, %v4221, %v4223
        %v4230 = vsel %vm488, %v4223, %v4225
        %v4231 = vsel %vm488, %v4225, %v4227
        %4236 = vst [vmem:[#allocation3 + $0x300] sm:$0xff] %v4228
        %4237 = vst [vmem:[#allocation3 + $0x308] sm:$0xff] %v4229
        %4238 = vst [vmem:[#allocation3 + $0x310] sm:$0xff] %v4230
        %4239 = vst [vmem:[#allocation3 + $0x318] sm:$0xff] %v4231
        %v4240 = vld [vmem:[#allocation2 + $0x8] sm:$0xff]
        %v4241 = vld [vmem:[#allocation2 + $0x10] sm:$0xff]
        %v4242 = vld [vmem:[#allocation2 + $0x18] sm:$0xff]
        %v4243 = vld [vmem:[#allocation2 + $0x20] sm:$0xff]
        %v4244 = vld [vmem:[#allocation2 + $0x28] sm:$0xff]
        %v4245 = vld [vmem:[%s2093] sm:$0xf]
        %v4247 = vlaneseq
        %v4248 = vshrl.u32 %v4247, 7
        %v4249 = vsub.s32 0, %v4248
        %v4250 = vrot.slane %v4245, %v4249
        %v4251 = vlaneseq
        %v4252 = vshrl.u32 %v4251, 7
        %v4253 = vsub.s32 1, %v4252
        %v4254 = vrot.slane %v4245, %v4253
        %v4255 = vlaneseq
        %v4256 = vshrl.u32 %v4255, 7
        %v4257 = vsub.s32 2, %v4256
        %v4258 = vrot.slane %v4245, %v4257
        %v4259 = vlaneseq
        %v4260 = vshrl.u32 %v4259, 7
        %v4261 = vsub.s32 3, %v4260
        %v4262 = vrot.slane %v4245, %v4261
        %4263 = vrot.lane.b32.xlu0 %v4250, 72
        %v4264 = vpop.permute.xlu0 %4263
        %4265 = vrot.lane.b32.xlu0 %v4254, 72
        %v4266 = vpop.permute.xlu0 %4265
        %4267 = vrot.lane.b32.xlu0 %v4258, 72
        %v4268 = vpop.permute.xlu0 %4267
        %4269 = vrot.lane.b32.xlu0 %v4262, 72
        %v4270 = vpop.permute.xlu0 %4269
        %v4271 = vsel %vm443, %v4264, %v4266
        %v4272 = vsel %vm443, %v4266, %v4268
        %v4273 = vsel %vm443, %v4268, %v4270
        %v4279 = vmul.f32 %v4240, %v4264
        %v4280 = vmul.f32 %v4241, %v4271
        %v4281 = vmul.f32 %v4242, %v4272
        %v4282 = vmul.f32 %v4243, %v4273
        %v4283 = vmul.f32 %v4244, %v4270
        %4289 = vrot.lane.b32.xlu0 %v4279, 56
        %v4290 = vpop.permute.xlu0 %4289
        %4291 = vrot.lane.b32.xlu0 %v4280, 56
        %v4292 = vpop.permute.xlu0 %4291
        %4293 = vrot.lane.b32.xlu0 %v4281, 56
        %v4294 = vpop.permute.xlu0 %4293
        %4295 = vrot.lane.b32.xlu0 %v4282, 56
        %v4296 = vpop.permute.xlu0 %4295
        %4297 = vrot.lane.b32.xlu0 %v4283, 56
        %v4298 = vpop.permute.xlu0 %4297
        %v4299 = vsel %vm414, %v4290, %v4292
        %v4300 = vsel %vm414, %v4292, %v4294
        %v4301 = vsel %vm414, %v4294, %v4296
        %v4302 = vsel %vm414, %v4296, %v4298
        %4307 = vst [vmem:[#allocation3 + $0x320] sm:$0xff] %v4299
        %4308 = vst [vmem:[#allocation3 + $0x328] sm:$0xff] %v4300
        %4309 = vst [vmem:[#allocation3 + $0x330] sm:$0xff] %v4301
        %4310 = vst [vmem:[#allocation3 + $0x338] sm:$0xff] %v4302
        %v4311 = vld [vmem:[#allocation2 + $0x8] sm:$0xff]
        %v4312 = vld [vmem:[#allocation2 + $0x10] sm:$0xff]
        %v4313 = vld [vmem:[#allocation2 + $0x18] sm:$0xff]
        %v4314 = vld [vmem:[#allocation2 + $0x20] sm:$0xff]
        %v4315 = vld [vmem:[#allocation2 + $0x28] sm:$0xff]
        %v4316 = vld [vmem:[%s2165] sm:$0xf]
        %v4318 = vlaneseq
        %v4319 = vshrl.u32 %v4318, 7
        %v4320 = vsub.s32 0, %v4319
        %v4321 = vrot.slane %v4316, %v4320
        %v4322 = vlaneseq
        %v4323 = vshrl.u32 %v4322, 7
        %v4324 = vsub.s32 1, %v4323
        %v4325 = vrot.slane %v4316, %v4324
        %v4326 = vlaneseq
        %v4327 = vshrl.u32 %v4326, 7
        %v4328 = vsub.s32 2, %v4327
        %v4329 = vrot.slane %v4316, %v4328
        %v4330 = vlaneseq
        %v4331 = vshrl.u32 %v4330, 7
        %v4332 = vsub.s32 3, %v4331
        %v4333 = vrot.slane %v4316, %v4332
        %4334 = vrot.lane.b32.xlu0 %v4321, 73
        %v4335 = vpop.permute.xlu0 %4334
        %4336 = vrot.lane.b32.xlu0 %v4325, 73
        %v4337 = vpop.permute.xlu0 %4336
        %4338 = vrot.lane.b32.xlu0 %v4329, 73
        %v4339 = vpop.permute.xlu0 %4338
        %4340 = vrot.lane.b32.xlu0 %v4333, 73
        %v4341 = vpop.permute.xlu0 %4340
        %v4342 = vsel %vm369, %v4335, %v4337
        %v4343 = vsel %vm369, %v4337, %v4339
        %v4344 = vsel %vm369, %v4339, %v4341
        %v4350 = vmul.f32 %v4311, %v4335
        %v4351 = vmul.f32 %v4312, %v4342
        %v4352 = vmul.f32 %v4313, %v4343
        %v4353 = vmul.f32 %v4314, %v4344
        %v4354 = vmul.f32 %v4315, %v4341
        %4360 = vrot.lane.b32.xlu0 %v4350, 55
        %v4361 = vpop.permute.xlu0 %4360
        %4362 = vrot.lane.b32.xlu0 %v4351, 55
        %v4363 = vpop.permute.xlu0 %4362
        %4364 = vrot.lane.b32.xlu0 %v4352, 55
        %v4365 = vpop.permute.xlu0 %4364
        %4366 = vrot.lane.b32.xlu0 %v4353, 55
        %v4367 = vpop.permute.xlu0 %4366
        %4368 = vrot.lane.b32.xlu0 %v4354, 55
        %v4369 = vpop.permute.xlu0 %4368
        %v4370 = vsel %vm340, %v4361, %v4363
        %v4371 = vsel %vm340, %v4363, %v4365
        %v4372 = vsel %vm340, %v4365, %v4367
        %v4373 = vsel %vm340, %v4367, %v4369
        %4378 = vst [vmem:[#allocation3 + $0x340] sm:$0xff] %v4370
        %4379 = vst [vmem:[#allocation3 + $0x348] sm:$0xff] %v4371
        %4380 = vst [vmem:[#allocation3 + $0x350] sm:$0xff] %v4372
        %4381 = vst [vmem:[#allocation3 + $0x358] sm:$0xff] %v4373
        %v4382 = vld [vmem:[#allocation7] sm:$0xff]
        %v4383 = vld [vmem:[#allocation7 + $0x8] sm:$0xff]
        %v4384 = vld [vmem:[#allocation3] sm:$0xff]
        %v4385 = vld [vmem:[#allocation3 + $0x8] sm:$0xff]
        %v4386 = vld [vmem:[#allocation3 + $0x10] sm:$0xff]
        %v4387 = vld [vmem:[#allocation3 + $0x18] sm:$0xff]
        %v4388 = vld [vmem:[#allocation3 + $0x20] sm:$0xff]
        %v4389 = vld [vmem:[#allocation3 + $0x28] sm:$0xff]
        %v4390 = vld [vmem:[#allocation3 + $0x30] sm:$0xff]
        %v4391 = vld [vmem:[#allocation3 + $0x38] sm:$0xff]
        %v4392 = vld [vmem:[#allocation3 + $0x40] sm:$0xff]
        %v4393 = vld [vmem:[#allocation3 + $0x48] sm:$0xff]
        %v4394 = vld [vmem:[#allocation3 + $0x50] sm:$0xff]
        %v4395 = vld [vmem:[#allocation3 + $0x58] sm:$0xff]
        %v4396 = vld [vmem:[#allocation3 + $0x60] sm:$0xff]
        %v4397 = vld [vmem:[#allocation3 + $0x68] sm:$0xff]
        %v4398 = vld [vmem:[#allocation3 + $0x70] sm:$0xff]
        %v4399 = vld [vmem:[#allocation3 + $0x78] sm:$0xff]
        %v4400 = vld [vmem:[#allocation3 + $0x80] sm:$0xff]
        %v4401 = vld [vmem:[#allocation3 + $0x88] sm:$0xff]
        %v4402 = vld [vmem:[#allocation3 + $0x90] sm:$0xff]
        %v4403 = vld [vmem:[#allocation3 + $0x98] sm:$0xff]
        %v4404 = vld [vmem:[#allocation3 + $0xa0] sm:$0xff]
        %v4405 = vld [vmem:[#allocation3 + $0xa8] sm:$0xff]
        %v4406 = vld [vmem:[#allocation3 + $0xb0] sm:$0xff]
        %v4407 = vld [vmem:[#allocation3 + $0xb8] sm:$0xff]
        %v4408 = vld [vmem:[#allocation3 + $0xc0] sm:$0xff]
        %v4409 = vld [vmem:[#allocation3 + $0xc8] sm:$0xff]
        %v4410 = vld [vmem:[#allocation3 + $0xd0] sm:$0xff]
        %v4411 = vld [vmem:[#allocation3 + $0xd8] sm:$0xff]
        %v4412 = vld [vmem:[#allocation3 + $0xe0] sm:$0xff]
        %v4413 = vld [vmem:[#allocation3 + $0xe8] sm:$0xff]
        %v4414 = vld [vmem:[#allocation3 + $0xf0] sm:$0xff]
        %v4415 = vld [vmem:[#allocation3 + $0xf8] sm:$0xff]
        %v4416 = vld [vmem:[#allocation3 + $0x100] sm:$0xff]
        %v4417 = vld [vmem:[#allocation3 + $0x108] sm:$0xff]
        %v4418 = vld [vmem:[#allocation3 + $0x110] sm:$0xff]
        %v4419 = vld [vmem:[#allocation3 + $0x118] sm:$0xff]
        %v4420 = vld [vmem:[#allocation3 + $0x120] sm:$0xff]
        %v4421 = vld [vmem:[#allocation3 + $0x128] sm:$0xff]
        %v4422 = vld [vmem:[#allocation3 + $0x130] sm:$0xff]
        %v4423 = vld [vmem:[#allocation3 + $0x138] sm:$0xff]
        %v4424 = vld [vmem:[#allocation3 + $0x140] sm:$0xff]
        %v4425 = vld [vmem:[#allocation3 + $0x148] sm:$0xff]
        %v4426 = vld [vmem:[#allocation3 + $0x150] sm:$0xff]
        %v4427 = vld [vmem:[#allocation3 + $0x158] sm:$0xff]
        %v4428 = vld [vmem:[#allocation3 + $0x160] sm:$0xff]
        %v4429 = vld [vmem:[#allocation3 + $0x168] sm:$0xff]
        %v4430 = vld [vmem:[#allocation3 + $0x170] sm:$0xff]
        %v4431 = vld [vmem:[#allocation3 + $0x178] sm:$0xff]
        %v4432 = vld [vmem:[#allocation3 + $0x180] sm:$0xff]
        %v4433 = vld [vmem:[#allocation3 + $0x188] sm:$0xff]
        %v4434 = vld [vmem:[#allocation3 + $0x190] sm:$0xff]
        %v4435 = vld [vmem:[#allocation3 + $0x198] sm:$0xff]
        %v4436 = vld [vmem:[#allocation3 + $0x1a0] sm:$0xff]
        %v4437 = vld [vmem:[#allocation3 + $0x1a8] sm:$0xff]
        %v4438 = vld [vmem:[#allocation3 + $0x1b0] sm:$0xff]
        %v4439 = vld [vmem:[#allocation3 + $0x1b8] sm:$0xff]
        %v4440 = vld [vmem:[#allocation3 + $0x1c0] sm:$0xff]
        %v4441 = vld [vmem:[#allocation3 + $0x1c8] sm:$0xff]
        %v4442 = vld [vmem:[#allocation3 + $0x1d0] sm:$0xff]
        %v4443 = vld [vmem:[#allocation3 + $0x1d8] sm:$0xff]
        %v4444 = vld [vmem:[#allocation3 + $0x1e0] sm:$0xff]
        %v4445 = vld [vmem:[#allocation3 + $0x1e8] sm:$0xff]
        %v4446 = vld [vmem:[#allocation3 + $0x1f0] sm:$0xff]
        %v4447 = vld [vmem:[#allocation3 + $0x1f8] sm:$0xff]
        %v4448 = vld [vmem:[#allocation3 + $0x200] sm:$0xff]
        %v4449 = vld [vmem:[#allocation3 + $0x208] sm:$0xff]
        %v4450 = vld [vmem:[#allocation3 + $0x210] sm:$0xff]
        %v4451 = vld [vmem:[#allocation3 + $0x218] sm:$0xff]
        %v4452 = vld [vmem:[#allocation3 + $0x220] sm:$0xff]
        %v4453 = vld [vmem:[#allocation3 + $0x228] sm:$0xff]
        %v4454 = vld [vmem:[#allocation3 + $0x230] sm:$0xff]
        %v4455 = vld [vmem:[#allocation3 + $0x238] sm:$0xff]
        %v4456 = vld [vmem:[#allocation3 + $0x240] sm:$0xff]
        %v4457 = vld [vmem:[#allocation3 + $0x248] sm:$0xff]
        %v4458 = vld [vmem:[#allocation3 + $0x250] sm:$0xff]
        %v4459 = vld [vmem:[#allocation3 + $0x258] sm:$0xff]
        %v4460 = vld [vmem:[#allocation3 + $0x260] sm:$0xff]
        %v4461 = vld [vmem:[#allocation3 + $0x268] sm:$0xff]
        %v4462 = vld [vmem:[#allocation3 + $0x270] sm:$0xff]
        %v4463 = vld [vmem:[#allocation3 + $0x278] sm:$0xff]
        %v4464 = vld [vmem:[#allocation3 + $0x280] sm:$0xff]
        %v4465 = vld [vmem:[#allocation3 + $0x288] sm:$0xff]
        %v4466 = vld [vmem:[#allocation3 + $0x290] sm:$0xff]
        %v4467 = vld [vmem:[#allocation3 + $0x298] sm:$0xff]
        %v4468 = vld [vmem:[#allocation3 + $0x2a0] sm:$0xff]
        %v4469 = vld [vmem:[#allocation3 + $0x2a8] sm:$0xff]
        %v4470 = vld [vmem:[#allocation3 + $0x2b0] sm:$0xff]
        %v4471 = vld [vmem:[#allocation3 + $0x2b8] sm:$0xff]
        %v4472 = vld [vmem:[#allocation3 + $0x2c0] sm:$0xff]
        %v4473 = vld [vmem:[#allocation3 + $0x2c8] sm:$0xff]
        %v4474 = vld [vmem:[#allocation3 + $0x2d0] sm:$0xff]
        %v4475 = vld [vmem:[#allocation3 + $0x2d8] sm:$0xff]
        %v4476 = vld [vmem:[#allocation3 + $0x2e0] sm:$0xff]
        %v4477 = vld [vmem:[#allocation3 + $0x2e8] sm:$0xff]
        %v4478 = vld [vmem:[#allocation3 + $0x2f0] sm:$0xff]
        %v4479 = vld [vmem:[#allocation3 + $0x2f8] sm:$0xff]
        %v4480 = vld [vmem:[#allocation3 + $0x300] sm:$0xff]
        %v4481 = vld [vmem:[#allocation3 + $0x308] sm:$0xff]
        %v4482 = vld [vmem:[#allocation3 + $0x310] sm:$0xff]
        %v4483 = vld [vmem:[#allocation3 + $0x318] sm:$0xff]
        %v4484 = vld [vmem:[#allocation3 + $0x320] sm:$0xff]
        %v4485 = vld [vmem:[#allocation3 + $0x328] sm:$0xff]
        %v4486 = vld [vmem:[#allocation3 + $0x330] sm:$0xff]
        %v4487 = vld [vmem:[#allocation3 + $0x338] sm:$0xff]
        %v4488 = vld [vmem:[#allocation3 + $0x340] sm:$0xff]
        %v4489 = vld [vmem:[#allocation3 + $0x348] sm:$0xff]
        %v4490 = vld [vmem:[#allocation3 + $0x350] sm:$0xff]
        %v4491 = vld [vmem:[#allocation3 + $0x358] sm:$0xff]
        %v4492 = vld [vmem:[%s4] sm:$0xff]
        %4494 = vset.pattern.permute.xlu0 0
        %4495 = vperm.xlu0 %4494, %v4492
        %v4496 = vpop.permute.xlu0 %4495
        %v4499 = vsel %vm2348, %v4383, 0
        %4501 = vmatprep.subr.mxu0 %v4385
        %4502 = vmatpush1.msra.mxu0 %v4384
        %4503 = vmatprep.subr.mxu0 %v4389
        %4504 = vmatpush1.msra.mxu0 %v4388
        %4505 = vmatprep.subr.mxu0 %v4393
        %4506 = vmatpush1.msra.mxu0 %v4392
        %4507 = vmatprep.subr.mxu0 %v4397
        %4508 = vmatpush1.msra.mxu0 %v4396
        %4509 = vmatprep.subr.mxu0 %v4401
        %4510 = vmatpush1.msra.mxu0 %v4400
        %4511 = vmatprep.subr.mxu0 %v4405
        %4512 = vmatpush1.msra.mxu0 %v4404
        %4513 = vmatprep.subr.mxu0 %v4409
        %4514 = vmatpush1.msra.mxu0 %v4408
        %4515 = vmatprep.subr.mxu0 %v4413
        %4516 = vmatpush1.msra.mxu0 %v4412
        %4517 = vmatprep.subr.mxu0 %v4417
        %4518 = vmatpush1.msra.mxu0 %v4416
        %4519 = vmatprep.subr.mxu0 %v4421
        %4520 = vmatpush1.msra.mxu0 %v4420
        %4521 = vmatprep.subr.mxu0 %v4425
        %4522 = vmatpush1.msra.mxu0 %v4424
        %4523 = vmatprep.subr.mxu0 %v4429
        %4524 = vmatpush1.msra.mxu0 %v4428
        %4525 = vmatprep.subr.mxu0 %v4433
        %4526 = vmatpush1.msra.mxu0 %v4432
        %4527 = vmatprep.subr.mxu0 %v4437
        %4528 = vmatpush1.msra.mxu0 %v4436
        %4529 = vmatprep.subr.mxu0 %v4441
        %4530 = vmatpush1.msra.mxu0 %v4440
        %4531 = vmatprep.subr.mxu0 %v4445
        %4532 = vmatpush1.msra.mxu0 %v4444
        %4533 = vmatprep.subr.mxu0 %v4449
        %4534 = vmatpush1.msra.mxu0 %v4448
        %4535 = vmatprep.subr.mxu0 %v4453
        %4536 = vmatpush1.msra.mxu0 %v4452
        %4537 = vmatprep.subr.mxu0 %v4457
        %4538 = vmatpush1.msra.mxu0 %v4456
        %4539 = vmatprep.subr.mxu0 %v4461
        %4540 = vmatpush1.msra.mxu0 %v4460
        %4541 = vmatprep.subr.mxu0 %v4465
        %4542 = vmatpush1.msra.mxu0 %v4464
        %4543 = vmatprep.subr.mxu0 %v4469
        %4544 = vmatpush1.msra.mxu0 %v4468
        %4545 = vmatprep.subr.mxu0 %v4473
        %4546 = vmatpush1.msra.mxu0 %v4472
        %4547 = vmatprep.subr.mxu0 %v4477
        %4548 = vmatpush1.msra.mxu0 %v4476
        %4549 = vmatprep.subr.mxu0 %v4481
        %4550 = vmatpush1.msra.mxu0 %v4480
        %4551 = vmatprep.subr.mxu0 %v4485
        %4552 = vmatpush1.msra.mxu0 %v4484
        %4553 = vmatprep.subr.mxu0 %v4489
        %4554 = vmatpush1.msra.mxu0 %v4488
        %4555 = vmatprep.subr.mxu0 0.0
        %4556 = vmatpush1.msra.mxu0 0.0
        %4557 = vmatprep.subr.mxu0 0.0
        %4558 = vmatpush1.msra.mxu0 0.0
        %4559 = vmatprep.subr.mxu0 0.0
        %4560 = vmatpush1.msra.mxu0 0.0
        %4561 = vmatprep.subr.mxu0 0.0
        %4562 = vmatpush1.msra.mxu0 0.0
        %4563 = vmatprep.subr.mxu0 0.0
        %4564 = vmatpush1.msra.mxu0 0.0
        %4565 = vmatprep.mubr.f32.mxu0 %v4499
        %4566 = vmatmul.mubr.f32.gmra.mrb[0].mxu0 %v4382
        %v4567 = vpop.f32.mrb[0].mxu0
        %v4568 = vadd.f32 %v4496, %v4567
        %v4569 = vpop.f32.mrb[0].mxu0
        %v4570 = vadd.f32 %v4496, %v4569
        %4571 = vdwg.mxu0
        %4572 = vmatprep.subr.mxu0 %v4387
        %4573 = vmatpush1.msra.mxu0 %v4386
        %4574 = vmatprep.subr.mxu0 %v4391
        %4575 = vmatpush1.msra.mxu0 %v4390
        %4576 = vmatprep.subr.mxu0 %v4395
        %4577 = vmatpush1.msra.mxu0 %v4394
        %4578 = vmatprep.subr.mxu0 %v4399
        %4579 = vmatpush1.msra.mxu0 %v4398
        %4580 = vmatprep.subr.mxu0 %v4403
        %4581 = vmatpush1.msra.mxu0 %v4402
        %4582 = vmatprep.subr.mxu0 %v4407
        %4583 = vmatpush1.msra.mxu0 %v4406
        %4584 = vmatprep.subr.mxu0 %v4411
        %4585 = vmatpush1.msra.mxu0 %v4410
        %4586 = vmatprep.subr.mxu0 %v4415
        %4587 = vmatpush1.msra.mxu0 %v4414
        %4588 = vmatprep.subr.mxu0 %v4419
        %4589 = vmatpush1.msra.mxu0 %v4418
        %4590 = vmatprep.subr.mxu0 %v4423
        %4591 = vmatpush1.msra.mxu0 %v4422
        %4592 = vmatprep.subr.mxu0 %v4427
        %4593 = vmatpush1.msra.mxu0 %v4426
        %4594 = vmatprep.subr.mxu0 %v4431
        %4595 = vmatpush1.msra.mxu0 %v4430
        %4596 = vmatprep.subr.mxu0 %v4435
        %4597 = vmatpush1.msra.mxu0 %v4434
        %4598 = vmatprep.subr.mxu0 %v4439
        %4599 = vmatpush1.msra.mxu0 %v4438
        %4600 = vmatprep.subr.mxu0 %v4443
        %4601 = vmatpush1.msra.mxu0 %v4442
        %4602 = vmatprep.subr.mxu0 %v4447
        %4603 = vmatpush1.msra.mxu0 %v4446
        %4604 = vmatprep.subr.mxu0 %v4451
        %4605 = vmatpush1.msra.mxu0 %v4450
        %4606 = vmatprep.subr.mxu0 %v4455
        %4607 = vmatpush1.msra.mxu0 %v4454
        %4608 = vmatprep.subr.mxu0 %v4459
        %4609 = vmatpush1.msra.mxu0 %v4458
        %4610 = vmatprep.subr.mxu0 %v4463
        %4611 = vmatpush1.msra.mxu0 %v4462
        %4612 = vmatprep.subr.mxu0 %v4467
        %4613 = vmatpush1.msra.mxu0 %v4466
        %4614 = vmatprep.subr.mxu0 %v4471
        %4615 = vmatpush1.msra.mxu0 %v4470
        %4616 = vmatprep.subr.mxu0 %v4475
        %4617 = vmatpush1.msra.mxu0 %v4474
        %4618 = vmatprep.subr.mxu0 %v4479
        %4619 = vmatpush1.msra.mxu0 %v4478
        %4620 = vmatprep.subr.mxu0 %v4483
        %4621 = vmatpush1.msra.mxu0 %v4482
        %4622 = vmatprep.subr.mxu0 %v4487
        %4623 = vmatpush1.msra.mxu0 %v4486
        %4624 = vmatprep.subr.mxu0 %v4491
        %4625 = vmatpush1.msra.mxu0 %v4490
        %4626 = vmatprep.subr.mxu0 0.0
        %4627 = vmatpush1.msra.mxu0 0.0
        %4628 = vmatprep.subr.mxu0 0.0
        %4629 = vmatpush1.msra.mxu0 0.0
        %4630 = vmatprep.subr.mxu0 0.0
        %4631 = vmatpush1.msra.mxu0 0.0
        %4632 = vmatprep.subr.mxu0 0.0
        %4633 = vmatpush1.msra.mxu0 0.0
        %4634 = vmatprep.subr.mxu0 0.0
        %4635 = vmatpush1.msra.mxu0 0.0
        %4636 = vmatprep.mubr.f32.mxu0 %v4499
        %4637 = vmatmul.mubr.f32.gmra.mrb[0].mxu0 %v4382
        %v4638 = vpop.f32.mrb[0].mxu0
        %v4639 = vadd.f32 %v4496, %v4638
        %v4640 = vpop.f32.mrb[0].mxu0
        %v4641 = vadd.f32 %v4496, %v4640
        %4642 = vdwg.mxu0
        %v4643 = vadd.f32 %v4568, %v301
        %v4644 = vadd.f32 %v4570, %v302
        %v4645 = vadd.f32 %v4639, %v303
        %v4646 = vadd.f32 %v4641, %v304
        %v4647 = vmax.f32 %v4643, 0.0
        %v4648 = vmax.f32 %v4644, 0.0
        %v4649 = vmax.f32 %v4645, 0.0
        %v4650 = vmax.f32 %v4646, 0.0
        %4651 = vst [vmem:[%s294] sm:$0xff] %v4647
        %4652 = vst [vmem:[%s294 + $0x8] sm:$0xff] %v4648
        %4653 = vst [vmem:[%s294 + $0x10] sm:$0xff] %v4649
        %4654 = vst [vmem:[%s294 + $0x18] sm:$0xff] %v4650
        %s4655 = sand.u32 %s163, 1
        %s4656 = scalar_lea.sflag [#allocation6], %s4655
        %s4657 = sand.u32 %s163, 1
        %s4658 = smul.addr %s4657, 32
        %s4659 = scalar_lea.vmem [#allocation10], %s4658
        // Predicated region
        $region57: #{tpu_custom_call.1} parent=43 // pred_check
          %p4660 = pneg %p173
        $region58: #{tpu_custom_call.1} parent=43 // pred_check_branch
          %4662 = sbr.rel (%p4660) target = $region60
        $region59: #{tpu_custom_call.1} parent=43 // pred_region
          %s4664 = ssub.s32 512, 512
          %4665 = vsyncadd %s4656, %s4664
          %s4666 = smul.addr %s24, 4
          %s4667 = smul.addr %s4666, 128
          %s4668 = scalar_lea.hbm %s6, %s4667
          %s4670 = sshll.u32 %s4659, 4
          %s4671 = int_to_ptr.vmem [resolvable:$true] %s4670
          %4673 = dma.vmem_to_hbm [thread:$0]  %s4671, 512, %s4668, %s4656
        $region60: #{tpu_custom_call.1} parent=43 // pred_fallthru
          _
      $region44: #{tpu_custom_call.1} parent=5 // pred_fallthru
        _
      %p4674 = scmp.le.s32.totalorder 2, %s19
      // Predicated region
      $region61: #{tpu_custom_call.1} parent=5 // pred_check
        %p4675 = pneg %p4674
      $region62: #{tpu_custom_call.1} parent=5 // pred_check_branch
        %4677 = sbr.rel (%p4675) target = $region64
      $region63: #{tpu_custom_call.1} parent=5 // pred_region
        %s4678 = ssub.s32 %s19, 2
        // Predicated region
        $region65: #{tpu_custom_call.1} parent=63 // pred_check
          %p4679 = pneg %p179
        $region66: #{tpu_custom_call.1} parent=63 // pred_check_branch
          %4681 = sbr.rel (%p4679) target = $region68
        $region67: #{tpu_custom_call.1} parent=63 // pred_region
          %s4682 = sand.u32 %s164, 1
          %s4683 = scalar_lea.sflag [#allocation6], %s4682
          %s4684 = sand.u32 %s164, 1
          %s4685 = smul.addr %s4684, 32
          %s4686 = scalar_lea.vmem [#allocation10], %s4685
          %4687 = dma.done %s4683, 512
        $region68: #{tpu_custom_call.1} parent=63 // pred_fallthru
          _
      $region64: #{tpu_custom_call.1} parent=5 // pred_fallthru
        _
    $region6: #{tpu_custom_call.1} parent=1 // loop_footer
      %s23 = sadd.s32 1, %s19
    $region7: #{tpu_custom_call.1} parent=1 // loop_footer_branch
      %18 = sbr.rel target = $region3
    $region8: #{tpu_custom_call.1} parent=1 // loop_exit
      _
    %4688 = vsyncpa [#allocation5], 1
    %s4689 = scalar_lea.sflag [#allocation5], 1
    %4690 = vsyncpa %s4689, 1
    %4691 = vsyncpa [#allocation8], 1
    %4692 = vsyncpa [#allocation6], 1
    %s4693 = scalar_lea.sflag [#allocation6], 1
    %4694 = vsyncpa %s4693, 1

</llo_original>
